<compile_context>
chip_gen: v7x
topology: tpu7x:2x2x1
jax: 0.10.0
libtpu: 0.0.40
codegen_flags: <defaults>
</compile_context>

<pallas_src>
import jax
import jax.numpy as jnp
from jax import lax
from jax.experimental import pallas as pl
from jax.experimental.pallas import tpu as pltpu


# ---------------------------------------------------------------------------
# Fused CBAM kernel (B_t batch elements per grid step)
# ---------------------------------------------------------------------------
def _make_cbam_kernel(B_t, H, W, C, Cr, KS=7):
    P = KS // 2          # 3
    Wp = W + 2 * P
    Hp = H + 2 * P

    def kernel(x_ref, w1_ref, w2_ref, wsp_ref, bsp_ref, o_ref, pad_ref):
        x = x_ref[...]                                        # (B_t, H, W, C)
        xf = x.astype(jnp.float32)

        # ---------------- channel attention ----------------
        # Global avg / max pool over (H, W); C stays the lane axis, no reshape.
        avg = jnp.sum(xf, axis=(1, 2)) * (1.0 / float(H * W))  # (B_t, C)
        mx = jnp.max(xf, axis=(1, 2))                           # (B_t, C)
        stk = jnp.concatenate([avg, mx], axis=0)                # (2*B_t, C)

        # shared MLP: C -> Cr (ReLU) -> C, no biases, evaluated ONCE on the
        # stacked input.
        if Cr <= 4:
            # Tiny Cr: unrolled VPU broadcast-MAC + lane reduce.
            mo = jnp.zeros((2 * B_t, C), jnp.float32)
            for r in range(Cr):
                h = jnp.sum(stk * w1_ref[r:r + 1, :], axis=1, keepdims=True)
                h = jnp.maximum(h, 0.0)
                mo = mo + h * w2_ref[r:r + 1, :]
        else:
            # Larger Cr: two tiny matmuls on the otherwise-idle MXU.
            h = lax.dot_general(stk, w1_ref[...],
                                (((1,), (1,)), ((), ())),
                                preferred_element_type=jnp.float32)  # (2B_t, Cr)
            h = jnp.maximum(h, 0.0)
            mo = jnp.dot(h, w2_ref[...],
                         preferred_element_type=jnp.float32)          # (2B_t, C)

        ca = jax.nn.sigmoid(mo[:B_t] + mo[B_t:])                # (B_t, C)

        # x * channel-attention.  Keep the big elementwise pass in bf16 when
        # the input is bf16; otherwise f32.
        cdt = x.dtype if x.dtype == jnp.bfloat16 else jnp.float32
        y = x.astype(cdt) * ca[:, None, None, :].astype(cdt)    # (B_t, H, W, C)
        yf = y.astype(jnp.float32)

        # ---------------- spatial attention ----------------
        # Channel-wise mean / max -> (B_t, H, W): W becomes the lane axis.
        mean_c = jnp.mean(yf, axis=3)
        max_c = jnp.max(yf, axis=3)

        # Zero-padded [mean, max] maps in VMEM (SAME padding for the 7x7).
        # Only the 3-wide border needs zeroing; the interior is always fully
        # overwritten.  (Not gated on program_id==0: with a "parallel" batch
        # axis each megacore instance has its own scratch.)
        pad_ref[:, :, 0:P, :] = jnp.zeros((2, B_t, P, Wp), jnp.float32)
        pad_ref[:, :, P + H:Hp, :] = jnp.zeros((2, B_t, P, Wp), jnp.float32)
        pad_ref[:, :, P:P + H, 0:P] = jnp.zeros((2, B_t, H, P), jnp.float32)
        pad_ref[:, :, P:P + H, P + W:Wp] = jnp.zeros((2, B_t, H, P), jnp.float32)
        pad_ref[0, :, P:P + H, P:P + W] = mean_c
        pad_ref[1, :, P:P + H, P:P + W] = max_c

        # 7x7, 2->1 channel conv as 98 shifted MACs on lane-dense (B_t, H, W)
        # tiles.  Each (c, ky) row band is loaded once; the 7 kx shifts are
        # lane slices of the in-register band.
        acc = jnp.full((B_t, H, W), bsp_ref[0], jnp.float32)
        for c in range(2):
            for ky in range(KS):
                band = pad_ref[c, :, ky:ky + H, :]               # (B_t, H, Wp)
                for kx in range(KS):
                    wgt = wsp_ref[c * KS * KS + ky * KS + kx]    # SMEM scalar
                    acc = acc + band[:, :, kx:kx + W] * wgt

        sa = jax.nn.sigmoid(acc)                                 # (B_t, H, W)
        o_ref[...] = (y * sa[:, :, :, None].astype(cdt)).astype(o_ref.dtype)

    return kernel


# ---------------------------------------------------------------------------
# Block / VMEM budgeting helpers
# ---------------------------------------------------------------------------
def _pick_block_batch(N, H, W, C, dtype, target_bytes=2 * 1024 * 1024):
    """Largest batch-block that (a) keeps the block a few MiB, (b) divides N,
    and (c) leaves >= 2 grid iterations when N >= 2 (v7x has 2 TensorCores)."""
    per = H * W * C * jnp.dtype(dtype).itemsize
    bt = max(1, min(N, target_bytes // max(per, 1)))
    if N >= 2:
        bt = min(bt, N // 2)
    bt = max(int(bt), 1)
    while N % bt != 0:
        bt -= 1
    return bt


def _vmem_limit_bytes(B_t, H, W, C, dtype, KS=7):
    itm = jnp.dtype(dtype).itemsize
    blk = B_t * H * W * C * itm
    blk_f32 = B_t * H * W * C * 4
    pad = 2 * B_t * (H + KS - 1) * (W + KS - 1) * 4
    est = 4 * blk + 3 * blk_f32 + pad + (4 << 20)   # 2x-buffered in/out + live copies
    return int(min(max(est, 32 << 20), 64 << 20))   # stay within v7x's 64 MiB


# ---------------------------------------------------------------------------
# Wrappers
# ---------------------------------------------------------------------------
def cbam_forward_nhwc(x_nhwc, params, *, block_batch=None):
    """CBAM forward, NHWC in / NHWC out (single fused pallas_call)."""
    N, H, W, C = x_nhwc.shape
    Cr = params["w1"].shape[0]
    B_t = (_pick_block_batch(N, H, W, C, x_nhwc.dtype)
           if block_batch is None else block_batch)
    assert N % B_t == 0, (N, B_t)
    grid = (N // B_t,)

    return pl.pallas_call(
        _make_cbam_kernel(B_t, H, W, C, Cr),
        out_shape=jax.ShapeDtypeStruct((N, H, W, C), x_nhwc.dtype),
        grid=grid,
        in_specs=[
            pl.BlockSpec((B_t, H, W, C), lambda n: (n, 0, 0, 0)),
            pl.BlockSpec((Cr, C), lambda n: (0, 0)),             # MLP layer 1
            pl.BlockSpec((Cr, C), lambda n: (0, 0)),             # MLP layer 2 (pre-transposed)
            pl.BlockSpec(memory_space=pltpu.MemorySpace.SMEM),   # 7x7 conv weights (flat)
            pl.BlockSpec(memory_space=pltpu.MemorySpace.SMEM),   # 7x7 conv bias
        ],
        out_specs=pl.BlockSpec((B_t, H, W, C), lambda n: (n, 0, 0, 0)),
        scratch_shapes=[pltpu.VMEM((2, B_t, H + 6, W + 6), jnp.float32)],
        compiler_params=pltpu.CompilerParams(
            dimension_semantics=("parallel",),
            vmem_limit_bytes=_vmem_limit_bytes(B_t, H, W, C, x_nhwc.dtype),
        ),
    )(x_nhwc, params["w1"], params["w2"], params["w_sp"], params["b_sp"])


def cbam_forward(x_nchw, params):
    """NCHW-compatible wrapper matching the PyTorch module's interface."""
    x = jnp.transpose(x_nchw, (0, 2, 3, 1))        # NCHW -> NHWC (lane-dense C)
    out = cbam_forward_nhwc(x, params)
    return jnp.transpose(out, (0, 3, 1, 2))        # NHWC -> NCHW


# ---------------------------------------------------------------------------
# Parameter init (layouts chosen for the kernel):
#   w1  : (Cr, C)        == torch conv1.weight.reshape(Cr, C)
#   w2  : (Cr, C)        == torch conv2.weight.reshape(C, Cr).T
#   w_sp: (2*7*7,) flat  == torch spatial conv weight[0, c, ky, kx] at c*49+ky*7+kx
#   b_sp: (1,)           == torch spatial conv bias
# ---------------------------------------------------------------------------
def init_cbam_params(key, channel, ratio=16, dtype=jnp.float32):
    Cr = max(channel // ratio, 1)
    k1, k2, k3, k4 = jax.random.split(key, 4)
    s1 = 1.0 / jnp.sqrt(float(channel))
    s2 = 1.0 / jnp.sqrt(float(Cr))
    s3 = 1.0 / jnp.sqrt(2.0 * 49.0)
    return {
        "w1": jax.random.uniform(k1, (Cr, channel), dtype, -s1, s1),
        "w2": jax.random.uniform(k2, (Cr, channel), dtype, -s2, s2),
        "w_sp": jax.random.uniform(k3, (2 * 7 * 7,), dtype, -s3, s3),
        "b_sp": jax.random.uniform(k4, (1,), dtype, -s3, s3),
    }


# ---------------------------------------------------------------------------
# Pure-JAX reference (matches the PyTorch CBAM semantics) for correctness.
# ---------------------------------------------------------------------------
def _ref_forward(x_nchw, params):
    x = x_nchw.astype(jnp.float32)

    # channel attention
    avg = jnp.mean(x, axis=(2, 3))                 # (N, C)
    mx = jnp.max(x, axis=(2, 3))                   # (N, C)

    def mlp(v):
        h = jnp.maximum(v @ params["w1"].T, 0.0)   # (N, Cr)
        return h @ params["w2"]                    # (N, C)

    ca = jax.nn.sigmoid(mlp(avg) + mlp(mx))        # (N, C)
    y = x * ca[:, :, None, None]

    # spatial attention
    mean_c = jnp.mean(y, axis=1, keepdims=True)
    max_c = jnp.max(y, axis=1, keepdims=True)
    m = jnp.concatenate([mean_c, max_c], axis=1)   # (N, 2, H, W)
    w = params["w_sp"].reshape(1, 2, 7, 7)
    conv = lax.conv_general_dilated(
        m, w, (1, 1), [(3, 3), (3, 3)],
        dimension_numbers=("NCHW", "OIHW", "NCHW"))
    sa = jax.nn.sigmoid(conv + params["b_sp"][0])
    return (y * sa).astype(x_nchw.dtype)


if __name__ == "__main__":
    key = jax.random.PRNGKey(0)
    kx, kp, kp2 = jax.random.split(key, 3)

    # ---- Test 1: ratio=16 -> Cr=2 (unrolled VPU MLP path), grid of 2 ----
    channel, ratio = 32, 16
    x = jax.random.normal(kx, (2, channel, 16, 16), jnp.float32)      # NCHW
    params = init_cbam_params(kp, channel, ratio)

    out = jax.block_until_ready(cbam_forward(x, params))
    ref = jax.block_until_ready(_ref_forward(x, params))
    assert out.shape == x.shape, out.shape
    assert jnp.allclose(out, ref, atol=1e-4, rtol=1e-4), \
        float(jnp.max(jnp.abs(out - ref)))

    # ---- Test 2: ratio=4 -> Cr=8 (MXU MLP path), 2 batch elems per block ----
    channel2, ratio2 = 32, 4
    x2 = jax.random.normal(kx, (4, channel2, 16, 16), jnp.float32)
    params2 = init_cbam_params(kp2, channel2, ratio2)

    out2 = jax.block_until_ready(cbam_forward(x2, params2))
    ref2 = jax.block_until_ready(_ref_forward(x2, params2))
    assert out2.shape == x2.shape, out2.shape
    assert jnp.allclose(out2, ref2, atol=1e-4, rtol=1e-4), \
        float(jnp.max(jnp.abs(out2 - ref2)))

    print("KERNEL_OK")
</pallas_src>

<mosaic_0001>
module attributes {stable_mosaic.version = 11 : i64} {
  func.func @kernel(%arg0: i32, %arg1: memref<1x16x16x32xf32, #tpu.memory_space<vmem>>, %arg2: memref<2x32xf32, #tpu.memory_space<vmem>>, %arg3: memref<2x32xf32, #tpu.memory_space<vmem>>, %arg4: memref<98xf32, #tpu.memory_space<smem>>, %arg5: memref<1xf32, #tpu.memory_space<smem>>, %arg6: memref<1x16x16x32xf32, #tpu.memory_space<vmem>>, %arg7: memref<2x1x22x22xf32, #tpu.memory_space<vmem>>) attributes {dimension_semantics = [#tpu.dimension_semantics<parallel>], iteration_bounds = array<i64: 2>, scalar_prefetch = 0 : i64, scratch_operands = 1 : i64, tpu.core_type = #tpu.core_type<tc>, window_params = [{transform_indices = @transform_0, window_bounds = array<i64: 1, 16, 16, 32>}, {pipeline_mode = #tpu.pipeline_mode<synchronous>, transform_indices = @transform_1, window_bounds = array<i64: 2, 32>}, {pipeline_mode = #tpu.pipeline_mode<synchronous>, transform_indices = @transform_2, window_bounds = array<i64: 2, 32>}, {transform_indices = @transform_3, window_bounds = array<i64: 98>}, {transform_indices = @transform_4, window_bounds = array<i64: 1>}, {transform_indices = @transform_5, window_bounds = array<i64: 1, 16, 16, 32>}]} {
    %c0 = arith.constant 0 : index
    %c0_0 = arith.constant 0 : index
    %c0_1 = arith.constant 0 : index
    %c0_2 = arith.constant 0 : index
    %0 = vector.load %arg1[%c0, %c0_0, %c0_1, %c0_2] : memref<1x16x16x32xf32, #tpu.memory_space<vmem>>, vector<1x16x16x32xf32>
    %cst = arith.constant dense<0.000000e+00> : vector<1x32xf32>
    %1 = vector.multi_reduction <add>, %0, %cst [1, 2] : vector<1x16x16x32xf32> to vector<1x32xf32>
    %cst_3 = arith.constant 3.906250e-03 : f32
    %2 = vector.broadcast %cst_3 : f32 to vector<1x32xf32>
    %3 = arith.mulf %1, %2 : vector<1x32xf32>
    %cst_4 = arith.constant dense<0xFF800000> : vector<1x32xf32>
    %4 = vector.multi_reduction <maximumf>, %0, %cst_4 [1, 2] : vector<1x16x16x32xf32> to vector<1x32xf32>
    %5 = tpu.concatenate %3, %4 in 0 : vector<1x32xf32>, vector<1x32xf32> -> vector<2x32xf32>
    %cst_5 = arith.constant 0.000000e+00 : f32
    %6 = vector.broadcast %cst_5 : f32 to vector<2x32xf32>
    %c0_6 = arith.constant 0 : index
    %c0_7 = arith.constant 0 : index
    %7 = vector.load %arg2[%c0_6, %c0_7] : memref<2x32xf32, #tpu.memory_space<vmem>>, vector<1x32xf32>
    %8 = vector.broadcast %7 : vector<1x32xf32> to vector<2x32xf32>
    %9 = arith.mulf %5, %8 : vector<2x32xf32>
    %cst_8 = arith.constant dense<0.000000e+00> : vector<2xf32>
    %10 = vector.multi_reduction <add>, %9, %cst_8 [1] : vector<2x32xf32> to vector<2xf32>
    %11 = vector.shape_cast %10 : vector<2xf32> to vector<2x1xf32>
    %cst_9 = arith.constant 0.000000e+00 : f32
    %12 = vector.broadcast %cst_9 : f32 to vector<2x1xf32>
    %13 = arith.maximumf %11, %12 : vector<2x1xf32>
    %c0_10 = arith.constant 0 : index
    %c0_11 = arith.constant 0 : index
    %14 = vector.load %arg3[%c0_10, %c0_11] : memref<2x32xf32, #tpu.memory_space<vmem>>, vector<1x32xf32>
    %15 = vector.broadcast %13 : vector<2x1xf32> to vector<2x32xf32>
    %16 = vector.broadcast %14 : vector<1x32xf32> to vector<2x32xf32>
    %17 = arith.mulf %15, %16 : vector<2x32xf32>
    %18 = arith.addf %6, %17 : vector<2x32xf32>
    %c1 = arith.constant 1 : index
    %c0_12 = arith.constant 0 : index
    %19 = vector.load %arg2[%c1, %c0_12] : memref<2x32xf32, #tpu.memory_space<vmem>>, vector<1x32xf32>
    %20 = vector.broadcast %19 : vector<1x32xf32> to vector<2x32xf32>
    %21 = arith.mulf %5, %20 : vector<2x32xf32>
    %cst_13 = arith.constant dense<0.000000e+00> : vector<2xf32>
    %22 = vector.multi_reduction <add>, %21, %cst_13 [1] : vector<2x32xf32> to vector<2xf32>
    %23 = vector.shape_cast %22 : vector<2xf32> to vector<2x1xf32>
    %cst_14 = arith.constant 0.000000e+00 : f32
    %24 = vector.broadcast %cst_14 : f32 to vector<2x1xf32>
    %25 = arith.maximumf %23, %24 : vector<2x1xf32>
    %c1_15 = arith.constant 1 : index
    %c0_16 = arith.constant 0 : index
    %26 = vector.load %arg3[%c1_15, %c0_16] : memref<2x32xf32, #tpu.memory_space<vmem>>, vector<1x32xf32>
    %27 = vector.broadcast %25 : vector<2x1xf32> to vector<2x32xf32>
    %28 = vector.broadcast %26 : vector<1x32xf32> to vector<2x32xf32>
    %29 = arith.mulf %27, %28 : vector<2x32xf32>
    %30 = arith.addf %18, %29 : vector<2x32xf32>
    %31 = vector.extract_strided_slice %30 {offsets = [0, 0], sizes = [1, 32], strides = [1, 1]} : vector<2x32xf32> to vector<1x32xf32>
    %32 = vector.extract_strided_slice %30 {offsets = [1, 0], sizes = [1, 32], strides = [1, 1]} : vector<2x32xf32> to vector<1x32xf32>
    %33 = arith.addf %31, %32 : vector<1x32xf32>
    %34 = arith.negf %33 : vector<1x32xf32>
    %35 = math.exp %34 : vector<1x32xf32>
    %cst_17 = arith.constant 1.000000e+00 : f32
    %36 = vector.broadcast %cst_17 : f32 to vector<1x32xf32>
    %37 = arith.addf %36, %35 : vector<1x32xf32>
    %38 = arith.divf %36, %37 : vector<1x32xf32>
    %39 = vector.shape_cast %38 : vector<1x32xf32> to vector<1x1x1x32xf32>
    %40 = vector.broadcast %39 : vector<1x1x1x32xf32> to vector<1x16x16x32xf32>
    %41 = arith.mulf %0, %40 : vector<1x16x16x32xf32>
    %cst_18 = arith.constant dense<0.000000e+00> : vector<1x16x16xf32>
    %42 = vector.multi_reduction <add>, %41, %cst_18 [3] : vector<1x16x16x32xf32> to vector<1x16x16xf32>
    %cst_19 = arith.constant 3.200000e+01 : f32
    %43 = vector.broadcast %cst_19 : f32 to vector<1x16x16xf32>
    %44 = arith.divf %42, %43 : vector<1x16x16xf32>
    %cst_20 = arith.constant dense<0xFF800000> : vector<1x16x16xf32>
    %45 = vector.multi_reduction <maximumf>, %41, %cst_20 [3] : vector<1x16x16x32xf32> to vector<1x16x16xf32>
    %cst_21 = arith.constant 0.000000e+00 : f32
    %46 = vector.broadcast %cst_21 : f32 to vector<2x1x3x22xf32>
    %c0_22 = arith.constant 0 : index
    %c0_23 = arith.constant 0 : index
    %c0_24 = arith.constant 0 : index
    %c0_25 = arith.constant 0 : index
    %47 = vector.load %arg7[%c0_22, %c0_23, %c0_24, %c0_25] : memref<2x1x22x22xf32, #tpu.memory_space<vmem>>, vector<2x1x3x22xf32>
    tpu.vector_store %arg7[%c0_22, %c0_23, %c0_24, %c0_25], %46 {strides = array<i32>} : memref<2x1x22x22xf32, #tpu.memory_space<vmem>>, vector<2x1x3x22xf32>,
    %cst_26 = arith.constant 0.000000e+00 : f32
    %48 = vector.broadcast %cst_26 : f32 to vector<2x1x3x22xf32>
    %c0_27 = arith.constant 0 : index
    %c0_28 = arith.constant 0 : index
    %c19 = arith.constant 19 : index
    %c0_29 = arith.constant 0 : index
    %49 = vector.load %arg7[%c0_27, %c0_28, %c19, %c0_29] : memref<2x1x22x22xf32, #tpu.memory_space<vmem>>, vector<2x1x3x22xf32>
    tpu.vector_store %arg7[%c0_27, %c0_28, %c19, %c0_29], %48 {strides = array<i32>} : memref<2x1x22x22xf32, #tpu.memory_space<vmem>>, vector<2x1x3x22xf32>,
    %cst_30 = arith.constant 0.000000e+00 : f32
    %50 = vector.broadcast %cst_30 : f32 to vector<2x1x16x3xf32>
    %c0_31 = arith.constant 0 : index
    %c0_32 = arith.constant 0 : index
    %c3 = arith.constant 3 : index
    %c0_33 = arith.constant 0 : index
    %51 = vector.load %arg7[%c0_31, %c0_32, %c3, %c0_33] : memref<2x1x22x22xf32, #tpu.memory_space<vmem>>, vector<2x1x16x3xf32>
    tpu.vector_store %arg7[%c0_31, %c0_32, %c3, %c0_33], %50 {strides = array<i32>} : memref<2x1x22x22xf32, #tpu.memory_space<vmem>>, vector<2x1x16x3xf32>,
    %cst_34 = arith.constant 0.000000e+00 : f32
    %52 = vector.broadcast %cst_34 : f32 to vector<2x1x16x3xf32>
    %c0_35 = arith.constant 0 : index
    %c0_36 = arith.constant 0 : index
    %c3_37 = arith.constant 3 : index
    %c19_38 = arith.constant 19 : index
    %53 = vector.load %arg7[%c0_35, %c0_36, %c3_37, %c19_38] : memref<2x1x22x22xf32, #tpu.memory_space<vmem>>, vector<2x1x16x3xf32>
    tpu.vector_store %arg7[%c0_35, %c0_36, %c3_37, %c19_38], %52 {strides = array<i32>} : memref<2x1x22x22xf32, #tpu.memory_space<vmem>>, vector<2x1x16x3xf32>,
    %c0_39 = arith.constant 0 : index
    %c0_40 = arith.constant 0 : index
    %c3_41 = arith.constant 3 : index
    %c3_42 = arith.constant 3 : index
    %54 = vector.load %arg7[%c0_39, %c0_40, %c3_41, %c3_42] : memref<2x1x22x22xf32, #tpu.memory_space<vmem>>, vector<1x1x16x16xf32>
    %55 = vector.shape_cast %54 : vector<1x1x16x16xf32> to vector<1x16x16xf32>
    %56 = vector.shape_cast %44 : vector<1x16x16xf32> to vector<1x1x16x16xf32>
    tpu.vector_store %arg7[%c0_39, %c0_40, %c3_41, %c3_42], %56 {strides = array<i32>} : memref<2x1x22x22xf32, #tpu.memory_space<vmem>>, vector<1x1x16x16xf32>,
    %c1_43 = arith.constant 1 : index
    %c0_44 = arith.constant 0 : index
    %c3_45 = arith.constant 3 : index
    %c3_46 = arith.constant 3 : index
    %57 = vector.load %arg7[%c1_43, %c0_44, %c3_45, %c3_46] : memref<2x1x22x22xf32, #tpu.memory_space<vmem>>, vector<1x1x16x16xf32>
    %58 = vector.shape_cast %57 : vector<1x1x16x16xf32> to vector<1x16x16xf32>
    %59 = vector.shape_cast %45 : vector<1x16x16xf32> to vector<1x1x16x16xf32>
    tpu.vector_store %arg7[%c1_43, %c0_44, %c3_45, %c3_46], %59 {strides = array<i32>} : memref<2x1x22x22xf32, #tpu.memory_space<vmem>>, vector<1x1x16x16xf32>,
    %c0_47 = arith.constant 0 : index
    %60 = memref.load %arg5[%c0_47] : memref<1xf32, #tpu.memory_space<smem>>
    %61 = vector.broadcast %60 : f32 to vector<1x16x16xf32>
    %c0_48 = arith.constant 0 : index
    %c0_49 = arith.constant 0 : index
    %c0_50 = arith.constant 0 : index
    %c0_51 = arith.constant 0 : index
    %62 = vector.load %arg7[%c0_48, %c0_49, %c0_50, %c0_51] : memref<2x1x22x22xf32, #tpu.memory_space<vmem>>, vector<1x1x16x22xf32>
    %63 = vector.shape_cast %62 : vector<1x1x16x22xf32> to vector<1x16x22xf32>
    %c0_52 = arith.constant 0 : index
    %64 = memref.load %arg4[%c0_52] : memref<98xf32, #tpu.memory_space<smem>>
    %65 = vector.extract_strided_slice %63 {offsets = [0, 0, 0], sizes = [1, 16, 16], strides = [1, 1, 1]} : vector<1x16x22xf32> to vector<1x16x16xf32>
    %66 = vector.broadcast %64 : f32 to vector<1x16x16xf32>
    %67 = arith.mulf %65, %66 : vector<1x16x16xf32>
    %68 = arith.addf %61, %67 : vector<1x16x16xf32>
    %c1_53 = arith.constant 1 : index
    %69 = memref.load %arg4[%c1_53] : memref<98xf32, #tpu.memory_space<smem>>
    %70 = vector.extract_strided_slice %63 {offsets = [0, 0, 1], sizes = [1, 16, 16], strides = [1, 1, 1]} : vector<1x16x22xf32> to vector<1x16x16xf32>
    %71 = vector.broadcast %69 : f32 to vector<1x16x16xf32>
    %72 = arith.mulf %70, %71 : vector<1x16x16xf32>
    %73 = arith.addf %68, %72 : vector<1x16x16xf32>
    %c2 = arith.constant 2 : index
    %74 = memref.load %arg4[%c2] : memref<98xf32, #tpu.memory_space<smem>>
    %75 = vector.extract_strided_slice %63 {offsets = [0, 0, 2], sizes = [1, 16, 16], strides = [1, 1, 1]} : vector<1x16x22xf32> to vector<1x16x16xf32>
    %76 = vector.broadcast %74 : f32 to vector<1x16x16xf32>
    %77 = arith.mulf %75, %76 : vector<1x16x16xf32>
    %78 = arith.addf %73, %77 : vector<1x16x16xf32>
    %c3_54 = arith.constant 3 : index
    %79 = memref.load %arg4[%c3_54] : memref<98xf32, #tpu.memory_space<smem>>
    %80 = vector.extract_strided_slice %63 {offsets = [0, 0, 3], sizes = [1, 16, 16], strides = [1, 1, 1]} : vector<1x16x22xf32> to vector<1x16x16xf32>
    %81 = vector.broadcast %79 : f32 to vector<1x16x16xf32>
    %82 = arith.mulf %80, %81 : vector<1x16x16xf32>
    %83 = arith.addf %78, %82 : vector<1x16x16xf32>
    %c4 = arith.constant 4 : index
    %84 = memref.load %arg4[%c4] : memref<98xf32, #tpu.memory_space<smem>>
    %85 = vector.extract_strided_slice %63 {offsets = [0, 0, 4], sizes = [1, 16, 16], strides = [1, 1, 1]} : vector<1x16x22xf32> to vector<1x16x16xf32>
    %86 = vector.broadcast %84 : f32 to vector<1x16x16xf32>
    %87 = arith.mulf %85, %86 : vector<1x16x16xf32>
    %88 = arith.addf %83, %87 : vector<1x16x16xf32>
    %c5 = arith.constant 5 : index
    %89 = memref.load %arg4[%c5] : memref<98xf32, #tpu.memory_space<smem>>
    %90 = vector.extract_strided_slice %63 {offsets = [0, 0, 5], sizes = [1, 16, 16], strides = [1, 1, 1]} : vector<1x16x22xf32> to vector<1x16x16xf32>
    %91 = vector.broadcast %89 : f32 to vector<1x16x16xf32>
    %92 = arith.mulf %90, %91 : vector<1x16x16xf32>
    %93 = arith.addf %88, %92 : vector<1x16x16xf32>
    %c6 = arith.constant 6 : index
    %94 = memref.load %arg4[%c6] : memref<98xf32, #tpu.memory_space<smem>>
    %95 = vector.extract_strided_slice %63 {offsets = [0, 0, 6], sizes = [1, 16, 16], strides = [1, 1, 1]} : vector<1x16x22xf32> to vector<1x16x16xf32>
    %96 = vector.broadcast %94 : f32 to vector<1x16x16xf32>
    %97 = arith.mulf %95, %96 : vector<1x16x16xf32>
    %98 = arith.addf %93, %97 : vector<1x16x16xf32>
    %c0_55 = arith.constant 0 : index
    %c0_56 = arith.constant 0 : index
    %c1_57 = arith.constant 1 : index
    %c0_58 = arith.constant 0 : index
    %99 = vector.load %arg7[%c0_55, %c0_56, %c1_57, %c0_58] : memref<2x1x22x22xf32, #tpu.memory_space<vmem>>, vector<1x1x16x22xf32>
    %100 = vector.shape_cast %99 : vector<1x1x16x22xf32> to vector<1x16x22xf32>
    %c7 = arith.constant 7 : index
    %101 = memref.load %arg4[%c7] : memref<98xf32, #tpu.memory_space<smem>>
    %102 = vector.extract_strided_slice %100 {offsets = [0, 0, 0], sizes = [1, 16, 16], strides = [1, 1, 1]} : vector<1x16x22xf32> to vector<1x16x16xf32>
    %103 = vector.broadcast %101 : f32 to vector<1x16x16xf32>
    %104 = arith.mulf %102, %103 : vector<1x16x16xf32>
    %105 = arith.addf %98, %104 : vector<1x16x16xf32>
    %c8 = arith.constant 8 : index
    %106 = memref.load %arg4[%c8] : memref<98xf32, #tpu.memory_space<smem>>
    %107 = vector.extract_strided_slice %100 {offsets = [0, 0, 1], sizes = [1, 16, 16], strides = [1, 1, 1]} : vector<1x16x22xf32> to vector<1x16x16xf32>
    %108 = vector.broadcast %106 : f32 to vector<1x16x16xf32>
    %109 = arith.mulf %107, %108 : vector<1x16x16xf32>
    %110 = arith.addf %105, %109 : vector<1x16x16xf32>
    %c9 = arith.constant 9 : index
    %111 = memref.load %arg4[%c9] : memref<98xf32, #tpu.memory_space<smem>>
    %112 = vector.extract_strided_slice %100 {offsets = [0, 0, 2], sizes = [1, 16, 16], strides = [1, 1, 1]} : vector<1x16x22xf32> to vector<1x16x16xf32>
    %113 = vector.broadcast %111 : f32 to vector<1x16x16xf32>
    %114 = arith.mulf %112, %113 : vector<1x16x16xf32>
    %115 = arith.addf %110, %114 : vector<1x16x16xf32>
    %c10 = arith.constant 10 : index
    %116 = memref.load %arg4[%c10] : memref<98xf32, #tpu.memory_space<smem>>
    %117 = vector.extract_strided_slice %100 {offsets = [0, 0, 3], sizes = [1, 16, 16], strides = [1, 1, 1]} : vector<1x16x22xf32> to vector<1x16x16xf32>
    %118 = vector.broadcast %116 : f32 to vector<1x16x16xf32>
    %119 = arith.mulf %117, %118 : vector<1x16x16xf32>
    %120 = arith.addf %115, %119 : vector<1x16x16xf32>
    %c11 = arith.constant 11 : index
    %121 = memref.load %arg4[%c11] : memref<98xf32, #tpu.memory_space<smem>>
    %122 = vector.extract_strided_slice %100 {offsets = [0, 0, 4], sizes = [1, 16, 16], strides = [1, 1, 1]} : vector<1x16x22xf32> to vector<1x16x16xf32>
    %123 = vector.broadcast %121 : f32 to vector<1x16x16xf32>
    %124 = arith.mulf %122, %123 : vector<1x16x16xf32>
    %125 = arith.addf %120, %124 : vector<1x16x16xf32>
    %c12 = arith.constant 12 : index
    %126 = memref.load %arg4[%c12] : memref<98xf32, #tpu.memory_space<smem>>
    %127 = vector.extract_strided_slice %100 {offsets = [0, 0, 5], sizes = [1, 16, 16], strides = [1, 1, 1]} : vector<1x16x22xf32> to vector<1x16x16xf32>
    %128 = vector.broadcast %126 : f32 to vector<1x16x16xf32>
    %129 = arith.mulf %127, %128 : vector<1x16x16xf32>
    %130 = arith.addf %125, %129 : vector<1x16x16xf32>
    %c13 = arith.constant 13 : index
    %131 = memref.load %arg4[%c13] : memref<98xf32, #tpu.memory_space<smem>>
    %132 = vector.extract_strided_slice %100 {offsets = [0, 0, 6], sizes = [1, 16, 16], strides = [1, 1, 1]} : vector<1x16x22xf32> to vector<1x16x16xf32>
    %133 = vector.broadcast %131 : f32 to vector<1x16x16xf32>
    %134 = arith.mulf %132, %133 : vector<1x16x16xf32>
    %135 = arith.addf %130, %134 : vector<1x16x16xf32>
    %c0_59 = arith.constant 0 : index
    %c0_60 = arith.constant 0 : index
    %c2_61 = arith.constant 2 : index
    %c0_62 = arith.constant 0 : index
    %136 = vector.load %arg7[%c0_59, %c0_60, %c2_61, %c0_62] : memref<2x1x22x22xf32, #tpu.memory_space<vmem>>, vector<1x1x16x22xf32>
    %137 = vector.shape_cast %136 : vector<1x1x16x22xf32> to vector<1x16x22xf32>
    %c14 = arith.constant 14 : index
    %138 = memref.load %arg4[%c14] : memref<98xf32, #tpu.memory_space<smem>>
    %139 = vector.extract_strided_slice %137 {offsets = [0, 0, 0], sizes = [1, 16, 16], strides = [1, 1, 1]} : vector<1x16x22xf32> to vector<1x16x16xf32>
    %140 = vector.broadcast %138 : f32 to vector<1x16x16xf32>
    %141 = arith.mulf %139, %140 : vector<1x16x16xf32>
    %142 = arith.addf %135, %141 : vector<1x16x16xf32>
    %c15 = arith.constant 15 : index
    %143 = memref.load %arg4[%c15] : memref<98xf32, #tpu.memory_space<smem>>
    %144 = vector.extract_strided_slice %137 {offsets = [0, 0, 1], sizes = [1, 16, 16], strides = [1, 1, 1]} : vector<1x16x22xf32> to vector<1x16x16xf32>
    %145 = vector.broadcast %143 : f32 to vector<1x16x16xf32>
    %146 = arith.mulf %144, %145 : vector<1x16x16xf32>
    %147 = arith.addf %142, %146 : vector<1x16x16xf32>
    %c16 = arith.constant 16 : index
    %148 = memref.load %arg4[%c16] : memref<98xf32, #tpu.memory_space<smem>>
    %149 = vector.extract_strided_slice %137 {offsets = [0, 0, 2], sizes = [1, 16, 16], strides = [1, 1, 1]} : vector<1x16x22xf32> to vector<1x16x16xf32>
    %150 = vector.broadcast %148 : f32 to vector<1x16x16xf32>
    %151 = arith.mulf %149, %150 : vector<1x16x16xf32>
    %152 = arith.addf %147, %151 : vector<1x16x16xf32>
    %c17 = arith.constant 17 : index
    %153 = memref.load %arg4[%c17] : memref<98xf32, #tpu.memory_space<smem>>
    %154 = vector.extract_strided_slice %137 {offsets = [0, 0, 3], sizes = [1, 16, 16], strides = [1, 1, 1]} : vector<1x16x22xf32> to vector<1x16x16xf32>
    %155 = vector.broadcast %153 : f32 to vector<1x16x16xf32>
    %156 = arith.mulf %154, %155 : vector<1x16x16xf32>
    %157 = arith.addf %152, %156 : vector<1x16x16xf32>
    %c18 = arith.constant 18 : index
    %158 = memref.load %arg4[%c18] : memref<98xf32, #tpu.memory_space<smem>>
    %159 = vector.extract_strided_slice %137 {offsets = [0, 0, 4], sizes = [1, 16, 16], strides = [1, 1, 1]} : vector<1x16x22xf32> to vector<1x16x16xf32>
    %160 = vector.broadcast %158 : f32 to vector<1x16x16xf32>
    %161 = arith.mulf %159, %160 : vector<1x16x16xf32>
    %162 = arith.addf %157, %161 : vector<1x16x16xf32>
    %c19_63 = arith.constant 19 : index
    %163 = memref.load %arg4[%c19_63] : memref<98xf32, #tpu.memory_space<smem>>
    %164 = vector.extract_strided_slice %137 {offsets = [0, 0, 5], sizes = [1, 16, 16], strides = [1, 1, 1]} : vector<1x16x22xf32> to vector<1x16x16xf32>
    %165 = vector.broadcast %163 : f32 to vector<1x16x16xf32>
    %166 = arith.mulf %164, %165 : vector<1x16x16xf32>
    %167 = arith.addf %162, %166 : vector<1x16x16xf32>
    %c20 = arith.constant 20 : index
    %168 = memref.load %arg4[%c20] : memref<98xf32, #tpu.memory_space<smem>>
    %169 = vector.extract_strided_slice %137 {offsets = [0, 0, 6], sizes = [1, 16, 16], strides = [1, 1, 1]} : vector<1x16x22xf32> to vector<1x16x16xf32>
    %170 = vector.broadcast %168 : f32 to vector<1x16x16xf32>
    %171 = arith.mulf %169, %170 : vector<1x16x16xf32>
    %172 = arith.addf %167, %171 : vector<1x16x16xf32>
    %c0_64 = arith.constant 0 : index
    %c0_65 = arith.constant 0 : index
    %c3_66 = arith.constant 3 : index
    %c0_67 = arith.constant 0 : index
    %173 = vector.load %arg7[%c0_64, %c0_65, %c3_66, %c0_67] : memref<2x1x22x22xf32, #tpu.memory_space<vmem>>, vector<1x1x16x22xf32>
    %174 = vector.shape_cast %173 : vector<1x1x16x22xf32> to vector<1x16x22xf32>
    %c21 = arith.constant 21 : index
    %175 = memref.load %arg4[%c21] : memref<98xf32, #tpu.memory_space<smem>>
    %176 = vector.extract_strided_slice %174 {offsets = [0, 0, 0], sizes = [1, 16, 16], strides = [1, 1, 1]} : vector<1x16x22xf32> to vector<1x16x16xf32>
    %177 = vector.broadcast %175 : f32 to vector<1x16x16xf32>
    %178 = arith.mulf %176, %177 : vector<1x16x16xf32>
    %179 = arith.addf %172, %178 : vector<1x16x16xf32>
    %c22 = arith.constant 22 : index
    %180 = memref.load %arg4[%c22] : memref<98xf32, #tpu.memory_space<smem>>
    %181 = vector.extract_strided_slice %174 {offsets = [0, 0, 1], sizes = [1, 16, 16], strides = [1, 1, 1]} : vector<1x16x22xf32> to vector<1x16x16xf32>
    %182 = vector.broadcast %180 : f32 to vector<1x16x16xf32>
    %183 = arith.mulf %181, %182 : vector<1x16x16xf32>
    %184 = arith.addf %179, %183 : vector<1x16x16xf32>
    %c23 = arith.constant 23 : index
    %185 = memref.load %arg4[%c23] : memref<98xf32, #tpu.memory_space<smem>>
    %186 = vector.extract_strided_slice %174 {offsets = [0, 0, 2], sizes = [1, 16, 16], strides = [1, 1, 1]} : vector<1x16x22xf32> to vector<1x16x16xf32>
    %187 = vector.broadcast %185 : f32 to vector<1x16x16xf32>
    %188 = arith.mulf %186, %187 : vector<1x16x16xf32>
    %189 = arith.addf %184, %188 : vector<1x16x16xf32>
    %c24 = arith.constant 24 : index
    %190 = memref.load %arg4[%c24] : memref<98xf32, #tpu.memory_space<smem>>
    %191 = vector.extract_strided_slice %174 {offsets = [0, 0, 3], sizes = [1, 16, 16], strides = [1, 1, 1]} : vector<1x16x22xf32> to vector<1x16x16xf32>
    %192 = vector.broadcast %190 : f32 to vector<1x16x16xf32>
    %193 = arith.mulf %191, %192 : vector<1x16x16xf32>
    %194 = arith.addf %189, %193 : vector<1x16x16xf32>
    %c25 = arith.constant 25 : index
    %195 = memref.load %arg4[%c25] : memref<98xf32, #tpu.memory_space<smem>>
    %196 = vector.extract_strided_slice %174 {offsets = [0, 0, 4], sizes = [1, 16, 16], strides = [1, 1, 1]} : vector<1x16x22xf32> to vector<1x16x16xf32>
    %197 = vector.broadcast %195 : f32 to vector<1x16x16xf32>
    %198 = arith.mulf %196, %197 : vector<1x16x16xf32>
    %199 = arith.addf %194, %198 : vector<1x16x16xf32>
    %c26 = arith.constant 26 : index
    %200 = memref.load %arg4[%c26] : memref<98xf32, #tpu.memory_space<smem>>
    %201 = vector.extract_strided_slice %174 {offsets = [0, 0, 5], sizes = [1, 16, 16], strides = [1, 1, 1]} : vector<1x16x22xf32> to vector<1x16x16xf32>
    %202 = vector.broadcast %200 : f32 to vector<1x16x16xf32>
    %203 = arith.mulf %201, %202 : vector<1x16x16xf32>
    %204 = arith.addf %199, %203 : vector<1x16x16xf32>
    %c27 = arith.constant 27 : index
    %205 = memref.load %arg4[%c27] : memref<98xf32, #tpu.memory_space<smem>>
    %206 = vector.extract_strided_slice %174 {offsets = [0, 0, 6], sizes = [1, 16, 16], strides = [1, 1, 1]} : vector<1x16x22xf32> to vector<1x16x16xf32>
    %207 = vector.broadcast %205 : f32 to vector<1x16x16xf32>
    %208 = arith.mulf %206, %207 : vector<1x16x16xf32>
    %209 = arith.addf %204, %208 : vector<1x16x16xf32>
    %c0_68 = arith.constant 0 : index
    %c0_69 = arith.constant 0 : index
    %c4_70 = arith.constant 4 : index
    %c0_71 = arith.constant 0 : index
    %210 = vector.load %arg7[%c0_68, %c0_69, %c4_70, %c0_71] : memref<2x1x22x22xf32, #tpu.memory_space<vmem>>, vector<1x1x16x22xf32>
    %211 = vector.shape_cast %210 : vector<1x1x16x22xf32> to vector<1x16x22xf32>
    %c28 = arith.constant 28 : index
    %212 = memref.load %arg4[%c28] : memref<98xf32, #tpu.memory_space<smem>>
    %213 = vector.extract_strided_slice %211 {offsets = [0, 0, 0], sizes = [1, 16, 16], strides = [1, 1, 1]} : vector<1x16x22xf32> to vector<1x16x16xf32>
    %214 = vector.broadcast %212 : f32 to vector<1x16x16xf32>
    %215 = arith.mulf %213, %214 : vector<1x16x16xf32>
    %216 = arith.addf %209, %215 : vector<1x16x16xf32>
    %c29 = arith.constant 29 : index
    %217 = memref.load %arg4[%c29] : memref<98xf32, #tpu.memory_space<smem>>
    %218 = vector.extract_strided_slice %211 {offsets = [0, 0, 1], sizes = [1, 16, 16], strides = [1, 1, 1]} : vector<1x16x22xf32> to vector<1x16x16xf32>
    %219 = vector.broadcast %217 : f32 to vector<1x16x16xf32>
    %220 = arith.mulf %218, %219 : vector<1x16x16xf32>
    %221 = arith.addf %216, %220 : vector<1x16x16xf32>
    %c30 = arith.constant 30 : index
    %222 = memref.load %arg4[%c30] : memref<98xf32, #tpu.memory_space<smem>>
    %223 = vector.extract_strided_slice %211 {offsets = [0, 0, 2], sizes = [1, 16, 16], strides = [1, 1, 1]} : vector<1x16x22xf32> to vector<1x16x16xf32>
    %224 = vector.broadcast %222 : f32 to vector<1x16x16xf32>
    %225 = arith.mulf %223, %224 : vector<1x16x16xf32>
    %226 = arith.addf %221, %225 : vector<1x16x16xf32>
    %c31 = arith.constant 31 : index
    %227 = memref.load %arg4[%c31] : memref<98xf32, #tpu.memory_space<smem>>
    %228 = vector.extract_strided_slice %211 {offsets = [0, 0, 3], sizes = [1, 16, 16], strides = [1, 1, 1]} : vector<1x16x22xf32> to vector<1x16x16xf32>
    %229 = vector.broadcast %227 : f32 to vector<1x16x16xf32>
    %230 = arith.mulf %228, %229 : vector<1x16x16xf32>
    %231 = arith.addf %226, %230 : vector<1x16x16xf32>
    %c32 = arith.constant 32 : index
    %232 = memref.load %arg4[%c32] : memref<98xf32, #tpu.memory_space<smem>>
    %233 = vector.extract_strided_slice %211 {offsets = [0, 0, 4], sizes = [1, 16, 16], strides = [1, 1, 1]} : vector<1x16x22xf32> to vector<1x16x16xf32>
    %234 = vector.broadcast %232 : f32 to vector<1x16x16xf32>
    %235 = arith.mulf %233, %234 : vector<1x16x16xf32>
    %236 = arith.addf %231, %235 : vector<1x16x16xf32>
    %c33 = arith.constant 33 : index
    %237 = memref.load %arg4[%c33] : memref<98xf32, #tpu.memory_space<smem>>
    %238 = vector.extract_strided_slice %211 {offsets = [0, 0, 5], sizes = [1, 16, 16], strides = [1, 1, 1]} : vector<1x16x22xf32> to vector<1x16x16xf32>
    %239 = vector.broadcast %237 : f32 to vector<1x16x16xf32>
    %240 = arith.mulf %238, %239 : vector<1x16x16xf32>
    %241 = arith.addf %236, %240 : vector<1x16x16xf32>
    %c34 = arith.constant 34 : index
    %242 = memref.load %arg4[%c34] : memref<98xf32, #tpu.memory_space<smem>>
    %243 = vector.extract_strided_slice %211 {offsets = [0, 0, 6], sizes = [1, 16, 16], strides = [1, 1, 1]} : vector<1x16x22xf32> to vector<1x16x16xf32>
    %244 = vector.broadcast %242 : f32 to vector<1x16x16xf32>
    %245 = arith.mulf %243, %244 : vector<1x16x16xf32>
    %246 = arith.addf %241, %245 : vector<1x16x16xf32>
    %c0_72 = arith.constant 0 : index
    %c0_73 = arith.constant 0 : index
    %c5_74 = arith.constant 5 : index
    %c0_75 = arith.constant 0 : index
    %247 = vector.load %arg7[%c0_72, %c0_73, %c5_74, %c0_75] : memref<2x1x22x22xf32, #tpu.memory_space<vmem>>, vector<1x1x16x22xf32>
    %248 = vector.shape_cast %247 : vector<1x1x16x22xf32> to vector<1x16x22xf32>
    %c35 = arith.constant 35 : index
    %249 = memref.load %arg4[%c35] : memref<98xf32, #tpu.memory_space<smem>>
    %250 = vector.extract_strided_slice %248 {offsets = [0, 0, 0], sizes = [1, 16, 16], strides = [1, 1, 1]} : vector<1x16x22xf32> to vector<1x16x16xf32>
    %251 = vector.broadcast %249 : f32 to vector<1x16x16xf32>
    %252 = arith.mulf %250, %251 : vector<1x16x16xf32>
    %253 = arith.addf %246, %252 : vector<1x16x16xf32>
    %c36 = arith.constant 36 : index
    %254 = memref.load %arg4[%c36] : memref<98xf32, #tpu.memory_space<smem>>
    %255 = vector.extract_strided_slice %248 {offsets = [0, 0, 1], sizes = [1, 16, 16], strides = [1, 1, 1]} : vector<1x16x22xf32> to vector<1x16x16xf32>
    %256 = vector.broadcast %254 : f32 to vector<1x16x16xf32>
    %257 = arith.mulf %255, %256 : vector<1x16x16xf32>
    %258 = arith.addf %253, %257 : vector<1x16x16xf32>
    %c37 = arith.constant 37 : index
    %259 = memref.load %arg4[%c37] : memref<98xf32, #tpu.memory_space<smem>>
    %260 = vector.extract_strided_slice %248 {offsets = [0, 0, 2], sizes = [1, 16, 16], strides = [1, 1, 1]} : vector<1x16x22xf32> to vector<1x16x16xf32>
    %261 = vector.broadcast %259 : f32 to vector<1x16x16xf32>
    %262 = arith.mulf %260, %261 : vector<1x16x16xf32>
    %263 = arith.addf %258, %262 : vector<1x16x16xf32>
    %c38 = arith.constant 38 : index
    %264 = memref.load %arg4[%c38] : memref<98xf32, #tpu.memory_space<smem>>
    %265 = vector.extract_strided_slice %248 {offsets = [0, 0, 3], sizes = [1, 16, 16], strides = [1, 1, 1]} : vector<1x16x22xf32> to vector<1x16x16xf32>
    %266 = vector.broadcast %264 : f32 to vector<1x16x16xf32>
    %267 = arith.mulf %265, %266 : vector<1x16x16xf32>
    %268 = arith.addf %263, %267 : vector<1x16x16xf32>
    %c39 = arith.constant 39 : index
    %269 = memref.load %arg4[%c39] : memref<98xf32, #tpu.memory_space<smem>>
    %270 = vector.extract_strided_slice %248 {offsets = [0, 0, 4], sizes = [1, 16, 16], strides = [1, 1, 1]} : vector<1x16x22xf32> to vector<1x16x16xf32>
    %271 = vector.broadcast %269 : f32 to vector<1x16x16xf32>
    %272 = arith.mulf %270, %271 : vector<1x16x16xf32>
    %273 = arith.addf %268, %272 : vector<1x16x16xf32>
    %c40 = arith.constant 40 : index
    %274 = memref.load %arg4[%c40] : memref<98xf32, #tpu.memory_space<smem>>
    %275 = vector.extract_strided_slice %248 {offsets = [0, 0, 5], sizes = [1, 16, 16], strides = [1, 1, 1]} : vector<1x16x22xf32> to vector<1x16x16xf32>
    %276 = vector.broadcast %274 : f32 to vector<1x16x16xf32>
    %277 = arith.mulf %275, %276 : vector<1x16x16xf32>
    %278 = arith.addf %273, %277 : vector<1x16x16xf32>
    %c41 = arith.constant 41 : index
    %279 = memref.load %arg4[%c41] : memref<98xf32, #tpu.memory_space<smem>>
    %280 = vector.extract_strided_slice %248 {offsets = [0, 0, 6], sizes = [1, 16, 16], strides = [1, 1, 1]} : vector<1x16x22xf32> to vector<1x16x16xf32>
    %281 = vector.broadcast %279 : f32 to vector<1x16x16xf32>
    %282 = arith.mulf %280, %281 : vector<1x16x16xf32>
    %283 = arith.addf %278, %282 : vector<1x16x16xf32>
    %c0_76 = arith.constant 0 : index
    %c0_77 = arith.constant 0 : index
    %c6_78 = arith.constant 6 : index
    %c0_79 = arith.constant 0 : index
    %284 = vector.load %arg7[%c0_76, %c0_77, %c6_78, %c0_79] : memref<2x1x22x22xf32, #tpu.memory_space<vmem>>, vector<1x1x16x22xf32>
    %285 = vector.shape_cast %284 : vector<1x1x16x22xf32> to vector<1x16x22xf32>
    %c42 = arith.constant 42 : index
    %286 = memref.load %arg4[%c42] : memref<98xf32, #tpu.memory_space<smem>>
    %287 = vector.extract_strided_slice %285 {offsets = [0, 0, 0], sizes = [1, 16, 16], strides = [1, 1, 1]} : vector<1x16x22xf32> to vector<1x16x16xf32>
    %288 = vector.broadcast %286 : f32 to vector<1x16x16xf32>
    %289 = arith.mulf %287, %288 : vector<1x16x16xf32>
    %290 = arith.addf %283, %289 : vector<1x16x16xf32>
    %c43 = arith.constant 43 : index
    %291 = memref.load %arg4[%c43] : memref<98xf32, #tpu.memory_space<smem>>
    %292 = vector.extract_strided_slice %285 {offsets = [0, 0, 1], sizes = [1, 16, 16], strides = [1, 1, 1]} : vector<1x16x22xf32> to vector<1x16x16xf32>
    %293 = vector.broadcast %291 : f32 to vector<1x16x16xf32>
    %294 = arith.mulf %292, %293 : vector<1x16x16xf32>
    %295 = arith.addf %290, %294 : vector<1x16x16xf32>
    %c44 = arith.constant 44 : index
    %296 = memref.load %arg4[%c44] : memref<98xf32, #tpu.memory_space<smem>>
    %297 = vector.extract_strided_slice %285 {offsets = [0, 0, 2], sizes = [1, 16, 16], strides = [1, 1, 1]} : vector<1x16x22xf32> to vector<1x16x16xf32>
    %298 = vector.broadcast %296 : f32 to vector<1x16x16xf32>
    %299 = arith.mulf %297, %298 : vector<1x16x16xf32>
    %300 = arith.addf %295, %299 : vector<1x16x16xf32>
    %c45 = arith.constant 45 : index
    %301 = memref.load %arg4[%c45] : memref<98xf32, #tpu.memory_space<smem>>
    %302 = vector.extract_strided_slice %285 {offsets = [0, 0, 3], sizes = [1, 16, 16], strides = [1, 1, 1]} : vector<1x16x22xf32> to vector<1x16x16xf32>
    %303 = vector.broadcast %301 : f32 to vector<1x16x16xf32>
    %304 = arith.mulf %302, %303 : vector<1x16x16xf32>
    %305 = arith.addf %300, %304 : vector<1x16x16xf32>
    %c46 = arith.constant 46 : index
    %306 = memref.load %arg4[%c46] : memref<98xf32, #tpu.memory_space<smem>>
    %307 = vector.extract_strided_slice %285 {offsets = [0, 0, 4], sizes = [1, 16, 16], strides = [1, 1, 1]} : vector<1x16x22xf32> to vector<1x16x16xf32>
    %308 = vector.broadcast %306 : f32 to vector<1x16x16xf32>
    %309 = arith.mulf %307, %308 : vector<1x16x16xf32>
    %310 = arith.addf %305, %309 : vector<1x16x16xf32>
    %c47 = arith.constant 47 : index
    %311 = memref.load %arg4[%c47] : memref<98xf32, #tpu.memory_space<smem>>
    %312 = vector.extract_strided_slice %285 {offsets = [0, 0, 5], sizes = [1, 16, 16], strides = [1, 1, 1]} : vector<1x16x22xf32> to vector<1x16x16xf32>
    %313 = vector.broadcast %311 : f32 to vector<1x16x16xf32>
    %314 = arith.mulf %312, %313 : vector<1x16x16xf32>
    %315 = arith.addf %310, %314 : vector<1x16x16xf32>
    %c48 = arith.constant 48 : index
    %316 = memref.load %arg4[%c48] : memref<98xf32, #tpu.memory_space<smem>>
    %317 = vector.extract_strided_slice %285 {offsets = [0, 0, 6], sizes = [1, 16, 16], strides = [1, 1, 1]} : vector<1x16x22xf32> to vector<1x16x16xf32>
    %318 = vector.broadcast %316 : f32 to vector<1x16x16xf32>
    %319 = arith.mulf %317, %318 : vector<1x16x16xf32>
    %320 = arith.addf %315, %319 : vector<1x16x16xf32>
    %c1_80 = arith.constant 1 : index
    %c0_81 = arith.constant 0 : index
    %c0_82 = arith.constant 0 : index
    %c0_83 = arith.constant 0 : index
    %321 = vector.load %arg7[%c1_80, %c0_81, %c0_82, %c0_83] : memref<2x1x22x22xf32, #tpu.memory_space<vmem>>, vector<1x1x16x22xf32>
    %322 = vector.shape_cast %321 : vector<1x1x16x22xf32> to vector<1x16x22xf32>
    %c49 = arith.constant 49 : index
    %323 = memref.load %arg4[%c49] : memref<98xf32, #tpu.memory_space<smem>>
    %324 = vector.extract_strided_slice %322 {offsets = [0, 0, 0], sizes = [1, 16, 16], strides = [1, 1, 1]} : vector<1x16x22xf32> to vector<1x16x16xf32>
    %325 = vector.broadcast %323 : f32 to vector<1x16x16xf32>
    %326 = arith.mulf %324, %325 : vector<1x16x16xf32>
    %327 = arith.addf %320, %326 : vector<1x16x16xf32>
    %c50 = arith.constant 50 : index
    %328 = memref.load %arg4[%c50] : memref<98xf32, #tpu.memory_space<smem>>
    %329 = vector.extract_strided_slice %322 {offsets = [0, 0, 1], sizes = [1, 16, 16], strides = [1, 1, 1]} : vector<1x16x22xf32> to vector<1x16x16xf32>
    %330 = vector.broadcast %328 : f32 to vector<1x16x16xf32>
    %331 = arith.mulf %329, %330 : vector<1x16x16xf32>
    %332 = arith.addf %327, %331 : vector<1x16x16xf32>
    %c51 = arith.constant 51 : index
    %333 = memref.load %arg4[%c51] : memref<98xf32, #tpu.memory_space<smem>>
    %334 = vector.extract_strided_slice %322 {offsets = [0, 0, 2], sizes = [1, 16, 16], strides = [1, 1, 1]} : vector<1x16x22xf32> to vector<1x16x16xf32>
    %335 = vector.broadcast %333 : f32 to vector<1x16x16xf32>
    %336 = arith.mulf %334, %335 : vector<1x16x16xf32>
    %337 = arith.addf %332, %336 : vector<1x16x16xf32>
    %c52 = arith.constant 52 : index
    %338 = memref.load %arg4[%c52] : memref<98xf32, #tpu.memory_space<smem>>
    %339 = vector.extract_strided_slice %322 {offsets = [0, 0, 3], sizes = [1, 16, 16], strides = [1, 1, 1]} : vector<1x16x22xf32> to vector<1x16x16xf32>
    %340 = vector.broadcast %338 : f32 to vector<1x16x16xf32>
    %341 = arith.mulf %339, %340 : vector<1x16x16xf32>
    %342 = arith.addf %337, %341 : vector<1x16x16xf32>
    %c53 = arith.constant 53 : index
    %343 = memref.load %arg4[%c53] : memref<98xf32, #tpu.memory_space<smem>>
    %344 = vector.extract_strided_slice %322 {offsets = [0, 0, 4], sizes = [1, 16, 16], strides = [1, 1, 1]} : vector<1x16x22xf32> to vector<1x16x16xf32>
    %345 = vector.broadcast %343 : f32 to vector<1x16x16xf32>
    %346 = arith.mulf %344, %345 : vector<1x16x16xf32>
    %347 = arith.addf %342, %346 : vector<1x16x16xf32>
    %c54 = arith.constant 54 : index
    %348 = memref.load %arg4[%c54] : memref<98xf32, #tpu.memory_space<smem>>
    %349 = vector.extract_strided_slice %322 {offsets = [0, 0, 5], sizes = [1, 16, 16], strides = [1, 1, 1]} : vector<1x16x22xf32> to vector<1x16x16xf32>
    %350 = vector.broadcast %348 : f32 to vector<1x16x16xf32>
    %351 = arith.mulf %349, %350 : vector<1x16x16xf32>
    %352 = arith.addf %347, %351 : vector<1x16x16xf32>
    %c55 = arith.constant 55 : index
    %353 = memref.load %arg4[%c55] : memref<98xf32, #tpu.memory_space<smem>>
    %354 = vector.extract_strided_slice %322 {offsets = [0, 0, 6], sizes = [1, 16, 16], strides = [1, 1, 1]} : vector<1x16x22xf32> to vector<1x16x16xf32>
    %355 = vector.broadcast %353 : f32 to vector<1x16x16xf32>
    %356 = arith.mulf %354, %355 : vector<1x16x16xf32>
    %357 = arith.addf %352, %356 : vector<1x16x16xf32>
    %c1_84 = arith.constant 1 : index
    %c0_85 = arith.constant 0 : index
    %c1_86 = arith.constant 1 : index
    %c0_87 = arith.constant 0 : index
    %358 = vector.load %arg7[%c1_84, %c0_85, %c1_86, %c0_87] : memref<2x1x22x22xf32, #tpu.memory_space<vmem>>, vector<1x1x16x22xf32>
    %359 = vector.shape_cast %358 : vector<1x1x16x22xf32> to vector<1x16x22xf32>
    %c56 = arith.constant 56 : index
    %360 = memref.load %arg4[%c56] : memref<98xf32, #tpu.memory_space<smem>>
    %361 = vector.extract_strided_slice %359 {offsets = [0, 0, 0], sizes = [1, 16, 16], strides = [1, 1, 1]} : vector<1x16x22xf32> to vector<1x16x16xf32>
    %362 = vector.broadcast %360 : f32 to vector<1x16x16xf32>
    %363 = arith.mulf %361, %362 : vector<1x16x16xf32>
    %364 = arith.addf %357, %363 : vector<1x16x16xf32>
    %c57 = arith.constant 57 : index
    %365 = memref.load %arg4[%c57] : memref<98xf32, #tpu.memory_space<smem>>
    %366 = vector.extract_strided_slice %359 {offsets = [0, 0, 1], sizes = [1, 16, 16], strides = [1, 1, 1]} : vector<1x16x22xf32> to vector<1x16x16xf32>
    %367 = vector.broadcast %365 : f32 to vector<1x16x16xf32>
    %368 = arith.mulf %366, %367 : vector<1x16x16xf32>
    %369 = arith.addf %364, %368 : vector<1x16x16xf32>
    %c58 = arith.constant 58 : index
    %370 = memref.load %arg4[%c58] : memref<98xf32, #tpu.memory_space<smem>>
    %371 = vector.extract_strided_slice %359 {offsets = [0, 0, 2], sizes = [1, 16, 16], strides = [1, 1, 1]} : vector<1x16x22xf32> to vector<1x16x16xf32>
    %372 = vector.broadcast %370 : f32 to vector<1x16x16xf32>
    %373 = arith.mulf %371, %372 : vector<1x16x16xf32>
    %374 = arith.addf %369, %373 : vector<1x16x16xf32>
    %c59 = arith.constant 59 : index
    %375 = memref.load %arg4[%c59] : memref<98xf32, #tpu.memory_space<smem>>
    %376 = vector.extract_strided_slice %359 {offsets = [0, 0, 3], sizes = [1, 16, 16], strides = [1, 1, 1]} : vector<1x16x22xf32> to vector<1x16x16xf32>
    %377 = vector.broadcast %375 : f32 to vector<1x16x16xf32>
    %378 = arith.mulf %376, %377 : vector<1x16x16xf32>
    %379 = arith.addf %374, %378 : vector<1x16x16xf32>
    %c60 = arith.constant 60 : index
    %380 = memref.load %arg4[%c60] : memref<98xf32, #tpu.memory_space<smem>>
    %381 = vector.extract_strided_slice %359 {offsets = [0, 0, 4], sizes = [1, 16, 16], strides = [1, 1, 1]} : vector<1x16x22xf32> to vector<1x16x16xf32>
    %382 = vector.broadcast %380 : f32 to vector<1x16x16xf32>
    %383 = arith.mulf %381, %382 : vector<1x16x16xf32>
    %384 = arith.addf %379, %383 : vector<1x16x16xf32>
    %c61 = arith.constant 61 : index
    %385 = memref.load %arg4[%c61] : memref<98xf32, #tpu.memory_space<smem>>
    %386 = vector.extract_strided_slice %359 {offsets = [0, 0, 5], sizes = [1, 16, 16], strides = [1, 1, 1]} : vector<1x16x22xf32> to vector<1x16x16xf32>
    %387 = vector.broadcast %385 : f32 to vector<1x16x16xf32>
    %388 = arith.mulf %386, %387 : vector<1x16x16xf32>
    %389 = arith.addf %384, %388 : vector<1x16x16xf32>
    %c62 = arith.constant 62 : index
    %390 = memref.load %arg4[%c62] : memref<98xf32, #tpu.memory_space<smem>>
    %391 = vector.extract_strided_slice %359 {offsets = [0, 0, 6], sizes = [1, 16, 16], strides = [1, 1, 1]} : vector<1x16x22xf32> to vector<1x16x16xf32>
    %392 = vector.broadcast %390 : f32 to vector<1x16x16xf32>
    %393 = arith.mulf %391, %392 : vector<1x16x16xf32>
    %394 = arith.addf %389, %393 : vector<1x16x16xf32>
    %c1_88 = arith.constant 1 : index
    %c0_89 = arith.constant 0 : index
    %c2_90 = arith.constant 2 : index
    %c0_91 = arith.constant 0 : index
    %395 = vector.load %arg7[%c1_88, %c0_89, %c2_90, %c0_91] : memref<2x1x22x22xf32, #tpu.memory_space<vmem>>, vector<1x1x16x22xf32>
    %396 = vector.shape_cast %395 : vector<1x1x16x22xf32> to vector<1x16x22xf32>
    %c63 = arith.constant 63 : index
    %397 = memref.load %arg4[%c63] : memref<98xf32, #tpu.memory_space<smem>>
    %398 = vector.extract_strided_slice %396 {offsets = [0, 0, 0], sizes = [1, 16, 16], strides = [1, 1, 1]} : vector<1x16x22xf32> to vector<1x16x16xf32>
    %399 = vector.broadcast %397 : f32 to vector<1x16x16xf32>
    %400 = arith.mulf %398, %399 : vector<1x16x16xf32>
    %401 = arith.addf %394, %400 : vector<1x16x16xf32>
    %c64 = arith.constant 64 : index
    %402 = memref.load %arg4[%c64] : memref<98xf32, #tpu.memory_space<smem>>
    %403 = vector.extract_strided_slice %396 {offsets = [0, 0, 1], sizes = [1, 16, 16], strides = [1, 1, 1]} : vector<1x16x22xf32> to vector<1x16x16xf32>
    %404 = vector.broadcast %402 : f32 to vector<1x16x16xf32>
    %405 = arith.mulf %403, %404 : vector<1x16x16xf32>
    %406 = arith.addf %401, %405 : vector<1x16x16xf32>
    %c65 = arith.constant 65 : index
    %407 = memref.load %arg4[%c65] : memref<98xf32, #tpu.memory_space<smem>>
    %408 = vector.extract_strided_slice %396 {offsets = [0, 0, 2], sizes = [1, 16, 16], strides = [1, 1, 1]} : vector<1x16x22xf32> to vector<1x16x16xf32>
    %409 = vector.broadcast %407 : f32 to vector<1x16x16xf32>
    %410 = arith.mulf %408, %409 : vector<1x16x16xf32>
    %411 = arith.addf %406, %410 : vector<1x16x16xf32>
    %c66 = arith.constant 66 : index
    %412 = memref.load %arg4[%c66] : memref<98xf32, #tpu.memory_space<smem>>
    %413 = vector.extract_strided_slice %396 {offsets = [0, 0, 3], sizes = [1, 16, 16], strides = [1, 1, 1]} : vector<1x16x22xf32> to vector<1x16x16xf32>
    %414 = vector.broadcast %412 : f32 to vector<1x16x16xf32>
    %415 = arith.mulf %413, %414 : vector<1x16x16xf32>
    %416 = arith.addf %411, %415 : vector<1x16x16xf32>
    %c67 = arith.constant 67 : index
    %417 = memref.load %arg4[%c67] : memref<98xf32, #tpu.memory_space<smem>>
    %418 = vector.extract_strided_slice %396 {offsets = [0, 0, 4], sizes = [1, 16, 16], strides = [1, 1, 1]} : vector<1x16x22xf32> to vector<1x16x16xf32>
    %419 = vector.broadcast %417 : f32 to vector<1x16x16xf32>
    %420 = arith.mulf %418, %419 : vector<1x16x16xf32>
    %421 = arith.addf %416, %420 : vector<1x16x16xf32>
    %c68 = arith.constant 68 : index
    %422 = memref.load %arg4[%c68] : memref<98xf32, #tpu.memory_space<smem>>
    %423 = vector.extract_strided_slice %396 {offsets = [0, 0, 5], sizes = [1, 16, 16], strides = [1, 1, 1]} : vector<1x16x22xf32> to vector<1x16x16xf32>
    %424 = vector.broadcast %422 : f32 to vector<1x16x16xf32>
    %425 = arith.mulf %423, %424 : vector<1x16x16xf32>
    %426 = arith.addf %421, %425 : vector<1x16x16xf32>
    %c69 = arith.constant 69 : index
    %427 = memref.load %arg4[%c69] : memref<98xf32, #tpu.memory_space<smem>>
    %428 = vector.extract_strided_slice %396 {offsets = [0, 0, 6], sizes = [1, 16, 16], strides = [1, 1, 1]} : vector<1x16x22xf32> to vector<1x16x16xf32>
    %429 = vector.broadcast %427 : f32 to vector<1x16x16xf32>
    %430 = arith.mulf %428, %429 : vector<1x16x16xf32>
    %431 = arith.addf %426, %430 : vector<1x16x16xf32>
    %c1_92 = arith.constant 1 : index
    %c0_93 = arith.constant 0 : index
    %c3_94 = arith.constant 3 : index
    %c0_95 = arith.constant 0 : index
    %432 = vector.load %arg7[%c1_92, %c0_93, %c3_94, %c0_95] : memref<2x1x22x22xf32, #tpu.memory_space<vmem>>, vector<1x1x16x22xf32>
    %433 = vector.shape_cast %432 : vector<1x1x16x22xf32> to vector<1x16x22xf32>
    %c70 = arith.constant 70 : index
    %434 = memref.load %arg4[%c70] : memref<98xf32, #tpu.memory_space<smem>>
    %435 = vector.extract_strided_slice %433 {offsets = [0, 0, 0], sizes = [1, 16, 16], strides = [1, 1, 1]} : vector<1x16x22xf32> to vector<1x16x16xf32>
    %436 = vector.broadcast %434 : f32 to vector<1x16x16xf32>
    %437 = arith.mulf %435, %436 : vector<1x16x16xf32>
    %438 = arith.addf %431, %437 : vector<1x16x16xf32>
    %c71 = arith.constant 71 : index
    %439 = memref.load %arg4[%c71] : memref<98xf32, #tpu.memory_space<smem>>
    %440 = vector.extract_strided_slice %433 {offsets = [0, 0, 1], sizes = [1, 16, 16], strides = [1, 1, 1]} : vector<1x16x22xf32> to vector<1x16x16xf32>
    %441 = vector.broadcast %439 : f32 to vector<1x16x16xf32>
    %442 = arith.mulf %440, %441 : vector<1x16x16xf32>
    %443 = arith.addf %438, %442 : vector<1x16x16xf32>
    %c72 = arith.constant 72 : index
    %444 = memref.load %arg4[%c72] : memref<98xf32, #tpu.memory_space<smem>>
    %445 = vector.extract_strided_slice %433 {offsets = [0, 0, 2], sizes = [1, 16, 16], strides = [1, 1, 1]} : vector<1x16x22xf32> to vector<1x16x16xf32>
    %446 = vector.broadcast %444 : f32 to vector<1x16x16xf32>
    %447 = arith.mulf %445, %446 : vector<1x16x16xf32>
    %448 = arith.addf %443, %447 : vector<1x16x16xf32>
    %c73 = arith.constant 73 : index
    %449 = memref.load %arg4[%c73] : memref<98xf32, #tpu.memory_space<smem>>
    %450 = vector.extract_strided_slice %433 {offsets = [0, 0, 3], sizes = [1, 16, 16], strides = [1, 1, 1]} : vector<1x16x22xf32> to vector<1x16x16xf32>
    %451 = vector.broadcast %449 : f32 to vector<1x16x16xf32>
    %452 = arith.mulf %450, %451 : vector<1x16x16xf32>
    %453 = arith.addf %448, %452 : vector<1x16x16xf32>
    %c74 = arith.constant 74 : index
    %454 = memref.load %arg4[%c74] : memref<98xf32, #tpu.memory_space<smem>>
    %455 = vector.extract_strided_slice %433 {offsets = [0, 0, 4], sizes = [1, 16, 16], strides = [1, 1, 1]} : vector<1x16x22xf32> to vector<1x16x16xf32>
    %456 = vector.broadcast %454 : f32 to vector<1x16x16xf32>
    %457 = arith.mulf %455, %456 : vector<1x16x16xf32>
    %458 = arith.addf %453, %457 : vector<1x16x16xf32>
    %c75 = arith.constant 75 : index
    %459 = memref.load %arg4[%c75] : memref<98xf32, #tpu.memory_space<smem>>
    %460 = vector.extract_strided_slice %433 {offsets = [0, 0, 5], sizes = [1, 16, 16], strides = [1, 1, 1]} : vector<1x16x22xf32> to vector<1x16x16xf32>
    %461 = vector.broadcast %459 : f32 to vector<1x16x16xf32>
    %462 = arith.mulf %460, %461 : vector<1x16x16xf32>
    %463 = arith.addf %458, %462 : vector<1x16x16xf32>
    %c76 = arith.constant 76 : index
    %464 = memref.load %arg4[%c76] : memref<98xf32, #tpu.memory_space<smem>>
    %465 = vector.extract_strided_slice %433 {offsets = [0, 0, 6], sizes = [1, 16, 16], strides = [1, 1, 1]} : vector<1x16x22xf32> to vector<1x16x16xf32>
    %466 = vector.broadcast %464 : f32 to vector<1x16x16xf32>
    %467 = arith.mulf %465, %466 : vector<1x16x16xf32>
    %468 = arith.addf %463, %467 : vector<1x16x16xf32>
    %c1_96 = arith.constant 1 : index
    %c0_97 = arith.constant 0 : index
    %c4_98 = arith.constant 4 : index
    %c0_99 = arith.constant 0 : index
    %469 = vector.load %arg7[%c1_96, %c0_97, %c4_98, %c0_99] : memref<2x1x22x22xf32, #tpu.memory_space<vmem>>, vector<1x1x16x22xf32>
    %470 = vector.shape_cast %469 : vector<1x1x16x22xf32> to vector<1x16x22xf32>
    %c77 = arith.constant 77 : index
    %471 = memref.load %arg4[%c77] : memref<98xf32, #tpu.memory_space<smem>>
    %472 = vector.extract_strided_slice %470 {offsets = [0, 0, 0], sizes = [1, 16, 16], strides = [1, 1, 1]} : vector<1x16x22xf32> to vector<1x16x16xf32>
    %473 = vector.broadcast %471 : f32 to vector<1x16x16xf32>
    %474 = arith.mulf %472, %473 : vector<1x16x16xf32>
    %475 = arith.addf %468, %474 : vector<1x16x16xf32>
    %c78 = arith.constant 78 : index
    %476 = memref.load %arg4[%c78] : memref<98xf32, #tpu.memory_space<smem>>
    %477 = vector.extract_strided_slice %470 {offsets = [0, 0, 1], sizes = [1, 16, 16], strides = [1, 1, 1]} : vector<1x16x22xf32> to vector<1x16x16xf32>
    %478 = vector.broadcast %476 : f32 to vector<1x16x16xf32>
    %479 = arith.mulf %477, %478 : vector<1x16x16xf32>
    %480 = arith.addf %475, %479 : vector<1x16x16xf32>
    %c79 = arith.constant 79 : index
    %481 = memref.load %arg4[%c79] : memref<98xf32, #tpu.memory_space<smem>>
    %482 = vector.extract_strided_slice %470 {offsets = [0, 0, 2], sizes = [1, 16, 16], strides = [1, 1, 1]} : vector<1x16x22xf32> to vector<1x16x16xf32>
    %483 = vector.broadcast %481 : f32 to vector<1x16x16xf32>
    %484 = arith.mulf %482, %483 : vector<1x16x16xf32>
    %485 = arith.addf %480, %484 : vector<1x16x16xf32>
    %c80 = arith.constant 80 : index
    %486 = memref.load %arg4[%c80] : memref<98xf32, #tpu.memory_space<smem>>
    %487 = vector.extract_strided_slice %470 {offsets = [0, 0, 3], sizes = [1, 16, 16], strides = [1, 1, 1]} : vector<1x16x22xf32> to vector<1x16x16xf32>
    %488 = vector.broadcast %486 : f32 to vector<1x16x16xf32>
    %489 = arith.mulf %487, %488 : vector<1x16x16xf32>
    %490 = arith.addf %485, %489 : vector<1x16x16xf32>
    %c81 = arith.constant 81 : index
    %491 = memref.load %arg4[%c81] : memref<98xf32, #tpu.memory_space<smem>>
    %492 = vector.extract_strided_slice %470 {offsets = [0, 0, 4], sizes = [1, 16, 16], strides = [1, 1, 1]} : vector<1x16x22xf32> to vector<1x16x16xf32>
    %493 = vector.broadcast %491 : f32 to vector<1x16x16xf32>
    %494 = arith.mulf %492, %493 : vector<1x16x16xf32>
    %495 = arith.addf %490, %494 : vector<1x16x16xf32>
    %c82 = arith.constant 82 : index
    %496 = memref.load %arg4[%c82] : memref<98xf32, #tpu.memory_space<smem>>
    %497 = vector.extract_strided_slice %470 {offsets = [0, 0, 5], sizes = [1, 16, 16], strides = [1, 1, 1]} : vector<1x16x22xf32> to vector<1x16x16xf32>
    %498 = vector.broadcast %496 : f32 to vector<1x16x16xf32>
    %499 = arith.mulf %497, %498 : vector<1x16x16xf32>
    %500 = arith.addf %495, %499 : vector<1x16x16xf32>
    %c83 = arith.constant 83 : index
    %501 = memref.load %arg4[%c83] : memref<98xf32, #tpu.memory_space<smem>>
    %502 = vector.extract_strided_slice %470 {offsets = [0, 0, 6], sizes = [1, 16, 16], strides = [1, 1, 1]} : vector<1x16x22xf32> to vector<1x16x16xf32>
    %503 = vector.broadcast %501 : f32 to vector<1x16x16xf32>
    %504 = arith.mulf %502, %503 : vector<1x16x16xf32>
    %505 = arith.addf %500, %504 : vector<1x16x16xf32>
    %c1_100 = arith.constant 1 : index
    %c0_101 = arith.constant 0 : index
    %c5_102 = arith.constant 5 : index
    %c0_103 = arith.constant 0 : index
    %506 = vector.load %arg7[%c1_100, %c0_101, %c5_102, %c0_103] : memref<2x1x22x22xf32, #tpu.memory_space<vmem>>, vector<1x1x16x22xf32>
    %507 = vector.shape_cast %506 : vector<1x1x16x22xf32> to vector<1x16x22xf32>
    %c84 = arith.constant 84 : index
    %508 = memref.load %arg4[%c84] : memref<98xf32, #tpu.memory_space<smem>>
    %509 = vector.extract_strided_slice %507 {offsets = [0, 0, 0], sizes = [1, 16, 16], strides = [1, 1, 1]} : vector<1x16x22xf32> to vector<1x16x16xf32>
    %510 = vector.broadcast %508 : f32 to vector<1x16x16xf32>
    %511 = arith.mulf %509, %510 : vector<1x16x16xf32>
    %512 = arith.addf %505, %511 : vector<1x16x16xf32>
    %c85 = arith.constant 85 : index
    %513 = memref.load %arg4[%c85] : memref<98xf32, #tpu.memory_space<smem>>
    %514 = vector.extract_strided_slice %507 {offsets = [0, 0, 1], sizes = [1, 16, 16], strides = [1, 1, 1]} : vector<1x16x22xf32> to vector<1x16x16xf32>
    %515 = vector.broadcast %513 : f32 to vector<1x16x16xf32>
    %516 = arith.mulf %514, %515 : vector<1x16x16xf32>
    %517 = arith.addf %512, %516 : vector<1x16x16xf32>
    %c86 = arith.constant 86 : index
    %518 = memref.load %arg4[%c86] : memref<98xf32, #tpu.memory_space<smem>>
    %519 = vector.extract_strided_slice %507 {offsets = [0, 0, 2], sizes = [1, 16, 16], strides = [1, 1, 1]} : vector<1x16x22xf32> to vector<1x16x16xf32>
    %520 = vector.broadcast %518 : f32 to vector<1x16x16xf32>
    %521 = arith.mulf %519, %520 : vector<1x16x16xf32>
    %522 = arith.addf %517, %521 : vector<1x16x16xf32>
    %c87 = arith.constant 87 : index
    %523 = memref.load %arg4[%c87] : memref<98xf32, #tpu.memory_space<smem>>
    %524 = vector.extract_strided_slice %507 {offsets = [0, 0, 3], sizes = [1, 16, 16], strides = [1, 1, 1]} : vector<1x16x22xf32> to vector<1x16x16xf32>
    %525 = vector.broadcast %523 : f32 to vector<1x16x16xf32>
    %526 = arith.mulf %524, %525 : vector<1x16x16xf32>
    %527 = arith.addf %522, %526 : vector<1x16x16xf32>
    %c88 = arith.constant 88 : index
    %528 = memref.load %arg4[%c88] : memref<98xf32, #tpu.memory_space<smem>>
    %529 = vector.extract_strided_slice %507 {offsets = [0, 0, 4], sizes = [1, 16, 16], strides = [1, 1, 1]} : vector<1x16x22xf32> to vector<1x16x16xf32>
    %530 = vector.broadcast %528 : f32 to vector<1x16x16xf32>
    %531 = arith.mulf %529, %530 : vector<1x16x16xf32>
    %532 = arith.addf %527, %531 : vector<1x16x16xf32>
    %c89 = arith.constant 89 : index
    %533 = memref.load %arg4[%c89] : memref<98xf32, #tpu.memory_space<smem>>
    %534 = vector.extract_strided_slice %507 {offsets = [0, 0, 5], sizes = [1, 16, 16], strides = [1, 1, 1]} : vector<1x16x22xf32> to vector<1x16x16xf32>
    %535 = vector.broadcast %533 : f32 to vector<1x16x16xf32>
    %536 = arith.mulf %534, %535 : vector<1x16x16xf32>
    %537 = arith.addf %532, %536 : vector<1x16x16xf32>
    %c90 = arith.constant 90 : index
    %538 = memref.load %arg4[%c90] : memref<98xf32, #tpu.memory_space<smem>>
    %539 = vector.extract_strided_slice %507 {offsets = [0, 0, 6], sizes = [1, 16, 16], strides = [1, 1, 1]} : vector<1x16x22xf32> to vector<1x16x16xf32>
    %540 = vector.broadcast %538 : f32 to vector<1x16x16xf32>
    %541 = arith.mulf %539, %540 : vector<1x16x16xf32>
    %542 = arith.addf %537, %541 : vector<1x16x16xf32>
    %c1_104 = arith.constant 1 : index
    %c0_105 = arith.constant 0 : index
    %c6_106 = arith.constant 6 : index
    %c0_107 = arith.constant 0 : index
    %543 = vector.load %arg7[%c1_104, %c0_105, %c6_106, %c0_107] : memref<2x1x22x22xf32, #tpu.memory_space<vmem>>, vector<1x1x16x22xf32>
    %544 = vector.shape_cast %543 : vector<1x1x16x22xf32> to vector<1x16x22xf32>
    %c91 = arith.constant 91 : index
    %545 = memref.load %arg4[%c91] : memref<98xf32, #tpu.memory_space<smem>>
    %546 = vector.extract_strided_slice %544 {offsets = [0, 0, 0], sizes = [1, 16, 16], strides = [1, 1, 1]} : vector<1x16x22xf32> to vector<1x16x16xf32>
    %547 = vector.broadcast %545 : f32 to vector<1x16x16xf32>
    %548 = arith.mulf %546, %547 : vector<1x16x16xf32>
    %549 = arith.addf %542, %548 : vector<1x16x16xf32>
    %c92 = arith.constant 92 : index
    %550 = memref.load %arg4[%c92] : memref<98xf32, #tpu.memory_space<smem>>
    %551 = vector.extract_strided_slice %544 {offsets = [0, 0, 1], sizes = [1, 16, 16], strides = [1, 1, 1]} : vector<1x16x22xf32> to vector<1x16x16xf32>
    %552 = vector.broadcast %550 : f32 to vector<1x16x16xf32>
    %553 = arith.mulf %551, %552 : vector<1x16x16xf32>
    %554 = arith.addf %549, %553 : vector<1x16x16xf32>
    %c93 = arith.constant 93 : index
    %555 = memref.load %arg4[%c93] : memref<98xf32, #tpu.memory_space<smem>>
    %556 = vector.extract_strided_slice %544 {offsets = [0, 0, 2], sizes = [1, 16, 16], strides = [1, 1, 1]} : vector<1x16x22xf32> to vector<1x16x16xf32>
    %557 = vector.broadcast %555 : f32 to vector<1x16x16xf32>
    %558 = arith.mulf %556, %557 : vector<1x16x16xf32>
    %559 = arith.addf %554, %558 : vector<1x16x16xf32>
    %c94 = arith.constant 94 : index
    %560 = memref.load %arg4[%c94] : memref<98xf32, #tpu.memory_space<smem>>
    %561 = vector.extract_strided_slice %544 {offsets = [0, 0, 3], sizes = [1, 16, 16], strides = [1, 1, 1]} : vector<1x16x22xf32> to vector<1x16x16xf32>
    %562 = vector.broadcast %560 : f32 to vector<1x16x16xf32>
    %563 = arith.mulf %561, %562 : vector<1x16x16xf32>
    %564 = arith.addf %559, %563 : vector<1x16x16xf32>
    %c95 = arith.constant 95 : index
    %565 = memref.load %arg4[%c95] : memref<98xf32, #tpu.memory_space<smem>>
    %566 = vector.extract_strided_slice %544 {offsets = [0, 0, 4], sizes = [1, 16, 16], strides = [1, 1, 1]} : vector<1x16x22xf32> to vector<1x16x16xf32>
    %567 = vector.broadcast %565 : f32 to vector<1x16x16xf32>
    %568 = arith.mulf %566, %567 : vector<1x16x16xf32>
    %569 = arith.addf %564, %568 : vector<1x16x16xf32>
    %c96 = arith.constant 96 : index
    %570 = memref.load %arg4[%c96] : memref<98xf32, #tpu.memory_space<smem>>
    %571 = vector.extract_strided_slice %544 {offsets = [0, 0, 5], sizes = [1, 16, 16], strides = [1, 1, 1]} : vector<1x16x22xf32> to vector<1x16x16xf32>
    %572 = vector.broadcast %570 : f32 to vector<1x16x16xf32>
    %573 = arith.mulf %571, %572 : vector<1x16x16xf32>
    %574 = arith.addf %569, %573 : vector<1x16x16xf32>
    %c97 = arith.constant 97 : index
    %575 = memref.load %arg4[%c97] : memref<98xf32, #tpu.memory_space<smem>>
    %576 = vector.extract_strided_slice %544 {offsets = [0, 0, 6], sizes = [1, 16, 16], strides = [1, 1, 1]} : vector<1x16x22xf32> to vector<1x16x16xf32>
    %577 = vector.broadcast %575 : f32 to vector<1x16x16xf32>
    %578 = arith.mulf %576, %577 : vector<1x16x16xf32>
    %579 = arith.addf %574, %578 : vector<1x16x16xf32>
    %580 = arith.negf %579 : vector<1x16x16xf32>
    %581 = math.exp %580 : vector<1x16x16xf32>
    %cst_108 = arith.constant 1.000000e+00 : f32
    %582 = vector.broadcast %cst_108 : f32 to vector<1x16x16xf32>
    %583 = arith.addf %582, %581 : vector<1x16x16xf32>
    %584 = arith.divf %582, %583 : vector<1x16x16xf32>
    %585 = vector.shape_cast %584 : vector<1x16x16xf32> to vector<1x16x16x1xf32>
    %586 = vector.broadcast %585 : vector<1x16x16x1xf32> to vector<1x16x16x32xf32>
    %587 = arith.mulf %41, %586 : vector<1x16x16x32xf32>
    %c0_109 = arith.constant 0 : index
    %c0_110 = arith.constant 0 : index
    %c0_111 = arith.constant 0 : index
    %c0_112 = arith.constant 0 : index
    %588 = vector.load %arg6[%c0_109, %c0_110, %c0_111, %c0_112] : memref<1x16x16x32xf32, #tpu.memory_space<vmem>>, vector<1x16x16x32xf32>
    tpu.vector_store %arg6[%c0_109, %c0_110, %c0_111, %c0_112], %587 {strides = array<i32>} : memref<1x16x16x32xf32, #tpu.memory_space<vmem>>, vector<1x16x16x32xf32>,
    return
  }
  func.func @transform_0(%arg0: i32) -> (i32, i32, i32, i32) {
    %c0_i32 = arith.constant 0 : i32
    %c0_i32_0 = arith.constant 0 : i32
    %c0_i32_1 = arith.constant 0 : i32
    %c0_i32_2 = arith.constant 0 : i32
    return %arg0, %c0_i32, %c0_i32_0, %c0_i32_1 : i32, i32, i32, i32
  }
  func.func @transform_1(%arg0: i32) -> (i32, i32) {
    %c0_i32 = arith.constant 0 : i32
    %c0_i32_0 = arith.constant 0 : i32
    %c0_i32_1 = arith.constant 0 : i32
    return %c0_i32, %c0_i32_0 : i32, i32
  }
  func.func @transform_2(%arg0: i32) -> (i32, i32) {
    %c0_i32 = arith.constant 0 : i32
    %c0_i32_0 = arith.constant 0 : i32
    %c0_i32_1 = arith.constant 0 : i32
    return %c0_i32, %c0_i32_0 : i32, i32
  }
  func.func @transform_3(%arg0: i32) -> i32 {
    %c0_i32 = arith.constant 0 : i32
    %c0_i32_0 = arith.constant 0 : i32
    return %c0_i32 : i32
  }
  func.func @transform_4(%arg0: i32) -> i32 {
    %c0_i32 = arith.constant 0 : i32
    %c0_i32_0 = arith.constant 0 : i32
    return %c0_i32 : i32
  }
  func.func @transform_5(%arg0: i32) -> (i32, i32, i32, i32) {
    %c0_i32 = arith.constant 0 : i32
    %c0_i32_0 = arith.constant 0 : i32
    %c0_i32_1 = arith.constant 0 : i32
    %c0_i32_2 = arith.constant 0 : i32
    return %arg0, %c0_i32, %c0_i32_0, %c0_i32_1 : i32, i32, i32, i32
  }
}

</mosaic_0001>

<llo_original>
// kernel: tpu_custom_call.1
$region0: #{tpu_custom_call.1}
  #allocation0 [shape = 'u32[]', space=smem, size = 0x4, offset = 0x4, fixed_abs, tag = 'smem constant byte address 0x4 - core index']
  #allocation1 [shape = 'u32[144,128]{1,0:T(1,128)}', space=vmem, size = 0x12000, scoped, tag = 'internal scratch']
  #allocation2 [shape = 'f32[2,1,22,22]{3,2,1,0:T(8,128)}', space=vmem, size = 0x6000, scoped, tag = 'scratch operand']
  #allocation3 [shape = 'f32[1]{0:T(128)S(6)}', space=smem, size = 0x200, scoped, tag = 'scoped memory for tpu_custom_call.1']
  %s0 = inlined_call_operand.hbm [shape: f32[2,16,16,32], index: 0, kind: input, shape index: {}]
  %s1 = inlined_call_operand.vmem [shape: f32[2,32], index: 1, kind: input, shape index: {}]
  %s2 = inlined_call_operand.vmem [shape: f32[2,32], index: 2, kind: input, shape index: {}]
  %s3 = inlined_call_operand.vmem [shape: f32[98], index: 3, kind: input, shape index: {}]
  %s4 = inlined_call_operand.<no memory space> [shape: f32[1], index: 4, kind: input, shape index: {}]
  %s5 = inlined_call_operand.hbm [shape: f32[2,16,16,32], index: 5, kind: output, shape index: {}]
  %s6 = sld [smem:[#allocation0]]
  $region61: #{tpu_custom_call.1} parent=0
    _
  %s8 = ssub.s32 1, %s6
  %s9 = scalar_select 0, %s8, %s6
  %10 = sst [smem:[#allocation3]] %s4
  $region1: #{tpu_custom_call.1} parent=0
    #allocation4 [shape = 'u8[262144]{0}', space=vmem, size = 0x40000, scoped, tag = 'input window, operand 0']
    #allocation5 [shape = 's32[2]{0}', space=sflag, size = 0x8, scoped, tag = 'scoped memory for tpu_custom_call.1']
    #allocation6 [shape = 's32[2]{0}', space=sflag, size = 0x8, scoped, tag = 'scoped memory for tpu_custom_call.1']
    #allocation7 [shape = 's32[2]{0}', space=sflag, size = 0x8, scoped, tag = 'scoped memory for tpu_custom_call.1']
    #allocation8 [shape = 'u8[512]{0}', space=smem, size = 0x200, scoped, tag = 'input window, operand 3, single buffered']
    #allocation9 [shape = 'u8[262144]{0}', space=vmem, size = 0x40000, scoped, tag = 'output window, operand 0']
    %11 = vsyncpa [#allocation5], 0
    %s12 = scalar_lea.sflag [#allocation5], 1
    %13 = vsyncpa %s12, 0
    %14 = vsyncpa [#allocation7], 0
    %15 = vsyncpa [#allocation6], 0
    %s16 = scalar_lea.sflag [#allocation6], 1
    %17 = vsyncpa %s16, 0
    loop: start=0, step=1, limit=4
    $region2: #{tpu_custom_call.1} parent=1 // loop_pre_header
      _
    $region3: #{tpu_custom_call.1} parent=1 // loop_header
      %s19 = sphi 0, %s23
      %p20 = scmp.ge.s32.totalorder %s19, 4
      %s29 = sphi 0, %s31
      %s32 = sphi 0, %s29
      %s33 = sphi 0, %s32
      %s49 = sphi 0, %s33
      %s53 = sphi 0, %s53
      %s55 = sphi 0, %s53
      %s56 = sphi 0, %s55
      %s70 = sphi 0, %s56
      %s74 = sphi 0, %s74
      %s76 = sphi 0, %s74
      %s77 = sphi 0, %s76
      %s91 = sphi 0, %s77
      %s95 = sphi 0, %s95
      %s97 = sphi 0, %s95
      %s98 = sphi 0, %s97
      %s112 = sphi 0, %s98
      %s116 = sphi 0, %s116
      %s118 = sphi 0, %s116
      %s119 = sphi 0, %s118
      %s133 = sphi 0, %s119
      %s139 = sphi 0, %s141
      %s142 = sphi 0, %s139
      %s143 = sphi 0, %s142
      %s159 = sphi 0, %s143
    $region4: #{tpu_custom_call.1} parent=1 // loop_header_branch
      %22 = sbr.rel (%p20) target = $region8
    $region5: #{tpu_custom_call.1} parent=1 // loop_body
      %s24 = ssub.s32 %s19, 1
      %s25 = ssub.s32 %s19, 2
      %s26 = sadd.s32 %s19, 1
      %s27 = ssub.s32 %s19, %s26
      %p28 = scmp.eq.s32.totalorder %s27, 0
      %s30 = sadd.s32 %s29, 1
      %s31 = scalar_select %p28, %s29, %s30
      %p34 = pneg %p28
      %p35 = scmp.eq.s32.totalorder %s19, 1
      %p36 = por %p34, %p35
      %p37 = scmp.ne.s32.totalorder %s29, %s32
      %p38 = scmp.eq.s32.totalorder %s19, 0
      %p39 = por %p37, %p38
      %p40 = scmp.ne.s32.totalorder %s29, %s32
      %p41 = scmp.eq.s32.totalorder %s24, 1
      %p42 = por %p40, %p41
      %p43 = scmp.ne.s32.totalorder %s32, %s33
      %p44 = scmp.eq.s32.totalorder %s24, 0
      %p45 = por %p43, %p44
      %p46 = scmp.ne.s32.totalorder %s32, %s33
      %p47 = scmp.eq.s32.totalorder %s25, 1
      %p48 = por %p46, %p47
      %p50 = scmp.ne.s32.totalorder %s33, %s49
      %p51 = scmp.eq.s32.totalorder %s25, 0
      %p52 = por %p50, %p51
      %s54 = sadd.s32 %s53, 1
      %p57 = scmp.eq.s32.totalorder %s19, 1
      %p58 = scmp.ne.s32.totalorder %s53, %s55
      %p59 = scmp.eq.s32.totalorder %s19, 0
      %p60 = por %p58, %p59
      %p61 = scmp.ne.s32.totalorder %s53, %s55
      %p62 = scmp.eq.s32.totalorder %s24, 1
      %p63 = por %p61, %p62
      %p64 = scmp.ne.s32.totalorder %s55, %s56
      %p65 = scmp.eq.s32.totalorder %s24, 0
      %p66 = por %p64, %p65
      %p67 = scmp.ne.s32.totalorder %s55, %s56
      %p68 = scmp.eq.s32.totalorder %s25, 1
      %p69 = por %p67, %p68
      %p71 = scmp.ne.s32.totalorder %s56, %s70
      %p72 = scmp.eq.s32.totalorder %s25, 0
      %p73 = por %p71, %p72
      %s75 = sadd.s32 %s74, 1
      %p78 = scmp.eq.s32.totalorder %s19, 1
      %p79 = scmp.ne.s32.totalorder %s74, %s76
      %p80 = scmp.eq.s32.totalorder %s19, 0
      %p81 = por %p79, %p80
      %p82 = scmp.ne.s32.totalorder %s74, %s76
      %p83 = scmp.eq.s32.totalorder %s24, 1
      %p84 = por %p82, %p83
      %p85 = scmp.ne.s32.totalorder %s76, %s77
      %p86 = scmp.eq.s32.totalorder %s24, 0
      %p87 = por %p85, %p86
      %p88 = scmp.ne.s32.totalorder %s76, %s77
      %p89 = scmp.eq.s32.totalorder %s25, 1
      %p90 = por %p88, %p89
      %p92 = scmp.ne.s32.totalorder %s77, %s91
      %p93 = scmp.eq.s32.totalorder %s25, 0
      %p94 = por %p92, %p93
      %s96 = sadd.s32 %s95, 1
      %p99 = scmp.eq.s32.totalorder %s19, 1
      %p100 = scmp.ne.s32.totalorder %s95, %s97
      %p101 = scmp.eq.s32.totalorder %s19, 0
      %p102 = por %p100, %p101
      %p103 = scmp.ne.s32.totalorder %s95, %s97
      %p104 = scmp.eq.s32.totalorder %s24, 1
      %p105 = por %p103, %p104
      %p106 = scmp.ne.s32.totalorder %s97, %s98
      %p107 = scmp.eq.s32.totalorder %s24, 0
      %p108 = por %p106, %p107
      %p109 = scmp.ne.s32.totalorder %s97, %s98
      %p110 = scmp.eq.s32.totalorder %s25, 1
      %p111 = por %p109, %p110
      %p113 = scmp.ne.s32.totalorder %s98, %s112
      %p114 = scmp.eq.s32.totalorder %s25, 0
      %p115 = por %p113, %p114
      %s117 = sadd.s32 %s116, 1
      %p120 = scmp.eq.s32.totalorder %s19, 1
      %p121 = scmp.ne.s32.totalorder %s116, %s118
      %p122 = scmp.eq.s32.totalorder %s19, 0
      %p123 = por %p121, %p122
      %p124 = scmp.ne.s32.totalorder %s116, %s118
      %p125 = scmp.eq.s32.totalorder %s24, 1
      %p126 = por %p124, %p125
      %p127 = scmp.ne.s32.totalorder %s118, %s119
      %p128 = scmp.eq.s32.totalorder %s24, 0
      %p129 = por %p127, %p128
      %p130 = scmp.ne.s32.totalorder %s118, %s119
      %p131 = scmp.eq.s32.totalorder %s25, 1
      %p132 = por %p130, %p131
      %p134 = scmp.ne.s32.totalorder %s119, %s133
      %p135 = scmp.eq.s32.totalorder %s25, 0
      %p136 = por %p134, %p135
      %s137 = ssub.s32 %s19, %s26
      %p138 = scmp.eq.s32.totalorder %s137, 0
      %s140 = sadd.s32 %s139, 1
      %s141 = scalar_select %p138, %s139, %s140
      %p144 = pneg %p138
      %p145 = scmp.eq.s32.totalorder %s19, 1
      %p146 = por %p144, %p145
      %p147 = scmp.ne.s32.totalorder %s139, %s142
      %p148 = scmp.eq.s32.totalorder %s19, 0
      %p149 = por %p147, %p148
      %p150 = scmp.ne.s32.totalorder %s139, %s142
      %p151 = scmp.eq.s32.totalorder %s24, 1
      %p152 = por %p150, %p151
      %p153 = scmp.ne.s32.totalorder %s142, %s143
      %p154 = scmp.eq.s32.totalorder %s24, 0
      %p155 = por %p153, %p154
      %p156 = scmp.ne.s32.totalorder %s142, %s143
      %p157 = scmp.eq.s32.totalorder %s25, 1
      %p158 = por %p156, %p157
      %p160 = scmp.ne.s32.totalorder %s143, %s159
      %p161 = scmp.eq.s32.totalorder %s25, 0
      %p162 = por %p160, %p161
      %p163 = scmp.le.s32.totalorder 1, %s19
      %p164 = scmp.lt.s32.totalorder %s19, 3
      %p165 = pnand %p163, %p164
      %p166 = pneg %p165
      // Predicated region
      $region9: #{tpu_custom_call.1} parent=5 // pred_check
        _
      $region10: #{tpu_custom_call.1} parent=5 // pred_check_branch
        %168 = sbr.rel (%p165) target = $region12
      $region11: #{tpu_custom_call.1} parent=5 // pred_region
        %s169 = ssub.s32 %s19, 1
        // Predicated region
        $region13: #{tpu_custom_call.1} parent=11 // pred_check
          %p170 = pneg %p66
        $region14: #{tpu_custom_call.1} parent=11 // pred_check_branch
          %172 = sbr.rel (%p170) target = $region16
        $region15: #{tpu_custom_call.1} parent=11 // pred_region
          _
        $region16: #{tpu_custom_call.1} parent=11 // pred_fallthru
          _
        // Predicated region
        $region17: #{tpu_custom_call.1} parent=11 // pred_check
          %p173 = pneg %p87
        $region18: #{tpu_custom_call.1} parent=11 // pred_check_branch
          %175 = sbr.rel (%p173) target = $region20
        $region19: #{tpu_custom_call.1} parent=11 // pred_region
          _
        $region20: #{tpu_custom_call.1} parent=11 // pred_fallthru
          _
        // Predicated region
        $region21: #{tpu_custom_call.1} parent=11 // pred_check
          %p176 = pneg %p108
        $region22: #{tpu_custom_call.1} parent=11 // pred_check_branch
          %178 = sbr.rel (%p176) target = $region24
        $region23: #{tpu_custom_call.1} parent=11 // pred_region
          %s180 = ssub.s32 16, 16
          %181 = vsyncadd [#allocation7], %s180
          %s183 = sshll.u32 %s3, 4
          %s184 = int_to_ptr.vmem [resolvable:$true] %s183
          %186 = dma.vmem_to_smem %s184, 16, [#allocation8], [#allocation7]
        $region24: #{tpu_custom_call.1} parent=11 // pred_fallthru
          _
        // Predicated region
        $region25: #{tpu_custom_call.1} parent=11 // pred_check
          %p187 = pneg %p129
        $region26: #{tpu_custom_call.1} parent=11 // pred_check_branch
          %189 = sbr.rel (%p187) target = $region28
        $region27: #{tpu_custom_call.1} parent=11 // pred_region
          _
        $region28: #{tpu_custom_call.1} parent=11 // pred_fallthru
          _
      $region12: #{tpu_custom_call.1} parent=5 // pred_fallthru
        _
      %p190 = scmp.lt.s32.totalorder %s19, 2
      // Predicated region
      $region29: #{tpu_custom_call.1} parent=5 // pred_check
        %p191 = pneg %p190
      $region30: #{tpu_custom_call.1} parent=5 // pred_check_branch
        %193 = sbr.rel (%p191) target = $region32
      $region31: #{tpu_custom_call.1} parent=5 // pred_region
        // Predicated region
        $region33: #{tpu_custom_call.1} parent=31 // pred_check
          %p194 = pneg %p39
        $region34: #{tpu_custom_call.1} parent=31 // pred_check_branch
          %196 = sbr.rel (%p194) target = $region36
        $region35: #{tpu_custom_call.1} parent=31 // pred_region
          %s197 = sand.u32 %s29, 1
          %s198 = scalar_lea.sflag [#allocation5], %s197
          %s199 = sand.u32 %s29, 1
          %s200 = smul.addr %s199, 256
          %s201 = scalar_lea.vmem [#allocation4], %s200
          %s203 = ssub.s32 4096, 4096
          %204 = vsyncadd %s198, %s203
          %s205 = smul.addr %s19, 32
          %s206 = smul.addr %s205, 128
          %s207 = scalar_lea.hbm %s0, %s206
          %s208 = sshll.u32 %s201, 4
          %s209 = int_to_ptr.vmem [resolvable:$true] %s208
          %214 = dma.hbm_to_vmem [thread:$0]  %s207, 4096, %s209, %s198, 128, 128, 8
        $region36: #{tpu_custom_call.1} parent=31 // pred_fallthru
          _
      $region32: #{tpu_custom_call.1} parent=5 // pred_fallthru
        _
      %p215 = scmp.le.s32.totalorder 1, %s19
      %p216 = scmp.lt.s32.totalorder %s19, 3
      %p217 = pnand %p215, %p216
      %p218 = pneg %p217
      // Predicated region
      $region37: #{tpu_custom_call.1} parent=5 // pred_check
        _
      $region38: #{tpu_custom_call.1} parent=5 // pred_check_branch
        %220 = sbr.rel (%p217) target = $region40
      $region39: #{tpu_custom_call.1} parent=5 // pred_region
        %s221 = ssub.s32 %s19, 1
        %s222 = sand.u32 %s32, 1
        %s223 = scalar_lea.sflag [#allocation5], %s222
        %s224 = sand.u32 %s32, 1
        %s225 = smul.addr %s224, 256
        %s226 = scalar_lea.vmem [#allocation4], %s225
        // Predicated region
        $region41: #{tpu_custom_call.1} parent=39 // pred_check
          %p227 = pneg %p45
        $region42: #{tpu_custom_call.1} parent=39 // pred_check_branch
          %229 = sbr.rel (%p227) target = $region44
        $region43: #{tpu_custom_call.1} parent=39 // pred_region
          %230 = dma.done %s223, 4096
        $region44: #{tpu_custom_call.1} parent=39 // pred_fallthru
          _
        // Predicated region
        $region45: #{tpu_custom_call.1} parent=39 // pred_check
          %p231 = pneg %p108
        $region46: #{tpu_custom_call.1} parent=39 // pred_check_branch
          %233 = sbr.rel (%p231) target = $region48
        $region47: #{tpu_custom_call.1} parent=39 // pred_region
          %234 = dma.done [#allocation7], 16
        $region48: #{tpu_custom_call.1} parent=39 // pred_fallthru
          _
        %235 = sfence
        %s236 = sand.u32 %s32, 1
        %s237 = scalar_lea.sflag [#allocation5], %s236
        %s238 = sand.u32 %s32, 1
        %s239 = smul.addr %s238, 256
        %s240 = scalar_lea.vmem [#allocation4], %s239
        %p241 = pneg %p45
        %p242 = pneg %p42
        %p243 = pneg %p66
        %p244 = pneg %p63
        %p245 = pneg %p87
        %p246 = pneg %p84
        %p247 = pneg %p108
        %p248 = pneg %p105
        %p249 = pneg %p129
        %p250 = pneg %p126
        %p251 = pneg %p155
        %p252 = pneg %p152
        %s253 = sand.u32 %s142, 1
        %s254 = scalar_lea.sflag [#allocation6], %s253
        %s255 = sand.u32 %s142, 1
        %s256 = smul.addr %s255, 256
        %s257 = scalar_lea.vmem [#allocation9], %s256
        %v258 = vld [vmem:[%s226] sm:$0xff]
        %v259 = vld [vmem:[%s226 + $0x8] sm:$0xff]
        %v260 = vld [vmem:[%s226 + $0x10] sm:$0xff]
        %v261 = vld [vmem:[%s226 + $0x18] sm:$0xff]
        %v262 = vld [vmem:[%s226 + $0x20] sm:$0xff]
        %v263 = vld [vmem:[%s226 + $0x28] sm:$0xff]
        %v264 = vld [vmem:[%s226 + $0x30] sm:$0xff]
        %v265 = vld [vmem:[%s226 + $0x38] sm:$0xff]
        %v266 = vld [vmem:[%s226 + $0x40] sm:$0xff]
        %v267 = vld [vmem:[%s226 + $0x48] sm:$0xff]
        %v268 = vld [vmem:[%s226 + $0x50] sm:$0xff]
        %v269 = vld [vmem:[%s226 + $0x58] sm:$0xff]
        %v270 = vld [vmem:[%s226 + $0x60] sm:$0xff]
        %v271 = vld [vmem:[%s226 + $0x68] sm:$0xff]
        %v272 = vld [vmem:[%s226 + $0x70] sm:$0xff]
        %v273 = vld [vmem:[%s226 + $0x78] sm:$0xff]
        %v274 = vld [vmem:[%s226 + $0x80] sm:$0xff]
        %v275 = vld [vmem:[%s226 + $0x88] sm:$0xff]
        %v276 = vld [vmem:[%s226 + $0x90] sm:$0xff]
        %v277 = vld [vmem:[%s226 + $0x98] sm:$0xff]
        %v278 = vld [vmem:[%s226 + $0xa0] sm:$0xff]
        %v279 = vld [vmem:[%s226 + $0xa8] sm:$0xff]
        %v280 = vld [vmem:[%s226 + $0xb0] sm:$0xff]
        %v281 = vld [vmem:[%s226 + $0xb8] sm:$0xff]
        %v282 = vld [vmem:[%s226 + $0xc0] sm:$0xff]
        %v283 = vld [vmem:[%s226 + $0xc8] sm:$0xff]
        %v284 = vld [vmem:[%s226 + $0xd0] sm:$0xff]
        %v285 = vld [vmem:[%s226 + $0xd8] sm:$0xff]
        %v286 = vld [vmem:[%s226 + $0xe0] sm:$0xff]
        %v287 = vld [vmem:[%s226 + $0xe8] sm:$0xff]
        %v288 = vld [vmem:[%s226 + $0xf0] sm:$0xff]
        %v289 = vld [vmem:[%s226 + $0xf8] sm:$0xff]
        %vm290 = vcmask 261120
        %v291 = vsel %vm290, %v258, 0.0
        %v292 = vsel %vm290, %v259, 0.0
        %v293 = vadd.f32 %v291, %v292
        %v294 = vsel %vm290, %v260, 0.0
        %v295 = vadd.f32 %v293, %v294
        %v296 = vsel %vm290, %v261, 0.0
        %v297 = vadd.f32 %v295, %v296
        %v298 = vsel %vm290, %v262, 0.0
        %v299 = vadd.f32 %v297, %v298
        %v300 = vsel %vm290, %v263, 0.0
        %v301 = vadd.f32 %v299, %v300
        %v302 = vsel %vm290, %v264, 0.0
        %v303 = vadd.f32 %v301, %v302
        %v304 = vsel %vm290, %v265, 0.0
        %v305 = vadd.f32 %v303, %v304
        %v306 = vsel %vm290, %v266, 0.0
        %v307 = vadd.f32 %v305, %v306
        %v308 = vsel %vm290, %v267, 0.0
        %v309 = vadd.f32 %v307, %v308
        %v310 = vsel %vm290, %v268, 0.0
        %v311 = vadd.f32 %v309, %v310
        %v312 = vsel %vm290, %v269, 0.0
        %v313 = vadd.f32 %v311, %v312
        %v314 = vsel %vm290, %v270, 0.0
        %v315 = vadd.f32 %v313, %v314
        %v316 = vsel %vm290, %v271, 0.0
        %v317 = vadd.f32 %v315, %v316
        %v318 = vsel %vm290, %v272, 0.0
        %v319 = vadd.f32 %v317, %v318
        %v320 = vsel %vm290, %v273, 0.0
        %v321 = vadd.f32 %v319, %v320
        %v322 = vsel %vm290, %v274, 0.0
        %v323 = vadd.f32 %v321, %v322
        %v324 = vsel %vm290, %v275, 0.0
        %v325 = vadd.f32 %v323, %v324
        %v326 = vsel %vm290, %v276, 0.0
        %v327 = vadd.f32 %v325, %v326
        %v328 = vsel %vm290, %v277, 0.0
        %v329 = vadd.f32 %v327, %v328
        %v330 = vsel %vm290, %v278, 0.0
        %v331 = vadd.f32 %v329, %v330
        %v332 = vsel %vm290, %v279, 0.0
        %v333 = vadd.f32 %v331, %v332
        %v334 = vsel %vm290, %v280, 0.0
        %v335 = vadd.f32 %v333, %v334
        %v336 = vsel %vm290, %v281, 0.0
        %v337 = vadd.f32 %v335, %v336
        %v338 = vsel %vm290, %v282, 0.0
        %v339 = vadd.f32 %v337, %v338
        %v340 = vsel %vm290, %v283, 0.0
        %v341 = vadd.f32 %v339, %v340
        %v342 = vsel %vm290, %v284, 0.0
        %v343 = vadd.f32 %v341, %v342
        %v344 = vsel %vm290, %v285, 0.0
        %v345 = vadd.f32 %v343, %v344
        %v346 = vsel %vm290, %v286, 0.0
        %v347 = vadd.f32 %v345, %v346
        %v348 = vsel %vm290, %v287, 0.0
        %v349 = vadd.f32 %v347, %v348
        %v350 = vsel %vm290, %v288, 0.0
        %v351 = vadd.f32 %v349, %v350
        %v352 = vsel %vm290, %v289, 0.0
        %v353 = vadd.f32 %v351, %v352
        %v354 = vrot.slane %v353, 4
        %v355 = vadd.f32 %v353, %v354
        %v356 = vrot.slane %v355, 2
        %v357 = vadd.f32 %v355, %v356
        %v358 = vrot.slane %v357, 1
        %v359 = vadd.f32 %v357, %v358
        %v360 = vmul.f32 %v359, 0.00390625
        %v361 = vsel %vm290, %v258, -inf
        %v362 = vsel %vm290, %v259, -inf
        %v363 = vsel %vm290, %v260, -inf
        %v364 = vsel %vm290, %v261, -inf
        %v365 = vsel %vm290, %v262, -inf
        %v366 = vmax.f32 %v361, %v365
        %v367 = vsel %vm290, %v263, -inf
        %v368 = vmax.f32 %v362, %v367
        %v369 = vsel %vm290, %v264, -inf
        %v370 = vmax.f32 %v363, %v369
        %v371 = vsel %vm290, %v265, -inf
        %v372 = vmax.f32 %v364, %v371
        %v373 = vsel %vm290, %v266, -inf
        %v374 = vmax.f32 %v366, %v373
        %v375 = vsel %vm290, %v267, -inf
        %v376 = vmax.f32 %v368, %v375
        %v377 = vsel %vm290, %v268, -inf
        %v378 = vmax.f32 %v370, %v377
        %v379 = vsel %vm290, %v269, -inf
        %v380 = vmax.f32 %v372, %v379
        %v381 = vsel %vm290, %v270, -inf
        %v382 = vmax.f32 %v374, %v381
        %v383 = vsel %vm290, %v271, -inf
        %v384 = vmax.f32 %v376, %v383
        %v385 = vsel %vm290, %v272, -inf
        %v386 = vmax.f32 %v378, %v385
        %v387 = vsel %vm290, %v273, -inf
        %v388 = vmax.f32 %v380, %v387
        %v389 = vsel %vm290, %v274, -inf
        %v390 = vmax.f32 %v382, %v389
        %v391 = vsel %vm290, %v275, -inf
        %v392 = vmax.f32 %v384, %v391
        %v393 = vsel %vm290, %v276, -inf
        %v394 = vmax.f32 %v386, %v393
        %v395 = vsel %vm290, %v277, -inf
        %v396 = vmax.f32 %v388, %v395
        %v397 = vsel %vm290, %v278, -inf
        %v398 = vmax.f32 %v390, %v397
        %v399 = vsel %vm290, %v279, -inf
        %v400 = vmax.f32 %v392, %v399
        %v401 = vsel %vm290, %v280, -inf
        %v402 = vmax.f32 %v394, %v401
        %v403 = vsel %vm290, %v281, -inf
        %v404 = vmax.f32 %v396, %v403
        %v405 = vsel %vm290, %v282, -inf
        %v406 = vmax.f32 %v398, %v405
        %v407 = vsel %vm290, %v283, -inf
        %v408 = vmax.f32 %v400, %v407
        %v409 = vsel %vm290, %v284, -inf
        %v410 = vmax.f32 %v402, %v409
        %v411 = vsel %vm290, %v285, -inf
        %v412 = vmax.f32 %v404, %v411
        %v413 = vsel %vm290, %v286, -inf
        %v414 = vmax.f32 %v406, %v413
        %v415 = vsel %vm290, %v287, -inf
        %v416 = vmax.f32 %v408, %v415
        %v417 = vsel %vm290, %v288, -inf
        %v418 = vmax.f32 %v410, %v417
        %v419 = vsel %vm290, %v289, -inf
        %v420 = vmax.f32 %v412, %v419
        %v421 = vmax.f32 %v414, %v416
        %v422 = vmax.f32 %v418, %v420
        %v423 = vmax.f32 %v421, %v422
        %v424 = vrot.slane %v423, 4
        %v425 = vmax.f32 %v423, %v424
        %v426 = vrot.slane %v425, 2
        %v427 = vmax.f32 %v425, %v426
        %v428 = vrot.slane %v427, 1
        %v429 = vmax.f32 %v427, %v428
        %vm430 = vcmask 1040384
        %v431 = vsel %vm430, %v360, %v429
        %v432 = vld [vmem:[%s1] sm:$0x1]
        %v433 = vlaneseq
        %v434 = vshrl.u32 %v433, 7
        %v435 = vsub.s32 0, %v434
        %v436 = vrot.slane %v432, %v435
        %v437 = vmul.f32 %v431, %v436
        %vm438 = vcmask 254976
        %v439 = vsel %vm438, %v437, 0.0
        %440 = vadd.xlane.f32.xlu0 %v439
        %v441 = vpop.xlane.xlu0 %440
        %v442 = vmax.f32 %v441, 0.0
        %v443 = vld [vmem:[%s2] sm:$0x1]
        %v444 = vlaneseq
        %v445 = vshrl.u32 %v444, 7
        %v446 = vsub.s32 0, %v445
        %v447 = vrot.slane %v443, %v446
        %v448 = vmul.f32 %v442, %v447
        %v449 = vadd.f32 %v448, 0.0
        %v450 = vld [vmem:[%s1 + $0x1] sm:$0x1]
        %v451 = vlaneseq
        %v452 = vshrl.u32 %v451, 7
        %v453 = vsub.s32 0, %v452
        %v454 = vrot.slane %v450, %v453
        %v455 = vmul.f32 %v431, %v454
        %v456 = vsel %vm438, %v455, 0.0
        %457 = vadd.xlane.f32.xlu0 %v456
        %v458 = vpop.xlane.xlu0 %457
        %v459 = vmax.f32 %v458, 0.0
        %v460 = vld [vmem:[%s2 + $0x1] sm:$0x1]
        %v461 = vlaneseq
        %v462 = vshrl.u32 %v461, 7
        %v463 = vsub.s32 0, %v462
        %v464 = vrot.slane %v460, %v463
        %v465 = vmul.f32 %v459, %v464
        %v466 = vadd.f32 %v449, %v465
        %v468 = vrot.slane %v466, 1
        %v470 = vadd.f32 %v466, %v468
        %v471 = vxor.u32 %v470, 2147483648
        %v472 = vmul.f32 %v471, 1.442695
        %v473 = vpow.pop %v472
        %v474 = vadd.f32 %v473, 1.0
        %v475 = vrcp.pop %v474
        %v476 = vmul.f32 1.0, %v475
        %v477 = vlaneseq
        %v478 = vshrl.u32 %v477, 7
        %v479 = vsub.s32 0, %v478
        %v480 = vrot.slane %v476, %v479
        %v481 = vmul.f32 %v258, %v480
        %v482 = vmul.f32 %v259, %v480
        %v483 = vmul.f32 %v260, %v480
        %v484 = vmul.f32 %v261, %v480
        %v485 = vmul.f32 %v262, %v480
        %v486 = vmul.f32 %v263, %v480
        %v487 = vmul.f32 %v264, %v480
        %v488 = vmul.f32 %v265, %v480
        %v489 = vmul.f32 %v266, %v480
        %v490 = vmul.f32 %v267, %v480
        %v491 = vmul.f32 %v268, %v480
        %v492 = vmul.f32 %v269, %v480
        %v493 = vmul.f32 %v270, %v480
        %v494 = vmul.f32 %v271, %v480
        %v495 = vmul.f32 %v272, %v480
        %v496 = vmul.f32 %v273, %v480
        %v497 = vmul.f32 %v274, %v480
        %v498 = vmul.f32 %v275, %v480
        %v499 = vmul.f32 %v276, %v480
        %v500 = vmul.f32 %v277, %v480
        %v501 = vmul.f32 %v278, %v480
        %v502 = vmul.f32 %v279, %v480
        %v503 = vmul.f32 %v280, %v480
        %v504 = vmul.f32 %v281, %v480
        %v505 = vmul.f32 %v282, %v480
        %v506 = vmul.f32 %v283, %v480
        %v507 = vmul.f32 %v284, %v480
        %v508 = vmul.f32 %v285, %v480
        %v509 = vmul.f32 %v286, %v480
        %v510 = vmul.f32 %v287, %v480
        %v511 = vmul.f32 %v288, %v480
        %v512 = vmul.f32 %v289, %v480
        %v513 = vsel %vm290, %v481, 0.0
        %514 = vadd.xlane.f32.xlu0 %v513
        %v515 = vpop.xlane.xlu0 %514
        %v516 = vsel %vm290, %v482, 0.0
        %517 = vadd.xlane.f32.xlu0 %v516
        %v518 = vpop.xlane.xlu0 %517
        %v519 = vsel %vm290, %v483, 0.0
        %520 = vadd.xlane.f32.xlu0 %v519
        %v521 = vpop.xlane.xlu0 %520
        %v522 = vsel %vm290, %v484, 0.0
        %523 = vadd.xlane.f32.xlu0 %v522
        %v524 = vpop.xlane.xlu0 %523
        %v525 = vsel %vm290, %v485, 0.0
        %526 = vadd.xlane.f32.xlu0 %v525
        %v527 = vpop.xlane.xlu0 %526
        %v528 = vsel %vm290, %v486, 0.0
        %529 = vadd.xlane.f32.xlu0 %v528
        %v530 = vpop.xlane.xlu0 %529
        %v531 = vsel %vm290, %v487, 0.0
        %532 = vadd.xlane.f32.xlu0 %v531
        %v533 = vpop.xlane.xlu0 %532
        %v534 = vsel %vm290, %v488, 0.0
        %535 = vadd.xlane.f32.xlu0 %v534
        %v536 = vpop.xlane.xlu0 %535
        %v537 = vsel %vm290, %v489, 0.0
        %538 = vadd.xlane.f32.xlu0 %v537
        %v539 = vpop.xlane.xlu0 %538
        %v540 = vsel %vm290, %v490, 0.0
        %541 = vadd.xlane.f32.xlu0 %v540
        %v542 = vpop.xlane.xlu0 %541
        %v543 = vsel %vm290, %v491, 0.0
        %544 = vadd.xlane.f32.xlu0 %v543
        %v545 = vpop.xlane.xlu0 %544
        %v546 = vsel %vm290, %v492, 0.0
        %547 = vadd.xlane.f32.xlu0 %v546
        %v548 = vpop.xlane.xlu0 %547
        %v549 = vsel %vm290, %v493, 0.0
        %550 = vadd.xlane.f32.xlu0 %v549
        %v551 = vpop.xlane.xlu0 %550
        %v552 = vsel %vm290, %v494, 0.0
        %553 = vadd.xlane.f32.xlu0 %v552
        %v554 = vpop.xlane.xlu0 %553
        %v555 = vsel %vm290, %v495, 0.0
        %556 = vadd.xlane.f32.xlu0 %v555
        %v557 = vpop.xlane.xlu0 %556
        %v558 = vsel %vm290, %v496, 0.0
        %559 = vadd.xlane.f32.xlu0 %v558
        %v560 = vpop.xlane.xlu0 %559
        %v561 = vsel %vm290, %v497, 0.0
        %562 = vadd.xlane.f32.xlu0 %v561
        %v563 = vpop.xlane.xlu0 %562
        %v564 = vsel %vm290, %v498, 0.0
        %565 = vadd.xlane.f32.xlu0 %v564
        %v566 = vpop.xlane.xlu0 %565
        %v567 = vsel %vm290, %v499, 0.0
        %568 = vadd.xlane.f32.xlu0 %v567
        %v569 = vpop.xlane.xlu0 %568
        %v570 = vsel %vm290, %v500, 0.0
        %571 = vadd.xlane.f32.xlu0 %v570
        %v572 = vpop.xlane.xlu0 %571
        %v573 = vsel %vm290, %v501, 0.0
        %574 = vadd.xlane.f32.xlu0 %v573
        %v575 = vpop.xlane.xlu0 %574
        %v576 = vsel %vm290, %v502, 0.0
        %577 = vadd.xlane.f32.xlu0 %v576
        %v578 = vpop.xlane.xlu0 %577
        %v579 = vsel %vm290, %v503, 0.0
        %580 = vadd.xlane.f32.xlu0 %v579
        %v581 = vpop.xlane.xlu0 %580
        %v582 = vsel %vm290, %v504, 0.0
        %583 = vadd.xlane.f32.xlu0 %v582
        %v584 = vpop.xlane.xlu0 %583
        %v585 = vsel %vm290, %v505, 0.0
        %586 = vadd.xlane.f32.xlu0 %v585
        %v587 = vpop.xlane.xlu0 %586
        %v588 = vsel %vm290, %v506, 0.0
        %589 = vadd.xlane.f32.xlu0 %v588
        %v590 = vpop.xlane.xlu0 %589
        %v591 = vsel %vm290, %v507, 0.0
        %592 = vadd.xlane.f32.xlu0 %v591
        %v593 = vpop.xlane.xlu0 %592
        %v594 = vsel %vm290, %v508, 0.0
        %595 = vadd.xlane.f32.xlu0 %v594
        %v596 = vpop.xlane.xlu0 %595
        %v597 = vsel %vm290, %v509, 0.0
        %598 = vadd.xlane.f32.xlu0 %v597
        %v599 = vpop.xlane.xlu0 %598
        %v600 = vsel %vm290, %v510, 0.0
        %601 = vadd.xlane.f32.xlu0 %v600
        %v602 = vpop.xlane.xlu0 %601
        %v603 = vsel %vm290, %v511, 0.0
        %604 = vadd.xlane.f32.xlu0 %v603
        %v605 = vpop.xlane.xlu0 %604
        %v606 = vsel %vm290, %v512, 0.0
        %607 = vadd.xlane.f32.xlu0 %v606
        %v608 = vpop.xlane.xlu0 %607
        %v609 = vrcp.pop 32.0
        %v610 = vmul.f32 %v515, %v609
        %v611 = vmul.f32 %v518, %v609
        %v612 = vmul.f32 %v521, %v609
        %v613 = vmul.f32 %v524, %v609
        %v614 = vmul.f32 %v527, %v609
        %v615 = vmul.f32 %v530, %v609
        %v616 = vmul.f32 %v533, %v609
        %v617 = vmul.f32 %v536, %v609
        %v618 = vmul.f32 %v539, %v609
        %v619 = vmul.f32 %v542, %v609
        %v620 = vmul.f32 %v545, %v609
        %v621 = vmul.f32 %v548, %v609
        %v622 = vmul.f32 %v551, %v609
        %v623 = vmul.f32 %v554, %v609
        %v624 = vmul.f32 %v557, %v609
        %v625 = vmul.f32 %v560, %v609
        %v626 = vmul.f32 %v563, %v609
        %v627 = vmul.f32 %v566, %v609
        %v628 = vmul.f32 %v569, %v609
        %v629 = vmul.f32 %v572, %v609
        %v630 = vmul.f32 %v575, %v609
        %v631 = vmul.f32 %v578, %v609
        %v632 = vmul.f32 %v581, %v609
        %v633 = vmul.f32 %v584, %v609
        %v634 = vmul.f32 %v587, %v609
        %v635 = vmul.f32 %v590, %v609
        %v636 = vmul.f32 %v593, %v609
        %v637 = vmul.f32 %v596, %v609
        %v638 = vmul.f32 %v599, %v609
        %v639 = vmul.f32 %v602, %v609
        %v640 = vmul.f32 %v605, %v609
        %v641 = vmul.f32 %v608, %v609
        %v642 = vsel %vm290, %v481, -inf
        %643 = vmax.xlane.f32.xlu0 %v642
        %v644 = vpop.xlane.xlu0 %643
        %v645 = vsel %vm290, %v482, -inf
        %646 = vmax.xlane.f32.xlu0 %v645
        %v647 = vpop.xlane.xlu0 %646
        %v648 = vsel %vm290, %v483, -inf
        %649 = vmax.xlane.f32.xlu0 %v648
        %v650 = vpop.xlane.xlu0 %649
        %v651 = vsel %vm290, %v484, -inf
        %652 = vmax.xlane.f32.xlu0 %v651
        %v653 = vpop.xlane.xlu0 %652
        %v654 = vsel %vm290, %v485, -inf
        %655 = vmax.xlane.f32.xlu0 %v654
        %v656 = vpop.xlane.xlu0 %655
        %v657 = vsel %vm290, %v486, -inf
        %658 = vmax.xlane.f32.xlu0 %v657
        %v659 = vpop.xlane.xlu0 %658
        %v660 = vsel %vm290, %v487, -inf
        %661 = vmax.xlane.f32.xlu0 %v660
        %v662 = vpop.xlane.xlu0 %661
        %v663 = vsel %vm290, %v488, -inf
        %664 = vmax.xlane.f32.xlu0 %v663
        %v665 = vpop.xlane.xlu0 %664
        %v666 = vsel %vm290, %v489, -inf
        %667 = vmax.xlane.f32.xlu0 %v666
        %v668 = vpop.xlane.xlu0 %667
        %v669 = vsel %vm290, %v490, -inf
        %670 = vmax.xlane.f32.xlu0 %v669
        %v671 = vpop.xlane.xlu0 %670
        %v672 = vsel %vm290, %v491, -inf
        %673 = vmax.xlane.f32.xlu0 %v672
        %v674 = vpop.xlane.xlu0 %673
        %v675 = vsel %vm290, %v492, -inf
        %676 = vmax.xlane.f32.xlu0 %v675
        %v677 = vpop.xlane.xlu0 %676
        %v678 = vsel %vm290, %v493, -inf
        %679 = vmax.xlane.f32.xlu0 %v678
        %v680 = vpop.xlane.xlu0 %679
        %v681 = vsel %vm290, %v494, -inf
        %682 = vmax.xlane.f32.xlu0 %v681
        %v683 = vpop.xlane.xlu0 %682
        %v684 = vsel %vm290, %v495, -inf
        %685 = vmax.xlane.f32.xlu0 %v684
        %v686 = vpop.xlane.xlu0 %685
        %v687 = vsel %vm290, %v496, -inf
        %688 = vmax.xlane.f32.xlu0 %v687
        %v689 = vpop.xlane.xlu0 %688
        %v690 = vsel %vm290, %v497, -inf
        %691 = vmax.xlane.f32.xlu0 %v690
        %v692 = vpop.xlane.xlu0 %691
        %v693 = vsel %vm290, %v498, -inf
        %694 = vmax.xlane.f32.xlu0 %v693
        %v695 = vpop.xlane.xlu0 %694
        %v696 = vsel %vm290, %v499, -inf
        %697 = vmax.xlane.f32.xlu0 %v696
        %v698 = vpop.xlane.xlu0 %697
        %v699 = vsel %vm290, %v500, -inf
        %700 = vmax.xlane.f32.xlu0 %v699
        %v701 = vpop.xlane.xlu0 %700
        %v702 = vsel %vm290, %v501, -inf
        %703 = vmax.xlane.f32.xlu0 %v702
        %v704 = vpop.xlane.xlu0 %703
        %v705 = vsel %vm290, %v502, -inf
        %706 = vmax.xlane.f32.xlu0 %v705
        %v707 = vpop.xlane.xlu0 %706
        %v708 = vsel %vm290, %v503, -inf
        %709 = vmax.xlane.f32.xlu0 %v708
        %v710 = vpop.xlane.xlu0 %709
        %v711 = vsel %vm290, %v504, -inf
        %712 = vmax.xlane.f32.xlu0 %v711
        %v713 = vpop.xlane.xlu0 %712
        %v714 = vsel %vm290, %v505, -inf
        %715 = vmax.xlane.f32.xlu0 %v714
        %v716 = vpop.xlane.xlu0 %715
        %v717 = vsel %vm290, %v506, -inf
        %718 = vmax.xlane.f32.xlu0 %v717
        %v719 = vpop.xlane.xlu0 %718
        %v720 = vsel %vm290, %v507, -inf
        %721 = vmax.xlane.f32.xlu0 %v720
        %v722 = vpop.xlane.xlu0 %721
        %v723 = vsel %vm290, %v508, -inf
        %724 = vmax.xlane.f32.xlu0 %v723
        %v725 = vpop.xlane.xlu0 %724
        %v726 = vsel %vm290, %v509, -inf
        %727 = vmax.xlane.f32.xlu0 %v726
        %v728 = vpop.xlane.xlu0 %727
        %v729 = vsel %vm290, %v510, -inf
        %730 = vmax.xlane.f32.xlu0 %v729
        %v731 = vpop.xlane.xlu0 %730
        %v732 = vsel %vm290, %v511, -inf
        %733 = vmax.xlane.f32.xlu0 %v732
        %v734 = vpop.xlane.xlu0 %733
        %v735 = vsel %vm290, %v512, -inf
        %736 = vmax.xlane.f32.xlu0 %v735
        %v737 = vpop.xlane.xlu0 %736
        %vm738 = vcmask 174080
        %739 = vst.msk [vmem:[#allocation2] sm:$0x7] %vm738, 0.0
        %740 = vst.msk [vmem:[#allocation2 + $0x18] sm:$0x7] %vm738, 0.0
        %741 = vst.msk [vmem:[#allocation2 + $0x13] sm:$0x7] %vm738, 0.0
        %742 = vst.msk [vmem:[#allocation2 + $0x2b] sm:$0x7] %vm738, 0.0
        %vm743 = vcmask 23552
        %744 = vst.msk [vmem:[#allocation2 + $0x3] sm:$0xff] %vm743, 0.0
        %745 = vst.msk [vmem:[#allocation2 + $0xb] sm:$0xff] %vm743, 0.0
        %746 = vst.msk [vmem:[#allocation2 + $0x1b] sm:$0xff] %vm743, 0.0
        %747 = vst.msk [vmem:[#allocation2 + $0x23] sm:$0xff] %vm743, 0.0
        %vm748 = vcmask 179352
        %749 = vst.msk [vmem:[#allocation2 + $0x3] sm:$0xff] %vm748, 0.0
        %750 = vst.msk [vmem:[#allocation2 + $0xb] sm:$0xff] %vm748, 0.0
        %751 = vst.msk [vmem:[#allocation2 + $0x1b] sm:$0xff] %vm748, 0.0
        %752 = vst.msk [vmem:[#allocation2 + $0x23] sm:$0xff] %vm748, 0.0
        %v785 = vlaneseq
        %v786 = vand.u32 %v785, 127
        %v787 = vadd.s32 %v786, 4294967293
        %v788 = vlaneseq
        %v789 = vshrl.u32 %v788, 7
        %v790 = vsub.s32 %v787, %v789
        %v791 = vrot.slane %v610, %v790
        %v792 = vadd.s32 %v786, 4294967285
        %v793 = vlaneseq
        %v794 = vshrl.u32 %v793, 7
        %v795 = vsub.s32 %v792, %v794
        %v796 = vrot.slane %v611, %v795
        %vm797 = vcmask 154712
        %v798 = vsel %vm797, %v796, %v791
        %v799 = vlaneseq
        %v800 = vshrl.u32 %v799, 7
        %v801 = vsub.s32 %v787, %v800
        %v802 = vrot.slane %v612, %v801
        %v803 = vlaneseq
        %v804 = vshrl.u32 %v803, 7
        %v805 = vsub.s32 %v792, %v804
        %v806 = vrot.slane %v613, %v805
        %v807 = vsel %vm797, %v806, %v802
        %v808 = vlaneseq
        %v809 = vshrl.u32 %v808, 7
        %v810 = vsub.s32 %v787, %v809
        %v811 = vrot.slane %v614, %v810
        %v812 = vlaneseq
        %v813 = vshrl.u32 %v812, 7
        %v814 = vsub.s32 %v792, %v813
        %v815 = vrot.slane %v615, %v814
        %v816 = vsel %vm797, %v815, %v811
        %v817 = vlaneseq
        %v818 = vshrl.u32 %v817, 7
        %v819 = vsub.s32 %v787, %v818
        %v820 = vrot.slane %v616, %v819
        %v821 = vlaneseq
        %v822 = vshrl.u32 %v821, 7
        %v823 = vsub.s32 %v792, %v822
        %v824 = vrot.slane %v617, %v823
        %v825 = vsel %vm797, %v824, %v820
        %v826 = vlaneseq
        %v827 = vshrl.u32 %v826, 7
        %v828 = vsub.s32 %v787, %v827
        %v829 = vrot.slane %v618, %v828
        %v830 = vlaneseq
        %v831 = vshrl.u32 %v830, 7
        %v832 = vsub.s32 %v792, %v831
        %v833 = vrot.slane %v619, %v832
        %v834 = vsel %vm797, %v833, %v829
        %v835 = vlaneseq
        %v836 = vshrl.u32 %v835, 7
        %v837 = vsub.s32 %v787, %v836
        %v838 = vrot.slane %v620, %v837
        %v839 = vlaneseq
        %v840 = vshrl.u32 %v839, 7
        %v841 = vsub.s32 %v792, %v840
        %v842 = vrot.slane %v621, %v841
        %v843 = vsel %vm797, %v842, %v838
        %v844 = vlaneseq
        %v845 = vshrl.u32 %v844, 7
        %v846 = vsub.s32 %v787, %v845
        %v847 = vrot.slane %v622, %v846
        %v848 = vlaneseq
        %v849 = vshrl.u32 %v848, 7
        %v850 = vsub.s32 %v792, %v849
        %v851 = vrot.slane %v623, %v850
        %v852 = vsel %vm797, %v851, %v847
        %v853 = vlaneseq
        %v854 = vshrl.u32 %v853, 7
        %v855 = vsub.s32 %v787, %v854
        %v856 = vrot.slane %v624, %v855
        %v857 = vlaneseq
        %v858 = vshrl.u32 %v857, 7
        %v859 = vsub.s32 %v792, %v858
        %v860 = vrot.slane %v625, %v859
        %v861 = vsel %vm797, %v860, %v856
        %v862 = vlaneseq
        %v863 = vshrl.u32 %v862, 7
        %v864 = vsub.s32 %v787, %v863
        %v865 = vrot.slane %v626, %v864
        %v866 = vlaneseq
        %v867 = vshrl.u32 %v866, 7
        %v868 = vsub.s32 %v792, %v867
        %v869 = vrot.slane %v627, %v868
        %v870 = vsel %vm797, %v869, %v865
        %v871 = vlaneseq
        %v872 = vshrl.u32 %v871, 7
        %v873 = vsub.s32 %v787, %v872
        %v874 = vrot.slane %v628, %v873
        %v875 = vlaneseq
        %v876 = vshrl.u32 %v875, 7
        %v877 = vsub.s32 %v792, %v876
        %v878 = vrot.slane %v629, %v877
        %v879 = vsel %vm797, %v878, %v874
        %v880 = vlaneseq
        %v881 = vshrl.u32 %v880, 7
        %v882 = vsub.s32 %v787, %v881
        %v883 = vrot.slane %v630, %v882
        %v884 = vlaneseq
        %v885 = vshrl.u32 %v884, 7
        %v886 = vsub.s32 %v792, %v885
        %v887 = vrot.slane %v631, %v886
        %v888 = vsel %vm797, %v887, %v883
        %v889 = vlaneseq
        %v890 = vshrl.u32 %v889, 7
        %v891 = vsub.s32 %v787, %v890
        %v892 = vrot.slane %v632, %v891
        %v893 = vlaneseq
        %v894 = vshrl.u32 %v893, 7
        %v895 = vsub.s32 %v792, %v894
        %v896 = vrot.slane %v633, %v895
        %v897 = vsel %vm797, %v896, %v892
        %v898 = vlaneseq
        %v899 = vshrl.u32 %v898, 7
        %v900 = vsub.s32 %v787, %v899
        %v901 = vrot.slane %v634, %v900
        %v902 = vlaneseq
        %v903 = vshrl.u32 %v902, 7
        %v904 = vsub.s32 %v792, %v903
        %v905 = vrot.slane %v635, %v904
        %v906 = vsel %vm797, %v905, %v901
        %v907 = vlaneseq
        %v908 = vshrl.u32 %v907, 7
        %v909 = vsub.s32 %v787, %v908
        %v910 = vrot.slane %v636, %v909
        %v911 = vlaneseq
        %v912 = vshrl.u32 %v911, 7
        %v913 = vsub.s32 %v792, %v912
        %v914 = vrot.slane %v637, %v913
        %v915 = vsel %vm797, %v914, %v910
        %v916 = vlaneseq
        %v917 = vshrl.u32 %v916, 7
        %v918 = vsub.s32 %v787, %v917
        %v919 = vrot.slane %v638, %v918
        %v920 = vlaneseq
        %v921 = vshrl.u32 %v920, 7
        %v922 = vsub.s32 %v792, %v921
        %v923 = vrot.slane %v639, %v922
        %v924 = vsel %vm797, %v923, %v919
        %v925 = vlaneseq
        %v926 = vshrl.u32 %v925, 7
        %v927 = vsub.s32 %v787, %v926
        %v928 = vrot.slane %v640, %v927
        %v929 = vlaneseq
        %v930 = vshrl.u32 %v929, 7
        %v931 = vsub.s32 %v792, %v930
        %v932 = vrot.slane %v641, %v931
        %v933 = vsel %vm797, %v932, %v928
        %vm934 = vcmask 1041409
        %v935 = vsel %vm934, %v807, %v798
        %vm936 = vcmask 1042434
        %v937 = vsel %vm936, %v816, %v935
        %vm938 = vcmask 1043459
        %v939 = vsel %vm938, %v825, %v937
        %vm940 = vcmask 1044484
        %v941 = vsel %vm940, %v834, %v939
        %vm942 = vcmask 1045509
        %v943 = vsel %vm942, %v843, %v941
        %vm944 = vcmask 1046534
        %v945 = vsel %vm944, %v852, %v943
        %vm946 = vcmask 1047559
        %v947 = vsel %vm946, %v861, %v945
        %v948 = vsel %vm934, %v879, %v870
        %v949 = vsel %vm936, %v888, %v948
        %v950 = vsel %vm938, %v897, %v949
        %v951 = vsel %vm940, %v906, %v950
        %v952 = vsel %vm942, %v915, %v951
        %v953 = vsel %vm944, %v924, %v952
        %v954 = vsel %vm946, %v933, %v953
        %vm957 = vcmask 154648
        %958 = vst.msk [vmem:[#allocation2 + $0x3] sm:$0xff] %vm957, %v947
        %959 = vst.msk [vmem:[#allocation2 + $0xb] sm:$0xff] %vm957, %v954
        %v992 = vlaneseq
        %v993 = vshrl.u32 %v992, 7
        %v994 = vsub.s32 %v787, %v993
        %v995 = vrot.slane %v644, %v994
        %v996 = vlaneseq
        %v997 = vshrl.u32 %v996, 7
        %v998 = vsub.s32 %v792, %v997
        %v999 = vrot.slane %v647, %v998
        %v1000 = vsel %vm797, %v999, %v995
        %v1001 = vlaneseq
        %v1002 = vshrl.u32 %v1001, 7
        %v1003 = vsub.s32 %v787, %v1002
        %v1004 = vrot.slane %v650, %v1003
        %v1005 = vlaneseq
        %v1006 = vshrl.u32 %v1005, 7
        %v1007 = vsub.s32 %v792, %v1006
        %v1008 = vrot.slane %v653, %v1007
        %v1009 = vsel %vm797, %v1008, %v1004
        %v1010 = vlaneseq
        %v1011 = vshrl.u32 %v1010, 7
        %v1012 = vsub.s32 %v787, %v1011
        %v1013 = vrot.slane %v656, %v1012
        %v1014 = vlaneseq
        %v1015 = vshrl.u32 %v1014, 7
        %v1016 = vsub.s32 %v792, %v1015
        %v1017 = vrot.slane %v659, %v1016
        %v1018 = vsel %vm797, %v1017, %v1013
        %v1019 = vlaneseq
        %v1020 = vshrl.u32 %v1019, 7
        %v1021 = vsub.s32 %v787, %v1020
        %v1022 = vrot.slane %v662, %v1021
        %v1023 = vlaneseq
        %v1024 = vshrl.u32 %v1023, 7
        %v1025 = vsub.s32 %v792, %v1024
        %v1026 = vrot.slane %v665, %v1025
        %v1027 = vsel %vm797, %v1026, %v1022
        %v1028 = vlaneseq
        %v1029 = vshrl.u32 %v1028, 7
        %v1030 = vsub.s32 %v787, %v1029
        %v1031 = vrot.slane %v668, %v1030
        %v1032 = vlaneseq
        %v1033 = vshrl.u32 %v1032, 7
        %v1034 = vsub.s32 %v792, %v1033
        %v1035 = vrot.slane %v671, %v1034
        %v1036 = vsel %vm797, %v1035, %v1031
        %v1037 = vlaneseq
        %v1038 = vshrl.u32 %v1037, 7
        %v1039 = vsub.s32 %v787, %v1038
        %v1040 = vrot.slane %v674, %v1039
        %v1041 = vlaneseq
        %v1042 = vshrl.u32 %v1041, 7
        %v1043 = vsub.s32 %v792, %v1042
        %v1044 = vrot.slane %v677, %v1043
        %v1045 = vsel %vm797, %v1044, %v1040
        %v1046 = vlaneseq
        %v1047 = vshrl.u32 %v1046, 7
        %v1048 = vsub.s32 %v787, %v1047
        %v1049 = vrot.slane %v680, %v1048
        %v1050 = vlaneseq
        %v1051 = vshrl.u32 %v1050, 7
        %v1052 = vsub.s32 %v792, %v1051
        %v1053 = vrot.slane %v683, %v1052
        %v1054 = vsel %vm797, %v1053, %v1049
        %v1055 = vlaneseq
        %v1056 = vshrl.u32 %v1055, 7
        %v1057 = vsub.s32 %v787, %v1056
        %v1058 = vrot.slane %v686, %v1057
        %v1059 = vlaneseq
        %v1060 = vshrl.u32 %v1059, 7
        %v1061 = vsub.s32 %v792, %v1060
        %v1062 = vrot.slane %v689, %v1061
        %v1063 = vsel %vm797, %v1062, %v1058
        %v1064 = vlaneseq
        %v1065 = vshrl.u32 %v1064, 7
        %v1066 = vsub.s32 %v787, %v1065
        %v1067 = vrot.slane %v692, %v1066
        %v1068 = vlaneseq
        %v1069 = vshrl.u32 %v1068, 7
        %v1070 = vsub.s32 %v792, %v1069
        %v1071 = vrot.slane %v695, %v1070
        %v1072 = vsel %vm797, %v1071, %v1067
        %v1073 = vlaneseq
        %v1074 = vshrl.u32 %v1073, 7
        %v1075 = vsub.s32 %v787, %v1074
        %v1076 = vrot.slane %v698, %v1075
        %v1077 = vlaneseq
        %v1078 = vshrl.u32 %v1077, 7
        %v1079 = vsub.s32 %v792, %v1078
        %v1080 = vrot.slane %v701, %v1079
        %v1081 = vsel %vm797, %v1080, %v1076
        %v1082 = vlaneseq
        %v1083 = vshrl.u32 %v1082, 7
        %v1084 = vsub.s32 %v787, %v1083
        %v1085 = vrot.slane %v704, %v1084
        %v1086 = vlaneseq
        %v1087 = vshrl.u32 %v1086, 7
        %v1088 = vsub.s32 %v792, %v1087
        %v1089 = vrot.slane %v707, %v1088
        %v1090 = vsel %vm797, %v1089, %v1085
        %v1091 = vlaneseq
        %v1092 = vshrl.u32 %v1091, 7
        %v1093 = vsub.s32 %v787, %v1092
        %v1094 = vrot.slane %v710, %v1093
        %v1095 = vlaneseq
        %v1096 = vshrl.u32 %v1095, 7
        %v1097 = vsub.s32 %v792, %v1096
        %v1098 = vrot.slane %v713, %v1097
        %v1099 = vsel %vm797, %v1098, %v1094
        %v1100 = vlaneseq
        %v1101 = vshrl.u32 %v1100, 7
        %v1102 = vsub.s32 %v787, %v1101
        %v1103 = vrot.slane %v716, %v1102
        %v1104 = vlaneseq
        %v1105 = vshrl.u32 %v1104, 7
        %v1106 = vsub.s32 %v792, %v1105
        %v1107 = vrot.slane %v719, %v1106
        %v1108 = vsel %vm797, %v1107, %v1103
        %v1109 = vlaneseq
        %v1110 = vshrl.u32 %v1109, 7
        %v1111 = vsub.s32 %v787, %v1110
        %v1112 = vrot.slane %v722, %v1111
        %v1113 = vlaneseq
        %v1114 = vshrl.u32 %v1113, 7
        %v1115 = vsub.s32 %v792, %v1114
        %v1116 = vrot.slane %v725, %v1115
        %v1117 = vsel %vm797, %v1116, %v1112
        %v1118 = vlaneseq
        %v1119 = vshrl.u32 %v1118, 7
        %v1120 = vsub.s32 %v787, %v1119
        %v1121 = vrot.slane %v728, %v1120
        %v1122 = vlaneseq
        %v1123 = vshrl.u32 %v1122, 7
        %v1124 = vsub.s32 %v792, %v1123
        %v1125 = vrot.slane %v731, %v1124
        %v1126 = vsel %vm797, %v1125, %v1121
        %v1127 = vlaneseq
        %v1128 = vshrl.u32 %v1127, 7
        %v1129 = vsub.s32 %v787, %v1128
        %v1130 = vrot.slane %v734, %v1129
        %v1131 = vlaneseq
        %v1132 = vshrl.u32 %v1131, 7
        %v1133 = vsub.s32 %v792, %v1132
        %v1134 = vrot.slane %v737, %v1133
        %v1135 = vsel %vm797, %v1134, %v1130
        %v1136 = vsel %vm934, %v1009, %v1000
        %v1137 = vsel %vm936, %v1018, %v1136
        %v1138 = vsel %vm938, %v1027, %v1137
        %v1139 = vsel %vm940, %v1036, %v1138
        %v1140 = vsel %vm942, %v1045, %v1139
        %v1141 = vsel %vm944, %v1054, %v1140
        %v1142 = vsel %vm946, %v1063, %v1141
        %v1143 = vsel %vm934, %v1081, %v1072
        %v1144 = vsel %vm936, %v1090, %v1143
        %v1145 = vsel %vm938, %v1099, %v1144
        %v1146 = vsel %vm940, %v1108, %v1145
        %v1147 = vsel %vm942, %v1117, %v1146
        %v1148 = vsel %vm944, %v1126, %v1147
        %v1149 = vsel %vm946, %v1135, %v1148
        %s1152 = scalar_lea.vmem [#allocation2], 24
        %1153 = vst.msk [vmem:[%s1152 + $0x3] sm:$0xff] %vm957, %v1142
        %1154 = vst.msk [vmem:[%s1152 + $0xb] sm:$0xff] %vm957, %v1149
        %s1155 = sld [smem:[#allocation3]]
        %v1156 = vstv %s1155
        %v1157 = vld [vmem:[#allocation2] sm:$0xff]
        %v1158 = vld [vmem:[#allocation2 + $0x8] sm:$0xff]
        %s1159 = sld [smem:[#allocation8]]
        %v1160 = vstv %s1159
        %v1161 = vmul.f32 %v1157, %v1160
        %v1162 = vmul.f32 %v1158, %v1160
        %v1163 = vadd.f32 %v1156, %v1161
        %v1164 = vadd.f32 %v1156, %v1162
        %s1165 = sld [smem:[#allocation8 + $0x1]]
        %v1166 = vstv %s1165
        %v1167 = vmul.f32 %v1157, %v1166
        %v1168 = vmul.f32 %v1158, %v1166
        %1171 = vrot.lane.b32.xlu0 %v1167, 127
        %v1172 = vpop.permute.xlu0 %1171
        %1173 = vrot.lane.b32.xlu0 %v1168, 127
        %v1174 = vpop.permute.xlu0 %1173
        %v1177 = vadd.f32 %v1163, %v1172
        %v1178 = vadd.f32 %v1164, %v1174
        %s1179 = sld [smem:[#allocation8 + $0x2]]
        %v1180 = vstv %s1179
        %v1181 = vmul.f32 %v1157, %v1180
        %v1182 = vmul.f32 %v1158, %v1180
        %1185 = vrot.lane.b32.xlu0 %v1181, 126
        %v1186 = vpop.permute.xlu0 %1185
        %1187 = vrot.lane.b32.xlu0 %v1182, 126
        %v1188 = vpop.permute.xlu0 %1187
        %v1191 = vadd.f32 %v1177, %v1186
        %v1192 = vadd.f32 %v1178, %v1188
        %s1193 = sld [smem:[#allocation8 + $0x3]]
        %v1194 = vstv %s1193
        %v1195 = vmul.f32 %v1157, %v1194
        %v1196 = vmul.f32 %v1158, %v1194
        %1199 = vrot.lane.b32.xlu0 %v1195, 125
        %v1200 = vpop.permute.xlu0 %1199
        %1201 = vrot.lane.b32.xlu0 %v1196, 125
        %v1202 = vpop.permute.xlu0 %1201
        %v1205 = vadd.f32 %v1191, %v1200
        %v1206 = vadd.f32 %v1192, %v1202
        %s1207 = sld [smem:[#allocation8 + $0x4]]
        %v1208 = vstv %s1207
        %v1209 = vmul.f32 %v1157, %v1208
        %v1210 = vmul.f32 %v1158, %v1208
        %1213 = vrot.lane.b32.xlu0 %v1209, 124
        %v1214 = vpop.permute.xlu0 %1213
        %1215 = vrot.lane.b32.xlu0 %v1210, 124
        %v1216 = vpop.permute.xlu0 %1215
        %v1219 = vadd.f32 %v1205, %v1214
        %v1220 = vadd.f32 %v1206, %v1216
        %s1221 = sld [smem:[#allocation8 + $0x5]]
        %v1222 = vstv %s1221
        %v1223 = vmul.f32 %v1157, %v1222
        %v1224 = vmul.f32 %v1158, %v1222
        %1227 = vrot.lane.b32.xlu0 %v1223, 123
        %v1228 = vpop.permute.xlu0 %1227
        %1229 = vrot.lane.b32.xlu0 %v1224, 123
        %v1230 = vpop.permute.xlu0 %1229
        %v1233 = vadd.f32 %v1219, %v1228
        %v1234 = vadd.f32 %v1220, %v1230
        %s1235 = sld [smem:[#allocation8 + $0x6]]
        %v1236 = vstv %s1235
        %v1237 = vmul.f32 %v1157, %v1236
        %v1238 = vmul.f32 %v1158, %v1236
        %1241 = vrot.lane.b32.xlu0 %v1237, 122
        %v1242 = vpop.permute.xlu0 %1241
        %1243 = vrot.lane.b32.xlu0 %v1238, 122
        %v1244 = vpop.permute.xlu0 %1243
        %v1247 = vadd.f32 %v1233, %v1242
        %v1248 = vadd.f32 %v1234, %v1244
        %v1249 = vld [vmem:[#allocation2 + $0x1] sm:$0xff]
        %v1250 = vld [vmem:[#allocation2 + $0x9] sm:$0xff]
        %s1251 = sld [smem:[#allocation8 + $0x7]]
        %v1252 = vstv %s1251
        %v1253 = vmul.f32 %v1249, %v1252
        %v1254 = vmul.f32 %v1250, %v1252
        %v1255 = vadd.f32 %v1247, %v1253
        %v1256 = vadd.f32 %v1248, %v1254
        %s1257 = sld [smem:[#allocation8 + $0x8]]
        %v1258 = vstv %s1257
        %v1259 = vmul.f32 %v1249, %v1258
        %v1260 = vmul.f32 %v1250, %v1258
        %1263 = vrot.lane.b32.xlu0 %v1259, 127
        %v1264 = vpop.permute.xlu0 %1263
        %1265 = vrot.lane.b32.xlu0 %v1260, 127
        %v1266 = vpop.permute.xlu0 %1265
        %v1269 = vadd.f32 %v1255, %v1264
        %v1270 = vadd.f32 %v1256, %v1266
        %s1271 = sld [smem:[#allocation8 + $0x9]]
        %v1272 = vstv %s1271
        %v1273 = vmul.f32 %v1249, %v1272
        %v1274 = vmul.f32 %v1250, %v1272
        %1277 = vrot.lane.b32.xlu0 %v1273, 126
        %v1278 = vpop.permute.xlu0 %1277
        %1279 = vrot.lane.b32.xlu0 %v1274, 126
        %v1280 = vpop.permute.xlu0 %1279
        %v1283 = vadd.f32 %v1269, %v1278
        %v1284 = vadd.f32 %v1270, %v1280
        %s1285 = sld [smem:[#allocation8 + $0xa]]
        %v1286 = vstv %s1285
        %v1287 = vmul.f32 %v1249, %v1286
        %v1288 = vmul.f32 %v1250, %v1286
        %1291 = vrot.lane.b32.xlu0 %v1287, 125
        %v1292 = vpop.permute.xlu0 %1291
        %1293 = vrot.lane.b32.xlu0 %v1288, 125
        %v1294 = vpop.permute.xlu0 %1293
        %v1297 = vadd.f32 %v1283, %v1292
        %v1298 = vadd.f32 %v1284, %v1294
        %s1299 = sld [smem:[#allocation8 + $0xb]]
        %v1300 = vstv %s1299
        %v1301 = vmul.f32 %v1249, %v1300
        %v1302 = vmul.f32 %v1250, %v1300
        %1305 = vrot.lane.b32.xlu0 %v1301, 124
        %v1306 = vpop.permute.xlu0 %1305
        %1307 = vrot.lane.b32.xlu0 %v1302, 124
        %v1308 = vpop.permute.xlu0 %1307
        %v1311 = vadd.f32 %v1297, %v1306
        %v1312 = vadd.f32 %v1298, %v1308
        %s1313 = sld [smem:[#allocation8 + $0xc]]
        %v1314 = vstv %s1313
        %v1315 = vmul.f32 %v1249, %v1314
        %v1316 = vmul.f32 %v1250, %v1314
        %1319 = vrot.lane.b32.xlu0 %v1315, 123
        %v1320 = vpop.permute.xlu0 %1319
        %1321 = vrot.lane.b32.xlu0 %v1316, 123
        %v1322 = vpop.permute.xlu0 %1321
        %v1325 = vadd.f32 %v1311, %v1320
        %v1326 = vadd.f32 %v1312, %v1322
        %s1327 = sld [smem:[#allocation8 + $0xd]]
        %v1328 = vstv %s1327
        %v1329 = vmul.f32 %v1249, %v1328
        %v1330 = vmul.f32 %v1250, %v1328
        %1333 = vrot.lane.b32.xlu0 %v1329, 122
        %v1334 = vpop.permute.xlu0 %1333
        %1335 = vrot.lane.b32.xlu0 %v1330, 122
        %v1336 = vpop.permute.xlu0 %1335
        %v1339 = vadd.f32 %v1325, %v1334
        %v1340 = vadd.f32 %v1326, %v1336
        %v1341 = vld [vmem:[#allocation2 + $0x2] sm:$0xff]
        %v1342 = vld [vmem:[#allocation2 + $0xa] sm:$0xff]
        %s1343 = sld [smem:[#allocation8 + $0xe]]
        %v1344 = vstv %s1343
        %v1345 = vmul.f32 %v1341, %v1344
        %v1346 = vmul.f32 %v1342, %v1344
        %v1347 = vadd.f32 %v1339, %v1345
        %v1348 = vadd.f32 %v1340, %v1346
        %s1349 = sld [smem:[#allocation8 + $0xf]]
        %v1350 = vstv %s1349
        %v1351 = vmul.f32 %v1341, %v1350
        %v1352 = vmul.f32 %v1342, %v1350
        %1355 = vrot.lane.b32.xlu0 %v1351, 127
        %v1356 = vpop.permute.xlu0 %1355
        %1357 = vrot.lane.b32.xlu0 %v1352, 127
        %v1358 = vpop.permute.xlu0 %1357
        %v1361 = vadd.f32 %v1347, %v1356
        %v1362 = vadd.f32 %v1348, %v1358
        %s1363 = sld [smem:[#allocation8 + $0x10]]
        %v1364 = vstv %s1363
        %v1365 = vmul.f32 %v1341, %v1364
        %v1366 = vmul.f32 %v1342, %v1364
        %1369 = vrot.lane.b32.xlu0 %v1365, 126
        %v1370 = vpop.permute.xlu0 %1369
        %1371 = vrot.lane.b32.xlu0 %v1366, 126
        %v1372 = vpop.permute.xlu0 %1371
        %v1375 = vadd.f32 %v1361, %v1370
        %v1376 = vadd.f32 %v1362, %v1372
        %s1377 = sld [smem:[#allocation8 + $0x11]]
        %v1378 = vstv %s1377
        %v1379 = vmul.f32 %v1341, %v1378
        %v1380 = vmul.f32 %v1342, %v1378
        %1383 = vrot.lane.b32.xlu0 %v1379, 125
        %v1384 = vpop.permute.xlu0 %1383
        %1385 = vrot.lane.b32.xlu0 %v1380, 125
        %v1386 = vpop.permute.xlu0 %1385
        %v1389 = vadd.f32 %v1375, %v1384
        %v1390 = vadd.f32 %v1376, %v1386
        %s1391 = sld [smem:[#allocation8 + $0x12]]
        %v1392 = vstv %s1391
        %v1393 = vmul.f32 %v1341, %v1392
        %v1394 = vmul.f32 %v1342, %v1392
        %1397 = vrot.lane.b32.xlu0 %v1393, 124
        %v1398 = vpop.permute.xlu0 %1397
        %1399 = vrot.lane.b32.xlu0 %v1394, 124
        %v1400 = vpop.permute.xlu0 %1399
        %v1403 = vadd.f32 %v1389, %v1398
        %v1404 = vadd.f32 %v1390, %v1400
        %s1405 = sld [smem:[#allocation8 + $0x13]]
        %v1406 = vstv %s1405
        %v1407 = vmul.f32 %v1341, %v1406
        %v1408 = vmul.f32 %v1342, %v1406
        %1411 = vrot.lane.b32.xlu0 %v1407, 123
        %v1412 = vpop.permute.xlu0 %1411
        %1413 = vrot.lane.b32.xlu0 %v1408, 123
        %v1414 = vpop.permute.xlu0 %1413
        %v1417 = vadd.f32 %v1403, %v1412
        %v1418 = vadd.f32 %v1404, %v1414
        %s1419 = sld [smem:[#allocation8 + $0x14]]
        %v1420 = vstv %s1419
        %v1421 = vmul.f32 %v1341, %v1420
        %v1422 = vmul.f32 %v1342, %v1420
        %1425 = vrot.lane.b32.xlu0 %v1421, 122
        %v1426 = vpop.permute.xlu0 %1425
        %1427 = vrot.lane.b32.xlu0 %v1422, 122
        %v1428 = vpop.permute.xlu0 %1427
        %v1431 = vadd.f32 %v1417, %v1426
        %v1432 = vadd.f32 %v1418, %v1428
        %v1433 = vld [vmem:[#allocation2 + $0x3] sm:$0xff]
        %v1434 = vld [vmem:[#allocation2 + $0xb] sm:$0xff]
        %s1435 = sld [smem:[#allocation8 + $0x15]]
        %v1436 = vstv %s1435
        %v1437 = vmul.f32 %v1433, %v1436
        %v1438 = vmul.f32 %v1434, %v1436
        %v1439 = vadd.f32 %v1431, %v1437
        %v1440 = vadd.f32 %v1432, %v1438
        %s1441 = sld [smem:[#allocation8 + $0x16]]
        %v1442 = vstv %s1441
        %v1443 = vmul.f32 %v1433, %v1442
        %v1444 = vmul.f32 %v1434, %v1442
        %1447 = vrot.lane.b32.xlu0 %v1443, 127
        %v1448 = vpop.permute.xlu0 %1447
        %1449 = vrot.lane.b32.xlu0 %v1444, 127
        %v1450 = vpop.permute.xlu0 %1449
        %v1453 = vadd.f32 %v1439, %v1448
        %v1454 = vadd.f32 %v1440, %v1450
        %s1455 = sld [smem:[#allocation8 + $0x17]]
        %v1456 = vstv %s1455
        %v1457 = vmul.f32 %v1433, %v1456
        %v1458 = vmul.f32 %v1434, %v1456
        %1461 = vrot.lane.b32.xlu0 %v1457, 126
        %v1462 = vpop.permute.xlu0 %1461
        %1463 = vrot.lane.b32.xlu0 %v1458, 126
        %v1464 = vpop.permute.xlu0 %1463
        %v1467 = vadd.f32 %v1453, %v1462
        %v1468 = vadd.f32 %v1454, %v1464
        %s1469 = sld [smem:[#allocation8 + $0x18]]
        %v1470 = vstv %s1469
        %v1471 = vmul.f32 %v1433, %v1470
        %v1472 = vmul.f32 %v1434, %v1470
        %1475 = vrot.lane.b32.xlu0 %v1471, 125
        %v1476 = vpop.permute.xlu0 %1475
        %1477 = vrot.lane.b32.xlu0 %v1472, 125
        %v1478 = vpop.permute.xlu0 %1477
        %v1481 = vadd.f32 %v1467, %v1476
        %v1482 = vadd.f32 %v1468, %v1478
        %s1483 = sld [smem:[#allocation8 + $0x19]]
        %v1484 = vstv %s1483
        %v1485 = vmul.f32 %v1433, %v1484
        %v1486 = vmul.f32 %v1434, %v1484
        %1489 = vrot.lane.b32.xlu0 %v1485, 124
        %v1490 = vpop.permute.xlu0 %1489
        %1491 = vrot.lane.b32.xlu0 %v1486, 124
        %v1492 = vpop.permute.xlu0 %1491
        %v1495 = vadd.f32 %v1481, %v1490
        %v1496 = vadd.f32 %v1482, %v1492
        %s1497 = sld [smem:[#allocation8 + $0x1a]]
        %v1498 = vstv %s1497
        %v1499 = vmul.f32 %v1433, %v1498
        %v1500 = vmul.f32 %v1434, %v1498
        %1503 = vrot.lane.b32.xlu0 %v1499, 123
        %v1504 = vpop.permute.xlu0 %1503
        %1505 = vrot.lane.b32.xlu0 %v1500, 123
        %v1506 = vpop.permute.xlu0 %1505
        %v1509 = vadd.f32 %v1495, %v1504
        %v1510 = vadd.f32 %v1496, %v1506
        %s1511 = sld [smem:[#allocation8 + $0x1b]]
        %v1512 = vstv %s1511
        %v1513 = vmul.f32 %v1433, %v1512
        %v1514 = vmul.f32 %v1434, %v1512
        %1517 = vrot.lane.b32.xlu0 %v1513, 122
        %v1518 = vpop.permute.xlu0 %1517
        %1519 = vrot.lane.b32.xlu0 %v1514, 122
        %v1520 = vpop.permute.xlu0 %1519
        %v1523 = vadd.f32 %v1509, %v1518
        %v1524 = vadd.f32 %v1510, %v1520
        %v1525 = vld [vmem:[#allocation2 + $0x4] sm:$0xff]
        %v1526 = vld [vmem:[#allocation2 + $0xc] sm:$0xff]
        %s1527 = sld [smem:[#allocation8 + $0x1c]]
        %v1528 = vstv %s1527
        %v1529 = vmul.f32 %v1525, %v1528
        %v1530 = vmul.f32 %v1526, %v1528
        %v1531 = vadd.f32 %v1523, %v1529
        %v1532 = vadd.f32 %v1524, %v1530
        %s1533 = sld [smem:[#allocation8 + $0x1d]]
        %v1534 = vstv %s1533
        %v1535 = vmul.f32 %v1525, %v1534
        %v1536 = vmul.f32 %v1526, %v1534
        %1539 = vrot.lane.b32.xlu0 %v1535, 127
        %v1540 = vpop.permute.xlu0 %1539
        %1541 = vrot.lane.b32.xlu0 %v1536, 127
        %v1542 = vpop.permute.xlu0 %1541
        %v1545 = vadd.f32 %v1531, %v1540
        %v1546 = vadd.f32 %v1532, %v1542
        %s1547 = sld [smem:[#allocation8 + $0x1e]]
        %v1548 = vstv %s1547
        %v1549 = vmul.f32 %v1525, %v1548
        %v1550 = vmul.f32 %v1526, %v1548
        %1553 = vrot.lane.b32.xlu0 %v1549, 126
        %v1554 = vpop.permute.xlu0 %1553
        %1555 = vrot.lane.b32.xlu0 %v1550, 126
        %v1556 = vpop.permute.xlu0 %1555
        %v1559 = vadd.f32 %v1545, %v1554
        %v1560 = vadd.f32 %v1546, %v1556
        %s1561 = sld [smem:[#allocation8 + $0x1f]]
        %v1562 = vstv %s1561
        %v1563 = vmul.f32 %v1525, %v1562
        %v1564 = vmul.f32 %v1526, %v1562
        %1567 = vrot.lane.b32.xlu0 %v1563, 125
        %v1568 = vpop.permute.xlu0 %1567
        %1569 = vrot.lane.b32.xlu0 %v1564, 125
        %v1570 = vpop.permute.xlu0 %1569
        %v1573 = vadd.f32 %v1559, %v1568
        %v1574 = vadd.f32 %v1560, %v1570
        %s1575 = sld [smem:[#allocation8 + $0x20]]
        %v1576 = vstv %s1575
        %v1577 = vmul.f32 %v1525, %v1576
        %v1578 = vmul.f32 %v1526, %v1576
        %1581 = vrot.lane.b32.xlu0 %v1577, 124
        %v1582 = vpop.permute.xlu0 %1581
        %1583 = vrot.lane.b32.xlu0 %v1578, 124
        %v1584 = vpop.permute.xlu0 %1583
        %v1587 = vadd.f32 %v1573, %v1582
        %v1588 = vadd.f32 %v1574, %v1584
        %s1589 = sld [smem:[#allocation8 + $0x21]]
        %v1590 = vstv %s1589
        %v1591 = vmul.f32 %v1525, %v1590
        %v1592 = vmul.f32 %v1526, %v1590
        %1595 = vrot.lane.b32.xlu0 %v1591, 123
        %v1596 = vpop.permute.xlu0 %1595
        %1597 = vrot.lane.b32.xlu0 %v1592, 123
        %v1598 = vpop.permute.xlu0 %1597
        %v1601 = vadd.f32 %v1587, %v1596
        %v1602 = vadd.f32 %v1588, %v1598
        %s1603 = sld [smem:[#allocation8 + $0x22]]
        %v1604 = vstv %s1603
        %v1605 = vmul.f32 %v1525, %v1604
        %v1606 = vmul.f32 %v1526, %v1604
        %1609 = vrot.lane.b32.xlu0 %v1605, 122
        %v1610 = vpop.permute.xlu0 %1609
        %1611 = vrot.lane.b32.xlu0 %v1606, 122
        %v1612 = vpop.permute.xlu0 %1611
        %v1615 = vadd.f32 %v1601, %v1610
        %v1616 = vadd.f32 %v1602, %v1612
        %v1617 = vld [vmem:[#allocation2 + $0x5] sm:$0xff]
        %v1618 = vld [vmem:[#allocation2 + $0xd] sm:$0xff]
        %s1619 = sld [smem:[#allocation8 + $0x23]]
        %v1620 = vstv %s1619
        %v1621 = vmul.f32 %v1617, %v1620
        %v1622 = vmul.f32 %v1618, %v1620
        %v1623 = vadd.f32 %v1615, %v1621
        %v1624 = vadd.f32 %v1616, %v1622
        %s1625 = sld [smem:[#allocation8 + $0x24]]
        %v1626 = vstv %s1625
        %v1627 = vmul.f32 %v1617, %v1626
        %v1628 = vmul.f32 %v1618, %v1626
        %1631 = vrot.lane.b32.xlu0 %v1627, 127
        %v1632 = vpop.permute.xlu0 %1631
        %1633 = vrot.lane.b32.xlu0 %v1628, 127
        %v1634 = vpop.permute.xlu0 %1633
        %v1637 = vadd.f32 %v1623, %v1632
        %v1638 = vadd.f32 %v1624, %v1634
        %s1639 = sld [smem:[#allocation8 + $0x25]]
        %v1640 = vstv %s1639
        %v1641 = vmul.f32 %v1617, %v1640
        %v1642 = vmul.f32 %v1618, %v1640
        %1645 = vrot.lane.b32.xlu0 %v1641, 126
        %v1646 = vpop.permute.xlu0 %1645
        %1647 = vrot.lane.b32.xlu0 %v1642, 126
        %v1648 = vpop.permute.xlu0 %1647
        %v1651 = vadd.f32 %v1637, %v1646
        %v1652 = vadd.f32 %v1638, %v1648
        %s1653 = sld [smem:[#allocation8 + $0x26]]
        %v1654 = vstv %s1653
        %v1655 = vmul.f32 %v1617, %v1654
        %v1656 = vmul.f32 %v1618, %v1654
        %1659 = vrot.lane.b32.xlu0 %v1655, 125
        %v1660 = vpop.permute.xlu0 %1659
        %1661 = vrot.lane.b32.xlu0 %v1656, 125
        %v1662 = vpop.permute.xlu0 %1661
        %v1665 = vadd.f32 %v1651, %v1660
        %v1666 = vadd.f32 %v1652, %v1662
        %s1667 = sld [smem:[#allocation8 + $0x27]]
        %v1668 = vstv %s1667
        %v1669 = vmul.f32 %v1617, %v1668
        %v1670 = vmul.f32 %v1618, %v1668
        %1673 = vrot.lane.b32.xlu0 %v1669, 124
        %v1674 = vpop.permute.xlu0 %1673
        %1675 = vrot.lane.b32.xlu0 %v1670, 124
        %v1676 = vpop.permute.xlu0 %1675
        %v1679 = vadd.f32 %v1665, %v1674
        %v1680 = vadd.f32 %v1666, %v1676
        %s1681 = sld [smem:[#allocation8 + $0x28]]
        %v1682 = vstv %s1681
        %v1683 = vmul.f32 %v1617, %v1682
        %v1684 = vmul.f32 %v1618, %v1682
        %1687 = vrot.lane.b32.xlu0 %v1683, 123
        %v1688 = vpop.permute.xlu0 %1687
        %1689 = vrot.lane.b32.xlu0 %v1684, 123
        %v1690 = vpop.permute.xlu0 %1689
        %v1693 = vadd.f32 %v1679, %v1688
        %v1694 = vadd.f32 %v1680, %v1690
        %s1695 = sld [smem:[#allocation8 + $0x29]]
        %v1696 = vstv %s1695
        %v1697 = vmul.f32 %v1617, %v1696
        %v1698 = vmul.f32 %v1618, %v1696
        %1701 = vrot.lane.b32.xlu0 %v1697, 122
        %v1702 = vpop.permute.xlu0 %1701
        %1703 = vrot.lane.b32.xlu0 %v1698, 122
        %v1704 = vpop.permute.xlu0 %1703
        %v1707 = vadd.f32 %v1693, %v1702
        %v1708 = vadd.f32 %v1694, %v1704
        %v1709 = vld [vmem:[#allocation2 + $0x6] sm:$0xff]
        %v1710 = vld [vmem:[#allocation2 + $0xe] sm:$0xff]
        %s1711 = sld [smem:[#allocation8 + $0x2a]]
        %v1712 = vstv %s1711
        %v1713 = vmul.f32 %v1709, %v1712
        %v1714 = vmul.f32 %v1710, %v1712
        %v1715 = vadd.f32 %v1707, %v1713
        %v1716 = vadd.f32 %v1708, %v1714
        %s1717 = sld [smem:[#allocation8 + $0x2b]]
        %v1718 = vstv %s1717
        %v1719 = vmul.f32 %v1709, %v1718
        %v1720 = vmul.f32 %v1710, %v1718
        %1723 = vrot.lane.b32.xlu0 %v1719, 127
        %v1724 = vpop.permute.xlu0 %1723
        %1725 = vrot.lane.b32.xlu0 %v1720, 127
        %v1726 = vpop.permute.xlu0 %1725
        %v1729 = vadd.f32 %v1715, %v1724
        %v1730 = vadd.f32 %v1716, %v1726
        %s1731 = sld [smem:[#allocation8 + $0x2c]]
        %v1732 = vstv %s1731
        %v1733 = vmul.f32 %v1709, %v1732
        %v1734 = vmul.f32 %v1710, %v1732
        %1737 = vrot.lane.b32.xlu0 %v1733, 126
        %v1738 = vpop.permute.xlu0 %1737
        %1739 = vrot.lane.b32.xlu0 %v1734, 126
        %v1740 = vpop.permute.xlu0 %1739
        %v1743 = vadd.f32 %v1729, %v1738
        %v1744 = vadd.f32 %v1730, %v1740
        %s1745 = sld [smem:[#allocation8 + $0x2d]]
        %v1746 = vstv %s1745
        %v1747 = vmul.f32 %v1709, %v1746
        %v1748 = vmul.f32 %v1710, %v1746
        %1751 = vrot.lane.b32.xlu0 %v1747, 125
        %v1752 = vpop.permute.xlu0 %1751
        %1753 = vrot.lane.b32.xlu0 %v1748, 125
        %v1754 = vpop.permute.xlu0 %1753
        %v1757 = vadd.f32 %v1743, %v1752
        %v1758 = vadd.f32 %v1744, %v1754
        %s1759 = sld [smem:[#allocation8 + $0x2e]]
        %v1760 = vstv %s1759
        %v1761 = vmul.f32 %v1709, %v1760
        %v1762 = vmul.f32 %v1710, %v1760
        %1765 = vrot.lane.b32.xlu0 %v1761, 124
        %v1766 = vpop.permute.xlu0 %1765
        %1767 = vrot.lane.b32.xlu0 %v1762, 124
        %v1768 = vpop.permute.xlu0 %1767
        %v1771 = vadd.f32 %v1757, %v1766
        %v1772 = vadd.f32 %v1758, %v1768
        %s1773 = sld [smem:[#allocation8 + $0x2f]]
        %v1774 = vstv %s1773
        %v1775 = vmul.f32 %v1709, %v1774
        %v1776 = vmul.f32 %v1710, %v1774
        %1779 = vrot.lane.b32.xlu0 %v1775, 123
        %v1780 = vpop.permute.xlu0 %1779
        %1781 = vrot.lane.b32.xlu0 %v1776, 123
        %v1782 = vpop.permute.xlu0 %1781
        %v1785 = vadd.f32 %v1771, %v1780
        %v1786 = vadd.f32 %v1772, %v1782
        %s1787 = sld [smem:[#allocation8 + $0x30]]
        %v1788 = vstv %s1787
        %v1789 = vmul.f32 %v1709, %v1788
        %v1790 = vmul.f32 %v1710, %v1788
        %1793 = vrot.lane.b32.xlu0 %v1789, 122
        %v1794 = vpop.permute.xlu0 %1793
        %1795 = vrot.lane.b32.xlu0 %v1790, 122
        %v1796 = vpop.permute.xlu0 %1795
        %v1799 = vadd.f32 %v1785, %v1794
        %v1800 = vadd.f32 %v1786, %v1796
        %v1801 = vld [vmem:[%s1152] sm:$0xff]
        %v1802 = vld [vmem:[%s1152 + $0x8] sm:$0xff]
        %s1803 = sld [smem:[#allocation8 + $0x31]]
        %v1804 = vstv %s1803
        %v1805 = vmul.f32 %v1801, %v1804
        %v1806 = vmul.f32 %v1802, %v1804
        %v1807 = vadd.f32 %v1799, %v1805
        %v1808 = vadd.f32 %v1800, %v1806
        %s1809 = sld [smem:[#allocation8 + $0x32]]
        %v1810 = vstv %s1809
        %v1811 = vmul.f32 %v1801, %v1810
        %v1812 = vmul.f32 %v1802, %v1810
        %1815 = vrot.lane.b32.xlu0 %v1811, 127
        %v1816 = vpop.permute.xlu0 %1815
        %1817 = vrot.lane.b32.xlu0 %v1812, 127
        %v1818 = vpop.permute.xlu0 %1817
        %v1821 = vadd.f32 %v1807, %v1816
        %v1822 = vadd.f32 %v1808, %v1818
        %s1823 = sld [smem:[#allocation8 + $0x33]]
        %v1824 = vstv %s1823
        %v1825 = vmul.f32 %v1801, %v1824
        %v1826 = vmul.f32 %v1802, %v1824
        %1829 = vrot.lane.b32.xlu0 %v1825, 126
        %v1830 = vpop.permute.xlu0 %1829
        %1831 = vrot.lane.b32.xlu0 %v1826, 126
        %v1832 = vpop.permute.xlu0 %1831
        %v1835 = vadd.f32 %v1821, %v1830
        %v1836 = vadd.f32 %v1822, %v1832
        %s1837 = sld [smem:[#allocation8 + $0x34]]
        %v1838 = vstv %s1837
        %v1839 = vmul.f32 %v1801, %v1838
        %v1840 = vmul.f32 %v1802, %v1838
        %1843 = vrot.lane.b32.xlu0 %v1839, 125
        %v1844 = vpop.permute.xlu0 %1843
        %1845 = vrot.lane.b32.xlu0 %v1840, 125
        %v1846 = vpop.permute.xlu0 %1845
        %v1849 = vadd.f32 %v1835, %v1844
        %v1850 = vadd.f32 %v1836, %v1846
        %s1851 = sld [smem:[#allocation8 + $0x35]]
        %v1852 = vstv %s1851
        %v1853 = vmul.f32 %v1801, %v1852
        %v1854 = vmul.f32 %v1802, %v1852
        %1857 = vrot.lane.b32.xlu0 %v1853, 124
        %v1858 = vpop.permute.xlu0 %1857
        %1859 = vrot.lane.b32.xlu0 %v1854, 124
        %v1860 = vpop.permute.xlu0 %1859
        %v1863 = vadd.f32 %v1849, %v1858
        %v1864 = vadd.f32 %v1850, %v1860
        %s1865 = sld [smem:[#allocation8 + $0x36]]
        %v1866 = vstv %s1865
        %v1867 = vmul.f32 %v1801, %v1866
        %v1868 = vmul.f32 %v1802, %v1866
        %1871 = vrot.lane.b32.xlu0 %v1867, 123
        %v1872 = vpop.permute.xlu0 %1871
        %1873 = vrot.lane.b32.xlu0 %v1868, 123
        %v1874 = vpop.permute.xlu0 %1873
        %v1877 = vadd.f32 %v1863, %v1872
        %v1878 = vadd.f32 %v1864, %v1874
        %s1879 = sld [smem:[#allocation8 + $0x37]]
        %v1880 = vstv %s1879
        %v1881 = vmul.f32 %v1801, %v1880
        %v1882 = vmul.f32 %v1802, %v1880
        %1885 = vrot.lane.b32.xlu0 %v1881, 122
        %v1886 = vpop.permute.xlu0 %1885
        %1887 = vrot.lane.b32.xlu0 %v1882, 122
        %v1888 = vpop.permute.xlu0 %1887
        %v1891 = vadd.f32 %v1877, %v1886
        %v1892 = vadd.f32 %v1878, %v1888
        %v1893 = vld [vmem:[%s1152 + $0x1] sm:$0xff]
        %v1894 = vld [vmem:[%s1152 + $0x9] sm:$0xff]
        %s1895 = sld [smem:[#allocation8 + $0x38]]
        %v1896 = vstv %s1895
        %v1897 = vmul.f32 %v1893, %v1896
        %v1898 = vmul.f32 %v1894, %v1896
        %v1899 = vadd.f32 %v1891, %v1897
        %v1900 = vadd.f32 %v1892, %v1898
        %s1901 = sld [smem:[#allocation8 + $0x39]]
        %v1902 = vstv %s1901
        %v1903 = vmul.f32 %v1893, %v1902
        %v1904 = vmul.f32 %v1894, %v1902
        %1907 = vrot.lane.b32.xlu0 %v1903, 127
        %v1908 = vpop.permute.xlu0 %1907
        %1909 = vrot.lane.b32.xlu0 %v1904, 127
        %v1910 = vpop.permute.xlu0 %1909
        %v1913 = vadd.f32 %v1899, %v1908
        %v1914 = vadd.f32 %v1900, %v1910
        %s1915 = sld [smem:[#allocation8 + $0x3a]]
        %v1916 = vstv %s1915
        %v1917 = vmul.f32 %v1893, %v1916
        %v1918 = vmul.f32 %v1894, %v1916
        %1921 = vrot.lane.b32.xlu0 %v1917, 126
        %v1922 = vpop.permute.xlu0 %1921
        %1923 = vrot.lane.b32.xlu0 %v1918, 126
        %v1924 = vpop.permute.xlu0 %1923
        %v1927 = vadd.f32 %v1913, %v1922
        %v1928 = vadd.f32 %v1914, %v1924
        %s1929 = sld [smem:[#allocation8 + $0x3b]]
        %v1930 = vstv %s1929
        %v1931 = vmul.f32 %v1893, %v1930
        %v1932 = vmul.f32 %v1894, %v1930
        %1935 = vrot.lane.b32.xlu0 %v1931, 125
        %v1936 = vpop.permute.xlu0 %1935
        %1937 = vrot.lane.b32.xlu0 %v1932, 125
        %v1938 = vpop.permute.xlu0 %1937
        %v1941 = vadd.f32 %v1927, %v1936
        %v1942 = vadd.f32 %v1928, %v1938
        %s1943 = sld [smem:[#allocation8 + $0x3c]]
        %v1944 = vstv %s1943
        %v1945 = vmul.f32 %v1893, %v1944
        %v1946 = vmul.f32 %v1894, %v1944
        %1949 = vrot.lane.b32.xlu0 %v1945, 124
        %v1950 = vpop.permute.xlu0 %1949
        %1951 = vrot.lane.b32.xlu0 %v1946, 124
        %v1952 = vpop.permute.xlu0 %1951
        %v1955 = vadd.f32 %v1941, %v1950
        %v1956 = vadd.f32 %v1942, %v1952
        %s1957 = sld [smem:[#allocation8 + $0x3d]]
        %v1958 = vstv %s1957
        %v1959 = vmul.f32 %v1893, %v1958
        %v1960 = vmul.f32 %v1894, %v1958
        %1963 = vrot.lane.b32.xlu0 %v1959, 123
        %v1964 = vpop.permute.xlu0 %1963
        %1965 = vrot.lane.b32.xlu0 %v1960, 123
        %v1966 = vpop.permute.xlu0 %1965
        %v1969 = vadd.f32 %v1955, %v1964
        %v1970 = vadd.f32 %v1956, %v1966
        %s1971 = sld [smem:[#allocation8 + $0x3e]]
        %v1972 = vstv %s1971
        %v1973 = vmul.f32 %v1893, %v1972
        %v1974 = vmul.f32 %v1894, %v1972
        %1977 = vrot.lane.b32.xlu0 %v1973, 122
        %v1978 = vpop.permute.xlu0 %1977
        %1979 = vrot.lane.b32.xlu0 %v1974, 122
        %v1980 = vpop.permute.xlu0 %1979
        %v1983 = vadd.f32 %v1969, %v1978
        %v1984 = vadd.f32 %v1970, %v1980
        %v1985 = vld [vmem:[%s1152 + $0x2] sm:$0xff]
        %v1986 = vld [vmem:[%s1152 + $0xa] sm:$0xff]
        %s1987 = sld [smem:[#allocation8 + $0x3f]]
        %v1988 = vstv %s1987
        %v1989 = vmul.f32 %v1985, %v1988
        %v1990 = vmul.f32 %v1986, %v1988
        %v1991 = vadd.f32 %v1983, %v1989
        %v1992 = vadd.f32 %v1984, %v1990
        %s1993 = sld [smem:[#allocation8 + $0x40]]
        %v1994 = vstv %s1993
        %v1995 = vmul.f32 %v1985, %v1994
        %v1996 = vmul.f32 %v1986, %v1994
        %1999 = vrot.lane.b32.xlu0 %v1995, 127
        %v2000 = vpop.permute.xlu0 %1999
        %2001 = vrot.lane.b32.xlu0 %v1996, 127
        %v2002 = vpop.permute.xlu0 %2001
        %v2005 = vadd.f32 %v1991, %v2000
        %v2006 = vadd.f32 %v1992, %v2002
        %s2007 = sld [smem:[#allocation8 + $0x41]]
        %v2008 = vstv %s2007
        %v2009 = vmul.f32 %v1985, %v2008
        %v2010 = vmul.f32 %v1986, %v2008
        %2013 = vrot.lane.b32.xlu0 %v2009, 126
        %v2014 = vpop.permute.xlu0 %2013
        %2015 = vrot.lane.b32.xlu0 %v2010, 126
        %v2016 = vpop.permute.xlu0 %2015
        %v2019 = vadd.f32 %v2005, %v2014
        %v2020 = vadd.f32 %v2006, %v2016
        %s2021 = sld [smem:[#allocation8 + $0x42]]
        %v2022 = vstv %s2021
        %v2023 = vmul.f32 %v1985, %v2022
        %v2024 = vmul.f32 %v1986, %v2022
        %2027 = vrot.lane.b32.xlu0 %v2023, 125
        %v2028 = vpop.permute.xlu0 %2027
        %2029 = vrot.lane.b32.xlu0 %v2024, 125
        %v2030 = vpop.permute.xlu0 %2029
        %v2033 = vadd.f32 %v2019, %v2028
        %v2034 = vadd.f32 %v2020, %v2030
        %s2035 = sld [smem:[#allocation8 + $0x43]]
        %v2036 = vstv %s2035
        %v2037 = vmul.f32 %v1985, %v2036
        %v2038 = vmul.f32 %v1986, %v2036
        %2041 = vrot.lane.b32.xlu0 %v2037, 124
        %v2042 = vpop.permute.xlu0 %2041
        %2043 = vrot.lane.b32.xlu0 %v2038, 124
        %v2044 = vpop.permute.xlu0 %2043
        %v2047 = vadd.f32 %v2033, %v2042
        %v2048 = vadd.f32 %v2034, %v2044
        %s2049 = sld [smem:[#allocation8 + $0x44]]
        %v2050 = vstv %s2049
        %v2051 = vmul.f32 %v1985, %v2050
        %v2052 = vmul.f32 %v1986, %v2050
        %2055 = vrot.lane.b32.xlu0 %v2051, 123
        %v2056 = vpop.permute.xlu0 %2055
        %2057 = vrot.lane.b32.xlu0 %v2052, 123
        %v2058 = vpop.permute.xlu0 %2057
        %v2061 = vadd.f32 %v2047, %v2056
        %v2062 = vadd.f32 %v2048, %v2058
        %s2063 = sld [smem:[#allocation8 + $0x45]]
        %v2064 = vstv %s2063
        %v2065 = vmul.f32 %v1985, %v2064
        %v2066 = vmul.f32 %v1986, %v2064
        %2069 = vrot.lane.b32.xlu0 %v2065, 122
        %v2070 = vpop.permute.xlu0 %2069
        %2071 = vrot.lane.b32.xlu0 %v2066, 122
        %v2072 = vpop.permute.xlu0 %2071
        %v2075 = vadd.f32 %v2061, %v2070
        %v2076 = vadd.f32 %v2062, %v2072
        %v2077 = vld [vmem:[%s1152 + $0x3] sm:$0xff]
        %v2078 = vld [vmem:[%s1152 + $0xb] sm:$0xff]
        %s2079 = sld [smem:[#allocation8 + $0x46]]
        %v2080 = vstv %s2079
        %v2081 = vmul.f32 %v2077, %v2080
        %v2082 = vmul.f32 %v2078, %v2080
        %v2083 = vadd.f32 %v2075, %v2081
        %v2084 = vadd.f32 %v2076, %v2082
        %s2085 = sld [smem:[#allocation8 + $0x47]]
        %v2086 = vstv %s2085
        %v2087 = vmul.f32 %v2077, %v2086
        %v2088 = vmul.f32 %v2078, %v2086
        %2091 = vrot.lane.b32.xlu0 %v2087, 127
        %v2092 = vpop.permute.xlu0 %2091
        %2093 = vrot.lane.b32.xlu0 %v2088, 127
        %v2094 = vpop.permute.xlu0 %2093
        %v2097 = vadd.f32 %v2083, %v2092
        %v2098 = vadd.f32 %v2084, %v2094
        %s2099 = sld [smem:[#allocation8 + $0x48]]
        %v2100 = vstv %s2099
        %v2101 = vmul.f32 %v2077, %v2100
        %v2102 = vmul.f32 %v2078, %v2100
        %2105 = vrot.lane.b32.xlu0 %v2101, 126
        %v2106 = vpop.permute.xlu0 %2105
        %2107 = vrot.lane.b32.xlu0 %v2102, 126
        %v2108 = vpop.permute.xlu0 %2107
        %v2111 = vadd.f32 %v2097, %v2106
        %v2112 = vadd.f32 %v2098, %v2108
        %s2113 = sld [smem:[#allocation8 + $0x49]]
        %v2114 = vstv %s2113
        %v2115 = vmul.f32 %v2077, %v2114
        %v2116 = vmul.f32 %v2078, %v2114
        %2119 = vrot.lane.b32.xlu0 %v2115, 125
        %v2120 = vpop.permute.xlu0 %2119
        %2121 = vrot.lane.b32.xlu0 %v2116, 125
        %v2122 = vpop.permute.xlu0 %2121
        %v2125 = vadd.f32 %v2111, %v2120
        %v2126 = vadd.f32 %v2112, %v2122
        %s2127 = sld [smem:[#allocation8 + $0x4a]]
        %v2128 = vstv %s2127
        %v2129 = vmul.f32 %v2077, %v2128
        %v2130 = vmul.f32 %v2078, %v2128
        %2133 = vrot.lane.b32.xlu0 %v2129, 124
        %v2134 = vpop.permute.xlu0 %2133
        %2135 = vrot.lane.b32.xlu0 %v2130, 124
        %v2136 = vpop.permute.xlu0 %2135
        %v2139 = vadd.f32 %v2125, %v2134
        %v2140 = vadd.f32 %v2126, %v2136
        %s2141 = sld [smem:[#allocation8 + $0x4b]]
        %v2142 = vstv %s2141
        %v2143 = vmul.f32 %v2077, %v2142
        %v2144 = vmul.f32 %v2078, %v2142
        %2147 = vrot.lane.b32.xlu0 %v2143, 123
        %v2148 = vpop.permute.xlu0 %2147
        %2149 = vrot.lane.b32.xlu0 %v2144, 123
        %v2150 = vpop.permute.xlu0 %2149
        %v2153 = vadd.f32 %v2139, %v2148
        %v2154 = vadd.f32 %v2140, %v2150
        %s2155 = sld [smem:[#allocation8 + $0x4c]]
        %v2156 = vstv %s2155
        %v2157 = vmul.f32 %v2077, %v2156
        %v2158 = vmul.f32 %v2078, %v2156
        %2161 = vrot.lane.b32.xlu0 %v2157, 122
        %v2162 = vpop.permute.xlu0 %2161
        %2163 = vrot.lane.b32.xlu0 %v2158, 122
        %v2164 = vpop.permute.xlu0 %2163
        %v2167 = vadd.f32 %v2153, %v2162
        %v2168 = vadd.f32 %v2154, %v2164
        %v2169 = vld [vmem:[%s1152 + $0x4] sm:$0xff]
        %v2170 = vld [vmem:[%s1152 + $0xc] sm:$0xff]
        %s2171 = sld [smem:[#allocation8 + $0x4d]]
        %v2172 = vstv %s2171
        %v2173 = vmul.f32 %v2169, %v2172
        %v2174 = vmul.f32 %v2170, %v2172
        %v2175 = vadd.f32 %v2167, %v2173
        %v2176 = vadd.f32 %v2168, %v2174
        %s2177 = sld [smem:[#allocation8 + $0x4e]]
        %v2178 = vstv %s2177
        %v2179 = vmul.f32 %v2169, %v2178
        %v2180 = vmul.f32 %v2170, %v2178
        %2183 = vrot.lane.b32.xlu0 %v2179, 127
        %v2184 = vpop.permute.xlu0 %2183
        %2185 = vrot.lane.b32.xlu0 %v2180, 127
        %v2186 = vpop.permute.xlu0 %2185
        %v2189 = vadd.f32 %v2175, %v2184
        %v2190 = vadd.f32 %v2176, %v2186
        %s2191 = sld [smem:[#allocation8 + $0x4f]]
        %v2192 = vstv %s2191
        %v2193 = vmul.f32 %v2169, %v2192
        %v2194 = vmul.f32 %v2170, %v2192
        %2197 = vrot.lane.b32.xlu0 %v2193, 126
        %v2198 = vpop.permute.xlu0 %2197
        %2199 = vrot.lane.b32.xlu0 %v2194, 126
        %v2200 = vpop.permute.xlu0 %2199
        %v2203 = vadd.f32 %v2189, %v2198
        %v2204 = vadd.f32 %v2190, %v2200
        %s2205 = sld [smem:[#allocation8 + $0x50]]
        %v2206 = vstv %s2205
        %v2207 = vmul.f32 %v2169, %v2206
        %v2208 = vmul.f32 %v2170, %v2206
        %2211 = vrot.lane.b32.xlu0 %v2207, 125
        %v2212 = vpop.permute.xlu0 %2211
        %2213 = vrot.lane.b32.xlu0 %v2208, 125
        %v2214 = vpop.permute.xlu0 %2213
        %v2217 = vadd.f32 %v2203, %v2212
        %v2218 = vadd.f32 %v2204, %v2214
        %s2219 = sld [smem:[#allocation8 + $0x51]]
        %v2220 = vstv %s2219
        %v2221 = vmul.f32 %v2169, %v2220
        %v2222 = vmul.f32 %v2170, %v2220
        %2225 = vrot.lane.b32.xlu0 %v2221, 124
        %v2226 = vpop.permute.xlu0 %2225
        %2227 = vrot.lane.b32.xlu0 %v2222, 124
        %v2228 = vpop.permute.xlu0 %2227
        %v2231 = vadd.f32 %v2217, %v2226
        %v2232 = vadd.f32 %v2218, %v2228
        %s2233 = sld [smem:[#allocation8 + $0x52]]
        %v2234 = vstv %s2233
        %v2235 = vmul.f32 %v2169, %v2234
        %v2236 = vmul.f32 %v2170, %v2234
        %2239 = vrot.lane.b32.xlu0 %v2235, 123
        %v2240 = vpop.permute.xlu0 %2239
        %2241 = vrot.lane.b32.xlu0 %v2236, 123
        %v2242 = vpop.permute.xlu0 %2241
        %v2245 = vadd.f32 %v2231, %v2240
        %v2246 = vadd.f32 %v2232, %v2242
        %s2247 = sld [smem:[#allocation8 + $0x53]]
        %v2248 = vstv %s2247
        %v2249 = vmul.f32 %v2169, %v2248
        %v2250 = vmul.f32 %v2170, %v2248
        %2253 = vrot.lane.b32.xlu0 %v2249, 122
        %v2254 = vpop.permute.xlu0 %2253
        %2255 = vrot.lane.b32.xlu0 %v2250, 122
        %v2256 = vpop.permute.xlu0 %2255
        %v2259 = vadd.f32 %v2245, %v2254
        %v2260 = vadd.f32 %v2246, %v2256
        %v2261 = vld [vmem:[%s1152 + $0x5] sm:$0xff]
        %v2262 = vld [vmem:[%s1152 + $0xd] sm:$0xff]
        %s2263 = sld [smem:[#allocation8 + $0x54]]
        %v2264 = vstv %s2263
        %v2265 = vmul.f32 %v2261, %v2264
        %v2266 = vmul.f32 %v2262, %v2264
        %v2267 = vadd.f32 %v2259, %v2265
        %v2268 = vadd.f32 %v2260, %v2266
        %s2269 = sld [smem:[#allocation8 + $0x55]]
        %v2270 = vstv %s2269
        %v2271 = vmul.f32 %v2261, %v2270
        %v2272 = vmul.f32 %v2262, %v2270
        %2275 = vrot.lane.b32.xlu0 %v2271, 127
        %v2276 = vpop.permute.xlu0 %2275
        %2277 = vrot.lane.b32.xlu0 %v2272, 127
        %v2278 = vpop.permute.xlu0 %2277
        %v2281 = vadd.f32 %v2267, %v2276
        %v2282 = vadd.f32 %v2268, %v2278
        %s2283 = sld [smem:[#allocation8 + $0x56]]
        %v2284 = vstv %s2283
        %v2285 = vmul.f32 %v2261, %v2284
        %v2286 = vmul.f32 %v2262, %v2284
        %2289 = vrot.lane.b32.xlu0 %v2285, 126
        %v2290 = vpop.permute.xlu0 %2289
        %2291 = vrot.lane.b32.xlu0 %v2286, 126
        %v2292 = vpop.permute.xlu0 %2291
        %v2295 = vadd.f32 %v2281, %v2290
        %v2296 = vadd.f32 %v2282, %v2292
        %s2297 = sld [smem:[#allocation8 + $0x57]]
        %v2298 = vstv %s2297
        %v2299 = vmul.f32 %v2261, %v2298
        %v2300 = vmul.f32 %v2262, %v2298
        %2303 = vrot.lane.b32.xlu0 %v2299, 125
        %v2304 = vpop.permute.xlu0 %2303
        %2305 = vrot.lane.b32.xlu0 %v2300, 125
        %v2306 = vpop.permute.xlu0 %2305
        %v2309 = vadd.f32 %v2295, %v2304
        %v2310 = vadd.f32 %v2296, %v2306
        %s2311 = sld [smem:[#allocation8 + $0x58]]
        %v2312 = vstv %s2311
        %v2313 = vmul.f32 %v2261, %v2312
        %v2314 = vmul.f32 %v2262, %v2312
        %2317 = vrot.lane.b32.xlu0 %v2313, 124
        %v2318 = vpop.permute.xlu0 %2317
        %2319 = vrot.lane.b32.xlu0 %v2314, 124
        %v2320 = vpop.permute.xlu0 %2319
        %v2323 = vadd.f32 %v2309, %v2318
        %v2324 = vadd.f32 %v2310, %v2320
        %s2325 = sld [smem:[#allocation8 + $0x59]]
        %v2326 = vstv %s2325
        %v2327 = vmul.f32 %v2261, %v2326
        %v2328 = vmul.f32 %v2262, %v2326
        %2331 = vrot.lane.b32.xlu0 %v2327, 123
        %v2332 = vpop.permute.xlu0 %2331
        %2333 = vrot.lane.b32.xlu0 %v2328, 123
        %v2334 = vpop.permute.xlu0 %2333
        %v2337 = vadd.f32 %v2323, %v2332
        %v2338 = vadd.f32 %v2324, %v2334
        %s2339 = sld [smem:[#allocation8 + $0x5a]]
        %v2340 = vstv %s2339
        %v2341 = vmul.f32 %v2261, %v2340
        %v2342 = vmul.f32 %v2262, %v2340
        %2345 = vrot.lane.b32.xlu0 %v2341, 122
        %v2346 = vpop.permute.xlu0 %2345
        %2347 = vrot.lane.b32.xlu0 %v2342, 122
        %v2348 = vpop.permute.xlu0 %2347
        %v2351 = vadd.f32 %v2337, %v2346
        %v2352 = vadd.f32 %v2338, %v2348
        %v2353 = vld [vmem:[%s1152 + $0x6] sm:$0xff]
        %v2354 = vld [vmem:[%s1152 + $0xe] sm:$0xff]
        %s2355 = sld [smem:[#allocation8 + $0x5b]]
        %v2356 = vstv %s2355
        %v2357 = vmul.f32 %v2353, %v2356
        %v2358 = vmul.f32 %v2354, %v2356
        %v2359 = vadd.f32 %v2351, %v2357
        %v2360 = vadd.f32 %v2352, %v2358
        %s2361 = sld [smem:[#allocation8 + $0x5c]]
        %v2362 = vstv %s2361
        %v2363 = vmul.f32 %v2353, %v2362
        %v2364 = vmul.f32 %v2354, %v2362
        %2367 = vrot.lane.b32.xlu0 %v2363, 127
        %v2368 = vpop.permute.xlu0 %2367
        %2369 = vrot.lane.b32.xlu0 %v2364, 127
        %v2370 = vpop.permute.xlu0 %2369
        %v2373 = vadd.f32 %v2359, %v2368
        %v2374 = vadd.f32 %v2360, %v2370
        %s2375 = sld [smem:[#allocation8 + $0x5d]]
        %v2376 = vstv %s2375
        %v2377 = vmul.f32 %v2353, %v2376
        %v2378 = vmul.f32 %v2354, %v2376
        %2381 = vrot.lane.b32.xlu0 %v2377, 126
        %v2382 = vpop.permute.xlu0 %2381
        %2383 = vrot.lane.b32.xlu0 %v2378, 126
        %v2384 = vpop.permute.xlu0 %2383
        %v2387 = vadd.f32 %v2373, %v2382
        %v2388 = vadd.f32 %v2374, %v2384
        %s2389 = sld [smem:[#allocation8 + $0x5e]]
        %v2390 = vstv %s2389
        %v2391 = vmul.f32 %v2353, %v2390
        %v2392 = vmul.f32 %v2354, %v2390
        %2395 = vrot.lane.b32.xlu0 %v2391, 125
        %v2396 = vpop.permute.xlu0 %2395
        %2397 = vrot.lane.b32.xlu0 %v2392, 125
        %v2398 = vpop.permute.xlu0 %2397
        %v2401 = vadd.f32 %v2387, %v2396
        %v2402 = vadd.f32 %v2388, %v2398
        %s2403 = sld [smem:[#allocation8 + $0x5f]]
        %v2404 = vstv %s2403
        %v2405 = vmul.f32 %v2353, %v2404
        %v2406 = vmul.f32 %v2354, %v2404
        %2409 = vrot.lane.b32.xlu0 %v2405, 124
        %v2410 = vpop.permute.xlu0 %2409
        %2411 = vrot.lane.b32.xlu0 %v2406, 124
        %v2412 = vpop.permute.xlu0 %2411
        %v2415 = vadd.f32 %v2401, %v2410
        %v2416 = vadd.f32 %v2402, %v2412
        %s2417 = sld [smem:[#allocation8 + $0x60]]
        %v2418 = vstv %s2417
        %v2419 = vmul.f32 %v2353, %v2418
        %v2420 = vmul.f32 %v2354, %v2418
        %2423 = vrot.lane.b32.xlu0 %v2419, 123
        %v2424 = vpop.permute.xlu0 %2423
        %2425 = vrot.lane.b32.xlu0 %v2420, 123
        %v2426 = vpop.permute.xlu0 %2425
        %v2429 = vadd.f32 %v2415, %v2424
        %v2430 = vadd.f32 %v2416, %v2426
        %s2431 = sld [smem:[#allocation8 + $0x61]]
        %v2432 = vstv %s2431
        %v2433 = vmul.f32 %v2353, %v2432
        %v2434 = vmul.f32 %v2354, %v2432
        %2437 = vrot.lane.b32.xlu0 %v2433, 122
        %v2438 = vpop.permute.xlu0 %2437
        %2439 = vrot.lane.b32.xlu0 %v2434, 122
        %v2440 = vpop.permute.xlu0 %2439
        %v2443 = vadd.f32 %v2429, %v2438
        %v2444 = vadd.f32 %v2430, %v2440
        %v2445 = vxor.u32 %v2443, 2147483648
        %v2446 = vxor.u32 %v2444, 2147483648
        %v2447 = vmul.f32 %v2445, 1.442695
        %v2448 = vpow.pop %v2447
        %v2449 = vmul.f32 %v2446, 1.442695
        %v2450 = vpow.pop %v2449
        %v2451 = vadd.f32 %v2448, 1.0
        %v2452 = vadd.f32 %v2450, 1.0
        %v2453 = vrcp.pop %v2451
        %v2454 = vmul.f32 1.0, %v2453
        %v2455 = vrcp.pop %v2452
        %v2456 = vmul.f32 1.0, %v2455
        %v2457 = vlaneseq
        %v2458 = vshrl.u32 %v2457, 7
        %v2459 = vsub.s32 0, %v2458
        %v2460 = vrot.slane %v2454, %v2459
        %2462 = vbcast.lane.b32.xlu0 %v2460, 256
        %v2463 = vpop.permute.xlu0 %2462
        %s2465 = sor.u32 256, 8
        %2466 = vbcast.lane.b32.xlu0 %v2460, %s2465
        %v2467 = vpop.permute.xlu0 %2466
        %v2468 = vlaneseq
        %v2469 = vshrl.u32 %v2468, 7
        %v2470 = vsub.s32 1, %v2469
        %v2471 = vrot.slane %v2454, %v2470
        %2473 = vbcast.lane.b32.xlu0 %v2471, 256
        %v2474 = vpop.permute.xlu0 %2473
        %s2476 = sor.u32 256, 8
        %2477 = vbcast.lane.b32.xlu0 %v2471, %s2476
        %v2478 = vpop.permute.xlu0 %2477
        %v2479 = vlaneseq
        %v2480 = vshrl.u32 %v2479, 7
        %v2481 = vsub.s32 2, %v2480
        %v2482 = vrot.slane %v2454, %v2481
        %2484 = vbcast.lane.b32.xlu0 %v2482, 256
        %v2485 = vpop.permute.xlu0 %2484
        %s2487 = sor.u32 256, 8
        %2488 = vbcast.lane.b32.xlu0 %v2482, %s2487
        %v2489 = vpop.permute.xlu0 %2488
        %v2490 = vlaneseq
        %v2491 = vshrl.u32 %v2490, 7
        %v2492 = vsub.s32 3, %v2491
        %v2493 = vrot.slane %v2454, %v2492
        %2495 = vbcast.lane.b32.xlu0 %v2493, 256
        %v2496 = vpop.permute.xlu0 %2495
        %s2498 = sor.u32 256, 8
        %2499 = vbcast.lane.b32.xlu0 %v2493, %s2498
        %v2500 = vpop.permute.xlu0 %2499
        %v2501 = vlaneseq
        %v2502 = vshrl.u32 %v2501, 7
        %v2503 = vsub.s32 4, %v2502
        %v2504 = vrot.slane %v2454, %v2503
        %2506 = vbcast.lane.b32.xlu0 %v2504, 256
        %v2507 = vpop.permute.xlu0 %2506
        %s2509 = sor.u32 256, 8
        %2510 = vbcast.lane.b32.xlu0 %v2504, %s2509
        %v2511 = vpop.permute.xlu0 %2510
        %v2512 = vlaneseq
        %v2513 = vshrl.u32 %v2512, 7
        %v2514 = vsub.s32 5, %v2513
        %v2515 = vrot.slane %v2454, %v2514
        %2517 = vbcast.lane.b32.xlu0 %v2515, 256
        %v2518 = vpop.permute.xlu0 %2517
        %s2520 = sor.u32 256, 8
        %2521 = vbcast.lane.b32.xlu0 %v2515, %s2520
        %v2522 = vpop.permute.xlu0 %2521
        %v2523 = vlaneseq
        %v2524 = vshrl.u32 %v2523, 7
        %v2525 = vsub.s32 6, %v2524
        %v2526 = vrot.slane %v2454, %v2525
        %2528 = vbcast.lane.b32.xlu0 %v2526, 256
        %v2529 = vpop.permute.xlu0 %2528
        %s2531 = sor.u32 256, 8
        %2532 = vbcast.lane.b32.xlu0 %v2526, %s2531
        %v2533 = vpop.permute.xlu0 %2532
        %v2534 = vlaneseq
        %v2535 = vshrl.u32 %v2534, 7
        %v2536 = vsub.s32 7, %v2535
        %v2537 = vrot.slane %v2454, %v2536
        %2539 = vbcast.lane.b32.xlu0 %v2537, 256
        %v2540 = vpop.permute.xlu0 %2539
        %s2542 = sor.u32 256, 8
        %2543 = vbcast.lane.b32.xlu0 %v2537, %s2542
        %v2544 = vpop.permute.xlu0 %2543
        %v2545 = vlaneseq
        %v2546 = vshrl.u32 %v2545, 7
        %v2547 = vsub.s32 0, %v2546
        %v2548 = vrot.slane %v2456, %v2547
        %2550 = vbcast.lane.b32.xlu0 %v2548, 256
        %v2551 = vpop.permute.xlu0 %2550
        %s2553 = sor.u32 256, 8
        %2554 = vbcast.lane.b32.xlu0 %v2548, %s2553
        %v2555 = vpop.permute.xlu0 %2554
        %v2556 = vlaneseq
        %v2557 = vshrl.u32 %v2556, 7
        %v2558 = vsub.s32 1, %v2557
        %v2559 = vrot.slane %v2456, %v2558
        %2561 = vbcast.lane.b32.xlu0 %v2559, 256
        %v2562 = vpop.permute.xlu0 %2561
        %s2564 = sor.u32 256, 8
        %2565 = vbcast.lane.b32.xlu0 %v2559, %s2564
        %v2566 = vpop.permute.xlu0 %2565
        %v2567 = vlaneseq
        %v2568 = vshrl.u32 %v2567, 7
        %v2569 = vsub.s32 2, %v2568
        %v2570 = vrot.slane %v2456, %v2569
        %2572 = vbcast.lane.b32.xlu0 %v2570, 256
        %v2573 = vpop.permute.xlu0 %2572
        %s2575 = sor.u32 256, 8
        %2576 = vbcast.lane.b32.xlu0 %v2570, %s2575
        %v2577 = vpop.permute.xlu0 %2576
        %v2578 = vlaneseq
        %v2579 = vshrl.u32 %v2578, 7
        %v2580 = vsub.s32 3, %v2579
        %v2581 = vrot.slane %v2456, %v2580
        %2583 = vbcast.lane.b32.xlu0 %v2581, 256
        %v2584 = vpop.permute.xlu0 %2583
        %s2586 = sor.u32 256, 8
        %2587 = vbcast.lane.b32.xlu0 %v2581, %s2586
        %v2588 = vpop.permute.xlu0 %2587
        %v2589 = vlaneseq
        %v2590 = vshrl.u32 %v2589, 7
        %v2591 = vsub.s32 4, %v2590
        %v2592 = vrot.slane %v2456, %v2591
        %2594 = vbcast.lane.b32.xlu0 %v2592, 256
        %v2595 = vpop.permute.xlu0 %2594
        %s2597 = sor.u32 256, 8
        %2598 = vbcast.lane.b32.xlu0 %v2592, %s2597
        %v2599 = vpop.permute.xlu0 %2598
        %v2600 = vlaneseq
        %v2601 = vshrl.u32 %v2600, 7
        %v2602 = vsub.s32 5, %v2601
        %v2603 = vrot.slane %v2456, %v2602
        %2605 = vbcast.lane.b32.xlu0 %v2603, 256
        %v2606 = vpop.permute.xlu0 %2605
        %s2608 = sor.u32 256, 8
        %2609 = vbcast.lane.b32.xlu0 %v2603, %s2608
        %v2610 = vpop.permute.xlu0 %2609
        %v2611 = vlaneseq
        %v2612 = vshrl.u32 %v2611, 7
        %v2613 = vsub.s32 6, %v2612
        %v2614 = vrot.slane %v2456, %v2613
        %2616 = vbcast.lane.b32.xlu0 %v2614, 256
        %v2617 = vpop.permute.xlu0 %2616
        %s2619 = sor.u32 256, 8
        %2620 = vbcast.lane.b32.xlu0 %v2614, %s2619
        %v2621 = vpop.permute.xlu0 %2620
        %v2622 = vlaneseq
        %v2623 = vshrl.u32 %v2622, 7
        %v2624 = vsub.s32 7, %v2623
        %v2625 = vrot.slane %v2456, %v2624
        %2627 = vbcast.lane.b32.xlu0 %v2625, 256
        %v2628 = vpop.permute.xlu0 %2627
        %s2630 = sor.u32 256, 8
        %2631 = vbcast.lane.b32.xlu0 %v2625, %s2630
        %v2632 = vpop.permute.xlu0 %2631
        %v2633 = vmul.f32 %v481, %v2463
        %v2634 = vmul.f32 %v482, %v2467
        %v2635 = vmul.f32 %v483, %v2474
        %v2636 = vmul.f32 %v484, %v2478
        %v2637 = vmul.f32 %v485, %v2485
        %v2638 = vmul.f32 %v486, %v2489
        %v2639 = vmul.f32 %v487, %v2496
        %v2640 = vmul.f32 %v488, %v2500
        %v2641 = vmul.f32 %v489, %v2507
        %v2642 = vmul.f32 %v490, %v2511
        %v2643 = vmul.f32 %v491, %v2518
        %v2644 = vmul.f32 %v492, %v2522
        %v2645 = vmul.f32 %v493, %v2529
        %v2646 = vmul.f32 %v494, %v2533
        %v2647 = vmul.f32 %v495, %v2540
        %v2648 = vmul.f32 %v496, %v2544
        %v2649 = vmul.f32 %v497, %v2551
        %v2650 = vmul.f32 %v498, %v2555
        %v2651 = vmul.f32 %v499, %v2562
        %v2652 = vmul.f32 %v500, %v2566
        %v2653 = vmul.f32 %v501, %v2573
        %v2654 = vmul.f32 %v502, %v2577
        %v2655 = vmul.f32 %v503, %v2584
        %v2656 = vmul.f32 %v504, %v2588
        %v2657 = vmul.f32 %v505, %v2595
        %v2658 = vmul.f32 %v506, %v2599
        %v2659 = vmul.f32 %v507, %v2606
        %v2660 = vmul.f32 %v508, %v2610
        %v2661 = vmul.f32 %v509, %v2617
        %v2662 = vmul.f32 %v510, %v2621
        %v2663 = vmul.f32 %v511, %v2628
        %v2664 = vmul.f32 %v512, %v2632
        %2665 = vst.msk [vmem:[%s257] sm:$0xff] %vm290, %v2633
        %2666 = vst.msk [vmem:[%s257 + $0x8] sm:$0xff] %vm290, %v2634
        %2667 = vst.msk [vmem:[%s257 + $0x10] sm:$0xff] %vm290, %v2635
        %2668 = vst.msk [vmem:[%s257 + $0x18] sm:$0xff] %vm290, %v2636
        %2669 = vst.msk [vmem:[%s257 + $0x20] sm:$0xff] %vm290, %v2637
        %2670 = vst.msk [vmem:[%s257 + $0x28] sm:$0xff] %vm290, %v2638
        %2671 = vst.msk [vmem:[%s257 + $0x30] sm:$0xff] %vm290, %v2639
        %2672 = vst.msk [vmem:[%s257 + $0x38] sm:$0xff] %vm290, %v2640
        %2673 = vst.msk [vmem:[%s257 + $0x40] sm:$0xff] %vm290, %v2641
        %2674 = vst.msk [vmem:[%s257 + $0x48] sm:$0xff] %vm290, %v2642
        %2675 = vst.msk [vmem:[%s257 + $0x50] sm:$0xff] %vm290, %v2643
        %2676 = vst.msk [vmem:[%s257 + $0x58] sm:$0xff] %vm290, %v2644
        %2677 = vst.msk [vmem:[%s257 + $0x60] sm:$0xff] %vm290, %v2645
        %2678 = vst.msk [vmem:[%s257 + $0x68] sm:$0xff] %vm290, %v2646
        %2679 = vst.msk [vmem:[%s257 + $0x70] sm:$0xff] %vm290, %v2647
        %2680 = vst.msk [vmem:[%s257 + $0x78] sm:$0xff] %vm290, %v2648
        %2681 = vst.msk [vmem:[%s257 + $0x80] sm:$0xff] %vm290, %v2649
        %2682 = vst.msk [vmem:[%s257 + $0x88] sm:$0xff] %vm290, %v2650
        %2683 = vst.msk [vmem:[%s257 + $0x90] sm:$0xff] %vm290, %v2651
        %2684 = vst.msk [vmem:[%s257 + $0x98] sm:$0xff] %vm290, %v2652
        %2685 = vst.msk [vmem:[%s257 + $0xa0] sm:$0xff] %vm290, %v2653
        %2686 = vst.msk [vmem:[%s257 + $0xa8] sm:$0xff] %vm290, %v2654
        %2687 = vst.msk [vmem:[%s257 + $0xb0] sm:$0xff] %vm290, %v2655
        %2688 = vst.msk [vmem:[%s257 + $0xb8] sm:$0xff] %vm290, %v2656
        %2689 = vst.msk [vmem:[%s257 + $0xc0] sm:$0xff] %vm290, %v2657
        %2690 = vst.msk [vmem:[%s257 + $0xc8] sm:$0xff] %vm290, %v2658
        %2691 = vst.msk [vmem:[%s257 + $0xd0] sm:$0xff] %vm290, %v2659
        %2692 = vst.msk [vmem:[%s257 + $0xd8] sm:$0xff] %vm290, %v2660
        %2693 = vst.msk [vmem:[%s257 + $0xe0] sm:$0xff] %vm290, %v2661
        %2694 = vst.msk [vmem:[%s257 + $0xe8] sm:$0xff] %vm290, %v2662
        %2695 = vst.msk [vmem:[%s257 + $0xf0] sm:$0xff] %vm290, %v2663
        %2696 = vst.msk [vmem:[%s257 + $0xf8] sm:$0xff] %vm290, %v2664
        %s2697 = sand.u32 %s142, 1
        %s2698 = scalar_lea.sflag [#allocation6], %s2697
        %s2699 = sand.u32 %s142, 1
        %s2700 = smul.addr %s2699, 256
        %s2701 = scalar_lea.vmem [#allocation9], %s2700
        // Predicated region
        $region49: #{tpu_custom_call.1} parent=39 // pred_check
          %p2702 = pneg %p152
        $region50: #{tpu_custom_call.1} parent=39 // pred_check_branch
          %2704 = sbr.rel (%p2702) target = $region52
        $region51: #{tpu_custom_call.1} parent=39 // pred_region
          %s2706 = ssub.s32 4096, 4096
          %2707 = vsyncadd %s2698, %s2706
          %s2708 = smul.addr %s24, 32
          %s2709 = smul.addr %s2708, 128
          %s2710 = scalar_lea.hbm %s5, %s2709
          %s2711 = sshll.u32 %s2701, 4
          %s2712 = int_to_ptr.vmem [resolvable:$true] %s2711
          %2717 = dma.vmem_to_hbm [thread:$0]  %s2712, 4096, %s2710, %s2698, 128, 128, 8
        $region52: #{tpu_custom_call.1} parent=39 // pred_fallthru
          _
      $region40: #{tpu_custom_call.1} parent=5 // pred_fallthru
        _
      %p2718 = scmp.le.s32.totalorder 2, %s19
      // Predicated region
      $region53: #{tpu_custom_call.1} parent=5 // pred_check
        %p2719 = pneg %p2718
      $region54: #{tpu_custom_call.1} parent=5 // pred_check_branch
        %2721 = sbr.rel (%p2719) target = $region56
      $region55: #{tpu_custom_call.1} parent=5 // pred_region
        %s2722 = ssub.s32 %s19, 2
        // Predicated region
        $region57: #{tpu_custom_call.1} parent=55 // pred_check
          %p2723 = pneg %p158
        $region58: #{tpu_custom_call.1} parent=55 // pred_check_branch
          %2725 = sbr.rel (%p2723) target = $region60
        $region59: #{tpu_custom_call.1} parent=55 // pred_region
          %s2726 = sand.u32 %s143, 1
          %s2727 = scalar_lea.sflag [#allocation6], %s2726
          %s2728 = sand.u32 %s143, 1
          %s2729 = smul.addr %s2728, 256
          %s2730 = scalar_lea.vmem [#allocation9], %s2729
          %2731 = dma.done %s2727, 4096
        $region60: #{tpu_custom_call.1} parent=55 // pred_fallthru
          _
      $region56: #{tpu_custom_call.1} parent=5 // pred_fallthru
        _
    $region6: #{tpu_custom_call.1} parent=1 // loop_footer
      %s23 = sadd.s32 1, %s19
    $region7: #{tpu_custom_call.1} parent=1 // loop_footer_branch
      %18 = sbr.rel target = $region3
    $region8: #{tpu_custom_call.1} parent=1 // loop_exit
      _
    %2732 = vsyncpa [#allocation5], 1
    %s2733 = scalar_lea.sflag [#allocation5], 1
    %2734 = vsyncpa %s2733, 1
    %2735 = vsyncpa [#allocation6], 1
    %s2736 = scalar_lea.sflag [#allocation6], 1
    %2737 = vsyncpa %s2736, 1
    %2738 = vsyncpa [#allocation7], 1
    %s2739 = scalar_lea.sflag [#allocation7], 1
    %2740 = vsyncpa %s2739, 1

</llo_original>
